<compile_context>
chip_gen: v5e
topology: v5e:2x2
jax: 0.10.0
libtpu: 0.0.40
codegen_flags: <defaults>
</compile_context>

<pallas_src>
import functools
import math

import jax
import jax.numpy as jnp
from jax.experimental import pallas as pl
from jax.experimental.pallas import tpu as pltpu

LANE = 128     # lane width (output-channel / MXU N padding)
SUBLANE = 8    # sublane width (W_out compute alignment, writeback channel padding)


def _round_up(x, m):
    return (x + m - 1) // m * m


# ----------------------------- Pallas kernel --------------------------------
def _conv_bn_relu_kernel(x_ref, w_ref, b_ref, o_ref, *,
                         kh_size, kw_size, stride, h_tile, w_cmp, o_sub):
    """One (image, row-tile) grid step of fused conv + folded-BN bias + ReLU.

    x_ref: (1, H_in, W_in, C)           bf16 spatially pre-padded NHWC image
    w_ref: (KH, KW, C, O_pad)           bf16 conv weight with BN scale folded in
    b_ref: (o_sub, 1)                   f32 folded BN bias
    o_ref: (1, o_sub, h_tile * w_cmp)   f32 channel-major output tile
    """
    c = x_ref.shape[-1]
    o_pad = w_ref.shape[-1]
    m_tile = h_tile * w_cmp
    row0 = pl.program_id(1) * (h_tile * stride)

    acc = jnp.zeros((m_tile, o_pad), jnp.float32)
    for dh in range(kh_size):
        for dw in range(kw_size):
            if stride == 1:
                win = x_ref[0, pl.ds(row0 + dh, h_tile), pl.ds(dw, w_cmp), :]
            else:
                win = x_ref[0,
                            pl.ds(row0 + dh, h_tile, stride),
                            pl.ds(dw, w_cmp, stride), :]
            # (h_tile, w_cmp, C) -> (m_tile, C); w_cmp is a sublane multiple.
            acc = acc + jnp.dot(win.reshape(m_tile, c), w_ref[dh, dw],
                                preferred_element_type=jnp.float32)

    # Epilogue: channel-major transpose (XLU), drop lane padding, +bias, ReLU.
    acc_t = jnp.transpose(acc)[:o_sub, :]                  # (o_sub, m_tile)
    o_ref[0] = jnp.maximum(acc_t + b_ref[...], 0.0).astype(o_ref.dtype)


def _conv_bn_relu(x_nhwc_pad, w_folded, bias, *, kh, kw, stride,
                  h_cmp, h_tile, w_cmp, o_sub):
    n, h_in, w_in, c = x_nhwc_pad.shape
    o_pad = w_folded.shape[-1]
    m_tile = h_tile * w_cmp
    n_htiles = h_cmp // h_tile

    kernel = functools.partial(
        _conv_bn_relu_kernel,
        kh_size=kh, kw_size=kw, stride=stride,
        h_tile=h_tile, w_cmp=w_cmp, o_sub=o_sub)

    # Working-set estimate -> scoped-VMEM limit (>= default 32 MiB, <= 96 MiB).
    x_bytes = h_in * w_in * c * x_nhwc_pad.dtype.itemsize
    w_bytes = kh * kw * c * o_pad * w_folded.dtype.itemsize
    o_bytes = o_sub * m_tile * 4
    acc_bytes = m_tile * o_pad * 4
    need = 2 * (x_bytes + o_bytes) + 2 * w_bytes + acc_bytes + (4 << 20)
    vmem_limit = int(max(32 << 20, min(need, 96 << 20)))

    return pl.pallas_call(
        kernel,
        out_shape=jax.ShapeDtypeStruct((n, o_sub, h_cmp * w_cmp), jnp.float32),
        grid_spec=pltpu.PrefetchScalarGridSpec(
            num_scalar_prefetch=0,
            grid=(n, n_htiles),
            in_specs=[
                # Whole padded image; index_map ignores the row-tile axis so the
                # image block is fetched once per image (no redundant DMA).
                pl.BlockSpec((1, h_in, w_in, c), lambda i, r: (i, 0, 0, 0)),
                pl.BlockSpec((kh, kw, c, o_pad), lambda i, r: (0, 0, 0, 0)),
                pl.BlockSpec((o_sub, 1), lambda i, r: (0, 0)),
            ],
            out_specs=pl.BlockSpec((1, o_sub, m_tile), lambda i, r: (i, 0, r)),
        ),
        compiler_params=pltpu.CompilerParams(
            dimension_semantics=("parallel", "parallel"),
            vmem_limit_bytes=vmem_limit),
    )(x_nhwc_pad, w_folded, bias)


# ------------------------------ BasicConv -----------------------------------
def basic_conv_forward(x, weight, gamma, beta, running_mean, running_var,
                       *, stride=1, padding=1, eps=1e-5):
    """BasicConv forward: Conv2d(bias=False) -> BatchNorm2d(eval) -> ReLU.

    x:      (N, C, H, W)    float32 (NCHW, PyTorch convention)
    weight: (O, C, KH, KW)  float32
    returns (N, O, H_out, W_out) float32
    """
    n, c, h, w = x.shape
    o, _, kh, kw = weight.shape

    h_out = (h + 2 * padding - kh) // stride + 1
    w_out = (w + 2 * padding - kw) // stride + 1

    # Compute-width / row-tile selection.  Each row tile's flattened M is kept a
    # multiple of 128 (lane-dense channel-major stores) and ~512 rows of M.
    w_cmp = _round_up(w_out, SUBLANE)
    lane_quant = LANE // math.gcd(w_cmp, LANE)
    target_rows = max(1, 512 // w_cmp)
    h_tile = max(lane_quant, (target_rows // lane_quant) * lane_quant)
    h_tile = min(h_tile, _round_up(h_out, lane_quant))
    h_cmp = _round_up(h_out, h_tile)

    o_pad = _round_up(o, LANE)       # MXU / accumulator width
    o_sub = _round_up(o, SUBLANE)    # HBM writeback channels (compact)

    # NCHW -> NHWC so C is the contraction/lane dim of the in-kernel dots.
    x_nhwc = jnp.transpose(x, (0, 2, 3, 1))

    # Spatial zero padding; pad bottom/right so the aligned compute extent
    # (h_cmp, w_cmp) stays in bounds.  Extra rows/cols are sliced off afterwards.
    h_in_needed = stride * (h_cmp - 1) + kh
    w_in_needed = stride * (w_cmp - 1) + kw
    pad_h_hi = max(padding, h_in_needed - h - padding)
    pad_w_hi = max(padding, w_in_needed - w - padding)
    x_nhwc = jnp.pad(x_nhwc, ((0, 0), (padding, pad_h_hi),
                              (padding, pad_w_hi), (0, 0)))

    # Fold inference BatchNorm into the conv weight (scale) and a bias.
    inv_std = 1.0 / jnp.sqrt(running_var + eps)
    scale = gamma * inv_std                     # (O,)
    bias = beta - running_mean * scale          # (O,)

    # (O, C, KH, KW) -> (KH, KW, C, O), fold scale, pad O to a lane multiple.
    w_folded = jnp.transpose(weight, (2, 3, 1, 0)) * scale[None, None, None, :]
    w_folded = jnp.pad(w_folded, ((0, 0), (0, 0), (0, 0), (0, o_pad - o)))
    bias_p = jnp.pad(bias, (0, o_sub - o)).reshape(o_sub, 1)

    # bf16 MXU operands; accumulation stays f32 inside the kernel.
    x_bf16 = x_nhwc.astype(jnp.bfloat16)
    w_bf16 = w_folded.astype(jnp.bfloat16)

    out = _conv_bn_relu(x_bf16, w_bf16, bias_p, kh=kh, kw=kw, stride=stride,
                        h_cmp=h_cmp, h_tile=h_tile, w_cmp=w_cmp, o_sub=o_sub)

    # Channel-major output -> NCHW is a pure reshape + slice (no transpose pass).
    return out.reshape(n, o_sub, h_cmp, w_cmp)[:, :o, :h_out, :w_out]


# ------------------------------ reference -----------------------------------
def basic_conv_reference(x, weight, gamma, beta, running_mean, running_var,
                         *, stride=1, padding=1, eps=1e-5):
    """Reference with the same bf16 operand quantization as the kernel."""
    inv_std = 1.0 / jnp.sqrt(running_var + eps)
    scale = gamma * inv_std
    bias = beta - running_mean * scale
    w_folded = (weight * scale[:, None, None, None]).astype(jnp.bfloat16)
    x_q = x.astype(jnp.bfloat16).astype(jnp.float32)
    y = jax.lax.conv_general_dilated(
        x_q, w_folded.astype(jnp.float32), window_strides=(stride, stride),
        padding=((padding, padding), (padding, padding)),
        dimension_numbers=("NCHW", "OIHW", "NCHW"))
    return jnp.maximum(y + bias.reshape(1, -1, 1, 1), 0.0)


# --------------------------------- main --------------------------------------
if __name__ == "__main__":
    key = jax.random.PRNGKey(0)
    k_x, k_w, k_g, k_b, k_m, k_v = jax.random.split(key, 6)

    # BasicConv(in_planes=4, out_planes=8, kernel_size=3, stride=1, padding=1)
    N, C, H, W = 2, 4, 16, 16
    O, KH, KW = 8, 3, 3

    x = jax.random.normal(k_x, (N, C, H, W), dtype=jnp.float32)
    weight = jax.random.normal(k_w, (O, C, KH, KW), dtype=jnp.float32) * 0.1
    gamma = 1.0 + 0.1 * jax.random.normal(k_g, (O,), dtype=jnp.float32)
    beta = 0.1 * jax.random.normal(k_b, (O,), dtype=jnp.float32)
    running_mean = 0.05 * jax.random.normal(k_m, (O,), dtype=jnp.float32)
    running_var = 1.0 + 0.1 * jax.random.uniform(k_v, (O,), dtype=jnp.float32)

    fwd = jax.jit(functools.partial(basic_conv_forward, stride=1, padding=1))
    out = fwd(x, weight, gamma, beta, running_mean, running_var)
    jax.block_until_ready(out)

    ref = basic_conv_reference(x, weight, gamma, beta, running_mean, running_var,
                               stride=1, padding=1)
    assert out.shape == (N, O, H, W), out.shape
    max_err = float(jnp.max(jnp.abs(out - ref)))
    assert max_err < 1e-3, max_err

    print("KERNEL_OK")
</pallas_src>

<mosaic_0001>
module attributes {stable_mosaic.version = 11 : i64} {
  func.func @_conv_bn_relu_kernel(%arg0: i32, %arg1: i32, %arg2: memref<1x18x18x4xbf16, #tpu.memory_space<vmem>>, %arg3: memref<3x3x4x128xbf16, #tpu.memory_space<vmem>>, %arg4: memref<8x1xf32, #tpu.memory_space<vmem>>, %arg5: memref<1x8x256xf32, #tpu.memory_space<vmem>>) attributes {dimension_semantics = [#tpu.dimension_semantics<parallel>, #tpu.dimension_semantics<parallel>], iteration_bounds = array<i64: 2, 1>, scalar_prefetch = 0 : i64, scratch_operands = 0 : i64, tpu.core_type = #tpu.core_type<tc>, window_params = [{transform_indices = @transform_0, window_bounds = array<i64: 1, 18, 18, 4>}, {pipeline_mode = #tpu.pipeline_mode<synchronous>, transform_indices = @transform_1, window_bounds = array<i64: 3, 3, 4, 128>}, {pipeline_mode = #tpu.pipeline_mode<synchronous>, transform_indices = @transform_2, window_bounds = array<i64: 8, 1>}, {transform_indices = @transform_3, window_bounds = array<i64: 1, 8, 256>}]} {
    %c16_i32 = arith.constant 16 : i32
    %0 = arith.muli %arg1, %c16_i32 : i32
    %cst = arith.constant 0.000000e+00 : f32
    %1 = vector.broadcast %cst : f32 to vector<256x128xf32>
    %c0_i32 = arith.constant 0 : i32
    %2 = arith.addi %0, %c0_i32 : i32
    %c0 = arith.constant 0 : index
    %3 = arith.index_cast %2 : i32 to index
    %c0_0 = arith.constant 0 : index
    %c0_1 = arith.constant 0 : index
    %4 = vector.load %arg2[%c0, %3, %c0_0, %c0_1] : memref<1x18x18x4xbf16, #tpu.memory_space<vmem>>, vector<1x16x16x4xbf16>
    %5 = vector.shape_cast %4 : vector<1x16x16x4xbf16> to vector<16x16x4xbf16>
    %6 = vector.shape_cast %5 : vector<16x16x4xbf16> to vector<256x4xbf16>
    %c0_2 = arith.constant 0 : index
    %c0_3 = arith.constant 0 : index
    %c0_4 = arith.constant 0 : index
    %c0_5 = arith.constant 0 : index
    %7 = vector.load %arg3[%c0_2, %c0_3, %c0_4, %c0_5] : memref<3x3x4x128xbf16, #tpu.memory_space<vmem>>, vector<1x1x4x128xbf16>
    %8 = vector.shape_cast %7 : vector<1x1x4x128xbf16> to vector<4x128xbf16>
    %cst_6 = arith.constant dense<0.000000e+00> : vector<256x128xf32>
    %9 = tpu.matmul %6, %8, %cst_6 {dimension_numbers = #tpu.dot_dimension_numbers<[1], [0], [0], [1], [0, 0, 1, 1], [], []>} : vector<256x4xbf16>, vector<4x128xbf16>, vector<256x128xf32> -> vector<256x128xf32>
    %10 = arith.addf %1, %9 : vector<256x128xf32>
    %c0_i32_7 = arith.constant 0 : i32
    %11 = arith.addi %0, %c0_i32_7 : i32
    %c0_8 = arith.constant 0 : index
    %12 = arith.index_cast %11 : i32 to index
    %c1 = arith.constant 1 : index
    %c0_9 = arith.constant 0 : index
    %13 = vector.load %arg2[%c0_8, %12, %c1, %c0_9] : memref<1x18x18x4xbf16, #tpu.memory_space<vmem>>, vector<1x16x16x4xbf16>
    %14 = vector.shape_cast %13 : vector<1x16x16x4xbf16> to vector<16x16x4xbf16>
    %15 = vector.shape_cast %14 : vector<16x16x4xbf16> to vector<256x4xbf16>
    %c0_10 = arith.constant 0 : index
    %c1_11 = arith.constant 1 : index
    %c0_12 = arith.constant 0 : index
    %c0_13 = arith.constant 0 : index
    %16 = vector.load %arg3[%c0_10, %c1_11, %c0_12, %c0_13] : memref<3x3x4x128xbf16, #tpu.memory_space<vmem>>, vector<1x1x4x128xbf16>
    %17 = vector.shape_cast %16 : vector<1x1x4x128xbf16> to vector<4x128xbf16>
    %cst_14 = arith.constant dense<0.000000e+00> : vector<256x128xf32>
    %18 = tpu.matmul %15, %17, %cst_14 {dimension_numbers = #tpu.dot_dimension_numbers<[1], [0], [0], [1], [0, 0, 1, 1], [], []>} : vector<256x4xbf16>, vector<4x128xbf16>, vector<256x128xf32> -> vector<256x128xf32>
    %19 = arith.addf %10, %18 : vector<256x128xf32>
    %c0_i32_15 = arith.constant 0 : i32
    %20 = arith.addi %0, %c0_i32_15 : i32
    %c0_16 = arith.constant 0 : index
    %21 = arith.index_cast %20 : i32 to index
    %c2 = arith.constant 2 : index
    %c0_17 = arith.constant 0 : index
    %22 = vector.load %arg2[%c0_16, %21, %c2, %c0_17] : memref<1x18x18x4xbf16, #tpu.memory_space<vmem>>, vector<1x16x16x4xbf16>
    %23 = vector.shape_cast %22 : vector<1x16x16x4xbf16> to vector<16x16x4xbf16>
    %24 = vector.shape_cast %23 : vector<16x16x4xbf16> to vector<256x4xbf16>
    %c0_18 = arith.constant 0 : index
    %c2_19 = arith.constant 2 : index
    %c0_20 = arith.constant 0 : index
    %c0_21 = arith.constant 0 : index
    %25 = vector.load %arg3[%c0_18, %c2_19, %c0_20, %c0_21] : memref<3x3x4x128xbf16, #tpu.memory_space<vmem>>, vector<1x1x4x128xbf16>
    %26 = vector.shape_cast %25 : vector<1x1x4x128xbf16> to vector<4x128xbf16>
    %cst_22 = arith.constant dense<0.000000e+00> : vector<256x128xf32>
    %27 = tpu.matmul %24, %26, %cst_22 {dimension_numbers = #tpu.dot_dimension_numbers<[1], [0], [0], [1], [0, 0, 1, 1], [], []>} : vector<256x4xbf16>, vector<4x128xbf16>, vector<256x128xf32> -> vector<256x128xf32>
    %28 = arith.addf %19, %27 : vector<256x128xf32>
    %c1_i32 = arith.constant 1 : i32
    %29 = arith.addi %0, %c1_i32 : i32
    %c0_23 = arith.constant 0 : index
    %30 = arith.index_cast %29 : i32 to index
    %c0_24 = arith.constant 0 : index
    %c0_25 = arith.constant 0 : index
    %31 = vector.load %arg2[%c0_23, %30, %c0_24, %c0_25] : memref<1x18x18x4xbf16, #tpu.memory_space<vmem>>, vector<1x16x16x4xbf16>
    %32 = vector.shape_cast %31 : vector<1x16x16x4xbf16> to vector<16x16x4xbf16>
    %33 = vector.shape_cast %32 : vector<16x16x4xbf16> to vector<256x4xbf16>
    %c1_26 = arith.constant 1 : index
    %c0_27 = arith.constant 0 : index
    %c0_28 = arith.constant 0 : index
    %c0_29 = arith.constant 0 : index
    %34 = vector.load %arg3[%c1_26, %c0_27, %c0_28, %c0_29] : memref<3x3x4x128xbf16, #tpu.memory_space<vmem>>, vector<1x1x4x128xbf16>
    %35 = vector.shape_cast %34 : vector<1x1x4x128xbf16> to vector<4x128xbf16>
    %cst_30 = arith.constant dense<0.000000e+00> : vector<256x128xf32>
    %36 = tpu.matmul %33, %35, %cst_30 {dimension_numbers = #tpu.dot_dimension_numbers<[1], [0], [0], [1], [0, 0, 1, 1], [], []>} : vector<256x4xbf16>, vector<4x128xbf16>, vector<256x128xf32> -> vector<256x128xf32>
    %37 = arith.addf %28, %36 : vector<256x128xf32>
    %c1_i32_31 = arith.constant 1 : i32
    %38 = arith.addi %0, %c1_i32_31 : i32
    %c0_32 = arith.constant 0 : index
    %39 = arith.index_cast %38 : i32 to index
    %c1_33 = arith.constant 1 : index
    %c0_34 = arith.constant 0 : index
    %40 = vector.load %arg2[%c0_32, %39, %c1_33, %c0_34] : memref<1x18x18x4xbf16, #tpu.memory_space<vmem>>, vector<1x16x16x4xbf16>
    %41 = vector.shape_cast %40 : vector<1x16x16x4xbf16> to vector<16x16x4xbf16>
    %42 = vector.shape_cast %41 : vector<16x16x4xbf16> to vector<256x4xbf16>
    %c1_35 = arith.constant 1 : index
    %c1_36 = arith.constant 1 : index
    %c0_37 = arith.constant 0 : index
    %c0_38 = arith.constant 0 : index
    %43 = vector.load %arg3[%c1_35, %c1_36, %c0_37, %c0_38] : memref<3x3x4x128xbf16, #tpu.memory_space<vmem>>, vector<1x1x4x128xbf16>
    %44 = vector.shape_cast %43 : vector<1x1x4x128xbf16> to vector<4x128xbf16>
    %cst_39 = arith.constant dense<0.000000e+00> : vector<256x128xf32>
    %45 = tpu.matmul %42, %44, %cst_39 {dimension_numbers = #tpu.dot_dimension_numbers<[1], [0], [0], [1], [0, 0, 1, 1], [], []>} : vector<256x4xbf16>, vector<4x128xbf16>, vector<256x128xf32> -> vector<256x128xf32>
    %46 = arith.addf %37, %45 : vector<256x128xf32>
    %c1_i32_40 = arith.constant 1 : i32
    %47 = arith.addi %0, %c1_i32_40 : i32
    %c0_41 = arith.constant 0 : index
    %48 = arith.index_cast %47 : i32 to index
    %c2_42 = arith.constant 2 : index
    %c0_43 = arith.constant 0 : index
    %49 = vector.load %arg2[%c0_41, %48, %c2_42, %c0_43] : memref<1x18x18x4xbf16, #tpu.memory_space<vmem>>, vector<1x16x16x4xbf16>
    %50 = vector.shape_cast %49 : vector<1x16x16x4xbf16> to vector<16x16x4xbf16>
    %51 = vector.shape_cast %50 : vector<16x16x4xbf16> to vector<256x4xbf16>
    %c1_44 = arith.constant 1 : index
    %c2_45 = arith.constant 2 : index
    %c0_46 = arith.constant 0 : index
    %c0_47 = arith.constant 0 : index
    %52 = vector.load %arg3[%c1_44, %c2_45, %c0_46, %c0_47] : memref<3x3x4x128xbf16, #tpu.memory_space<vmem>>, vector<1x1x4x128xbf16>
    %53 = vector.shape_cast %52 : vector<1x1x4x128xbf16> to vector<4x128xbf16>
    %cst_48 = arith.constant dense<0.000000e+00> : vector<256x128xf32>
    %54 = tpu.matmul %51, %53, %cst_48 {dimension_numbers = #tpu.dot_dimension_numbers<[1], [0], [0], [1], [0, 0, 1, 1], [], []>} : vector<256x4xbf16>, vector<4x128xbf16>, vector<256x128xf32> -> vector<256x128xf32>
    %55 = arith.addf %46, %54 : vector<256x128xf32>
    %c2_i32 = arith.constant 2 : i32
    %56 = arith.addi %0, %c2_i32 : i32
    %c0_49 = arith.constant 0 : index
    %57 = arith.index_cast %56 : i32 to index
    %c0_50 = arith.constant 0 : index
    %c0_51 = arith.constant 0 : index
    %58 = vector.load %arg2[%c0_49, %57, %c0_50, %c0_51] : memref<1x18x18x4xbf16, #tpu.memory_space<vmem>>, vector<1x16x16x4xbf16>
    %59 = vector.shape_cast %58 : vector<1x16x16x4xbf16> to vector<16x16x4xbf16>
    %60 = vector.shape_cast %59 : vector<16x16x4xbf16> to vector<256x4xbf16>
    %c2_52 = arith.constant 2 : index
    %c0_53 = arith.constant 0 : index
    %c0_54 = arith.constant 0 : index
    %c0_55 = arith.constant 0 : index
    %61 = vector.load %arg3[%c2_52, %c0_53, %c0_54, %c0_55] : memref<3x3x4x128xbf16, #tpu.memory_space<vmem>>, vector<1x1x4x128xbf16>
    %62 = vector.shape_cast %61 : vector<1x1x4x128xbf16> to vector<4x128xbf16>
    %cst_56 = arith.constant dense<0.000000e+00> : vector<256x128xf32>
    %63 = tpu.matmul %60, %62, %cst_56 {dimension_numbers = #tpu.dot_dimension_numbers<[1], [0], [0], [1], [0, 0, 1, 1], [], []>} : vector<256x4xbf16>, vector<4x128xbf16>, vector<256x128xf32> -> vector<256x128xf32>
    %64 = arith.addf %55, %63 : vector<256x128xf32>
    %c2_i32_57 = arith.constant 2 : i32
    %65 = arith.addi %0, %c2_i32_57 : i32
    %c0_58 = arith.constant 0 : index
    %66 = arith.index_cast %65 : i32 to index
    %c1_59 = arith.constant 1 : index
    %c0_60 = arith.constant 0 : index
    %67 = vector.load %arg2[%c0_58, %66, %c1_59, %c0_60] : memref<1x18x18x4xbf16, #tpu.memory_space<vmem>>, vector<1x16x16x4xbf16>
    %68 = vector.shape_cast %67 : vector<1x16x16x4xbf16> to vector<16x16x4xbf16>
    %69 = vector.shape_cast %68 : vector<16x16x4xbf16> to vector<256x4xbf16>
    %c2_61 = arith.constant 2 : index
    %c1_62 = arith.constant 1 : index
    %c0_63 = arith.constant 0 : index
    %c0_64 = arith.constant 0 : index
    %70 = vector.load %arg3[%c2_61, %c1_62, %c0_63, %c0_64] : memref<3x3x4x128xbf16, #tpu.memory_space<vmem>>, vector<1x1x4x128xbf16>
    %71 = vector.shape_cast %70 : vector<1x1x4x128xbf16> to vector<4x128xbf16>
    %cst_65 = arith.constant dense<0.000000e+00> : vector<256x128xf32>
    %72 = tpu.matmul %69, %71, %cst_65 {dimension_numbers = #tpu.dot_dimension_numbers<[1], [0], [0], [1], [0, 0, 1, 1], [], []>} : vector<256x4xbf16>, vector<4x128xbf16>, vector<256x128xf32> -> vector<256x128xf32>
    %73 = arith.addf %64, %72 : vector<256x128xf32>
    %c2_i32_66 = arith.constant 2 : i32
    %74 = arith.addi %0, %c2_i32_66 : i32
    %c0_67 = arith.constant 0 : index
    %75 = arith.index_cast %74 : i32 to index
    %c2_68 = arith.constant 2 : index
    %c0_69 = arith.constant 0 : index
    %76 = vector.load %arg2[%c0_67, %75, %c2_68, %c0_69] : memref<1x18x18x4xbf16, #tpu.memory_space<vmem>>, vector<1x16x16x4xbf16>
    %77 = vector.shape_cast %76 : vector<1x16x16x4xbf16> to vector<16x16x4xbf16>
    %78 = vector.shape_cast %77 : vector<16x16x4xbf16> to vector<256x4xbf16>
    %c2_70 = arith.constant 2 : index
    %c2_71 = arith.constant 2 : index
    %c0_72 = arith.constant 0 : index
    %c0_73 = arith.constant 0 : index
    %79 = vector.load %arg3[%c2_70, %c2_71, %c0_72, %c0_73] : memref<3x3x4x128xbf16, #tpu.memory_space<vmem>>, vector<1x1x4x128xbf16>
    %80 = vector.shape_cast %79 : vector<1x1x4x128xbf16> to vector<4x128xbf16>
    %cst_74 = arith.constant dense<0.000000e+00> : vector<256x128xf32>
    %81 = tpu.matmul %78, %80, %cst_74 {dimension_numbers = #tpu.dot_dimension_numbers<[1], [0], [0], [1], [0, 0, 1, 1], [], []>} : vector<256x4xbf16>, vector<4x128xbf16>, vector<256x128xf32> -> vector<256x128xf32>
    %82 = arith.addf %73, %81 : vector<256x128xf32>
    %83 = tpu.transpose %82, [1, 0] : vector<256x128xf32> -> vector<128x256xf32>
    %84 = vector.extract_strided_slice %83 {offsets = [0, 0], sizes = [8, 256], strides = [1, 1]} : vector<128x256xf32> to vector<8x256xf32>
    %c0_75 = arith.constant 0 : index
    %c0_76 = arith.constant 0 : index
    %85 = vector.load %arg4[%c0_75, %c0_76] : memref<8x1xf32, #tpu.memory_space<vmem>>, vector<8x1xf32>
    %86 = vector.broadcast %85 : vector<8x1xf32> to vector<8x256xf32>
    %87 = arith.addf %84, %86 : vector<8x256xf32>
    %cst_77 = arith.constant 0.000000e+00 : f32
    %88 = vector.broadcast %cst_77 : f32 to vector<8x256xf32>
    %89 = arith.maximumf %87, %88 : vector<8x256xf32>
    %c0_78 = arith.constant 0 : index
    %c0_79 = arith.constant 0 : index
    %c0_80 = arith.constant 0 : index
    %90 = vector.load %arg5[%c0_78, %c0_79, %c0_80] : memref<1x8x256xf32, #tpu.memory_space<vmem>>, vector<1x8x256xf32>
    %91 = vector.shape_cast %90 : vector<1x8x256xf32> to vector<8x256xf32>
    %92 = vector.shape_cast %89 : vector<8x256xf32> to vector<1x8x256xf32>
    tpu.vector_store %arg5[%c0_78, %c0_79, %c0_80], %92 {strides = array<i32>} : memref<1x8x256xf32, #tpu.memory_space<vmem>>, vector<1x8x256xf32>,
    return
  }
  func.func @transform_0(%arg0: i32, %arg1: i32) -> (i32, i32, i32, i32) {
    %c0_i32 = arith.constant 0 : i32
    %c0_i32_0 = arith.constant 0 : i32
    %c0_i32_1 = arith.constant 0 : i32
    %c0_i32_2 = arith.constant 0 : i32
    return %arg0, %c0_i32, %c0_i32_0, %c0_i32_1 : i32, i32, i32, i32
  }
  func.func @transform_1(%arg0: i32, %arg1: i32) -> (i32, i32, i32, i32) {
    %c0_i32 = arith.constant 0 : i32
    %c0_i32_0 = arith.constant 0 : i32
    %c0_i32_1 = arith.constant 0 : i32
    %c0_i32_2 = arith.constant 0 : i32
    %c0_i32_3 = arith.constant 0 : i32
    return %c0_i32, %c0_i32_0, %c0_i32_1, %c0_i32_2 : i32, i32, i32, i32
  }
  func.func @transform_2(%arg0: i32, %arg1: i32) -> (i32, i32) {
    %c0_i32 = arith.constant 0 : i32
    %c0_i32_0 = arith.constant 0 : i32
    %c0_i32_1 = arith.constant 0 : i32
    return %c0_i32, %c0_i32_0 : i32, i32
  }
  func.func @transform_3(%arg0: i32, %arg1: i32) -> (i32, i32, i32) {
    %c0_i32 = arith.constant 0 : i32
    %c0_i32_0 = arith.constant 0 : i32
    return %arg0, %c0_i32, %arg1 : i32, i32, i32
  }
}

</mosaic_0001>

<llo_original>
// kernel: basic_conv_forward.1
$region0: #{basic_conv_forward.1}
  #allocation0 [shape = 'u32[]', space=smem, size = 0x4, offset = 0x4, fixed_abs, tag = 'smem constant byte address 0x4 - core index']
  #allocation1 [shape = 'u32[72,128]{1,0:T(1,128)}', space=vmem, size = 0x9000, scoped, tag = 'internal scratch']
  %s0 = inlined_call_operand.vmem [shape: bf16[2,18,18,4], index: 0, kind: input, shape index: {}]
  %s1 = inlined_call_operand.vmem [shape: bf16[3,3,4,128], index: 1, kind: input, shape index: {}]
  %s2 = inlined_call_operand.vmem [shape: f32[8,1], index: 2, kind: input, shape index: {}]
  %s3 = inlined_call_operand.vmem [shape: f32[2,8,256], index: 3, kind: output, shape index: {}]
  %s4 = sld [smem:[#allocation0]]
  $region45: #{basic_conv_forward.1} parent=0
    _
  %s6 = ssub.s32 1, %s4
  %s7 = scalar_select 0, %s6, %s4
  loop: start=0, step=1, limit=4
  $region2: #{basic_conv_forward.1} parent=0 // loop_pre_header
    _
  $region3: #{basic_conv_forward.1} parent=0 // loop_header
    %s9 = sphi 0, %s13
    %p10 = scmp.ge.s32.totalorder %s9, 4
    %s16 = sphi 0, %s28
    %s17 = sphi 0, %s24
    %s18 = sphi 0, %s16
    %s19 = sphi 0, %s17
    %s20 = sphi 0, %s18
    %s21 = sphi 0, %s19
    %s31 = sphi 0, %s33
    %s34 = sphi 0, %s31
    %s35 = sphi 0, %s34
    %s51 = sphi 0, %s35
    %s55 = sphi 0, %s55
    %s57 = sphi 0, %s55
    %s58 = sphi 0, %s57
    %s72 = sphi 0, %s58
    %s76 = sphi 0, %s76
    %s78 = sphi 0, %s76
    %s79 = sphi 0, %s78
    %s93 = sphi 0, %s79
    %s101 = sphi 0, %s103
    %s104 = sphi 0, %s101
    %s105 = sphi 0, %s104
    %s121 = sphi 0, %s105
  $region4: #{basic_conv_forward.1} parent=0 // loop_header_branch
    %12 = sbr.rel (%p10) target = $region8
  $region5: #{basic_conv_forward.1} parent=0 // loop_body
    %s14 = ssub.s32 %s9, 1
    %s15 = ssub.s32 %s9, 2
    %s22 = sadd.s32 1, %s17
    %p23 = scmp.ge.s32.totalorder %s22, 1
    %s24 = scalar_select %p23, 0, %s22
    %s25 = sadd.s32 1, %s16
    %s26 = scalar_select %p23, %s25, %s16
    %p27 = scmp.ge.s32.totalorder %s26, 2
    %s28 = scalar_select %p27, 0, %s26
    %s29 = ssub.s32 %s16, %s28
    %p30 = scmp.eq.s32.totalorder %s29, 0
    %s32 = sadd.s32 %s31, 1
    %s33 = scalar_select %p30, %s31, %s32
    %p36 = pneg %p30
    %p37 = scmp.eq.s32.totalorder %s9, 1
    %p38 = por %p36, %p37
    %p39 = scmp.ne.s32.totalorder %s31, %s34
    %p40 = scmp.eq.s32.totalorder %s9, 0
    %p41 = por %p39, %p40
    %p42 = scmp.ne.s32.totalorder %s31, %s34
    %p43 = scmp.eq.s32.totalorder %s14, 1
    %p44 = por %p42, %p43
    %p45 = scmp.ne.s32.totalorder %s34, %s35
    %p46 = scmp.eq.s32.totalorder %s14, 0
    %p47 = por %p45, %p46
    %p48 = scmp.ne.s32.totalorder %s34, %s35
    %p49 = scmp.eq.s32.totalorder %s15, 1
    %p50 = por %p48, %p49
    %p52 = scmp.ne.s32.totalorder %s35, %s51
    %p53 = scmp.eq.s32.totalorder %s15, 0
    %p54 = por %p52, %p53
    %s56 = sadd.s32 %s55, 1
    %p59 = scmp.eq.s32.totalorder %s9, 1
    %p60 = scmp.ne.s32.totalorder %s55, %s57
    %p61 = scmp.eq.s32.totalorder %s9, 0
    %p62 = por %p60, %p61
    %p63 = scmp.ne.s32.totalorder %s55, %s57
    %p64 = scmp.eq.s32.totalorder %s14, 1
    %p65 = por %p63, %p64
    %p66 = scmp.ne.s32.totalorder %s57, %s58
    %p67 = scmp.eq.s32.totalorder %s14, 0
    %p68 = por %p66, %p67
    %p69 = scmp.ne.s32.totalorder %s57, %s58
    %p70 = scmp.eq.s32.totalorder %s15, 1
    %p71 = por %p69, %p70
    %p73 = scmp.ne.s32.totalorder %s58, %s72
    %p74 = scmp.eq.s32.totalorder %s15, 0
    %p75 = por %p73, %p74
    %s77 = sadd.s32 %s76, 1
    %p80 = scmp.eq.s32.totalorder %s9, 1
    %p81 = scmp.ne.s32.totalorder %s76, %s78
    %p82 = scmp.eq.s32.totalorder %s9, 0
    %p83 = por %p81, %p82
    %p84 = scmp.ne.s32.totalorder %s76, %s78
    %p85 = scmp.eq.s32.totalorder %s14, 1
    %p86 = por %p84, %p85
    %p87 = scmp.ne.s32.totalorder %s78, %s79
    %p88 = scmp.eq.s32.totalorder %s14, 0
    %p89 = por %p87, %p88
    %p90 = scmp.ne.s32.totalorder %s78, %s79
    %p91 = scmp.eq.s32.totalorder %s15, 1
    %p92 = por %p90, %p91
    %p94 = scmp.ne.s32.totalorder %s79, %s93
    %p95 = scmp.eq.s32.totalorder %s15, 0
    %p96 = por %p94, %p95
    %s97 = ssub.s32 %s16, %s28
    %s98 = ssub.s32 %s17, %s24
    %s99 = sor.u32 %s97, %s98
    %p100 = scmp.eq.s32.totalorder %s99, 0
    %s102 = sadd.s32 %s101, 1
    %s103 = scalar_select %p100, %s101, %s102
    %p106 = pneg %p100
    %p107 = scmp.eq.s32.totalorder %s9, 1
    %p108 = por %p106, %p107
    %p109 = scmp.ne.s32.totalorder %s101, %s104
    %p110 = scmp.eq.s32.totalorder %s9, 0
    %p111 = por %p109, %p110
    %p112 = scmp.ne.s32.totalorder %s101, %s104
    %p113 = scmp.eq.s32.totalorder %s14, 1
    %p114 = por %p112, %p113
    %p115 = scmp.ne.s32.totalorder %s104, %s105
    %p116 = scmp.eq.s32.totalorder %s14, 0
    %p117 = por %p115, %p116
    %p118 = scmp.ne.s32.totalorder %s104, %s105
    %p119 = scmp.eq.s32.totalorder %s15, 1
    %p120 = por %p118, %p119
    %p122 = scmp.ne.s32.totalorder %s105, %s121
    %p123 = scmp.eq.s32.totalorder %s15, 0
    %p124 = por %p122, %p123
    %p125 = scmp.le.s32.totalorder 1, %s9
    %p126 = scmp.lt.s32.totalorder %s9, 3
    %p127 = pnand %p125, %p126
    %p128 = pneg %p127
    // Predicated region
    $region9: #{basic_conv_forward.1} parent=5 // pred_check
      _
    $region10: #{basic_conv_forward.1} parent=5 // pred_check_branch
      %130 = sbr.rel (%p127) target = $region12
    $region11: #{basic_conv_forward.1} parent=5 // pred_region
      %s131 = ssub.s32 %s9, 1
      // Predicated region
      $region13: #{basic_conv_forward.1} parent=11 // pred_check
        %p132 = pneg %p68
      $region14: #{basic_conv_forward.1} parent=11 // pred_check_branch
        %134 = sbr.rel (%p132) target = $region16
      $region15: #{basic_conv_forward.1} parent=11 // pred_region
        _
      $region16: #{basic_conv_forward.1} parent=11 // pred_fallthru
        _
      // Predicated region
      $region17: #{basic_conv_forward.1} parent=11 // pred_check
        %p135 = pneg %p89
      $region18: #{basic_conv_forward.1} parent=11 // pred_check_branch
        %137 = sbr.rel (%p135) target = $region20
      $region19: #{basic_conv_forward.1} parent=11 // pred_region
        _
      $region20: #{basic_conv_forward.1} parent=11 // pred_fallthru
        _
    $region12: #{basic_conv_forward.1} parent=5 // pred_fallthru
      _
    %p138 = scmp.lt.s32.totalorder %s9, 2
    // Predicated region
    $region21: #{basic_conv_forward.1} parent=5 // pred_check
      %p139 = pneg %p138
    $region22: #{basic_conv_forward.1} parent=5 // pred_check_branch
      %141 = sbr.rel (%p139) target = $region24
    $region23: #{basic_conv_forward.1} parent=5 // pred_region
      // Predicated region
      $region25: #{basic_conv_forward.1} parent=23 // pred_check
        %p142 = pneg %p41
      $region26: #{basic_conv_forward.1} parent=23 // pred_check_branch
        %144 = sbr.rel (%p142) target = $region28
      $region27: #{basic_conv_forward.1} parent=23 // pred_region
        %p145 = scmp.lt.s32.totalorder %s16, 1
        %s146 = scalar_select %p145, %s16, 1
        %s147 = smul.addr %s146, 54
        %s148 = smul.addr %s147, 4
        %s149 = scalar_lea.vmem %s0, %s148
      $region28: #{basic_conv_forward.1} parent=23 // pred_fallthru
        _
    $region24: #{basic_conv_forward.1} parent=5 // pred_fallthru
      _
    %p150 = scmp.le.s32.totalorder 1, %s9
    %p151 = scmp.lt.s32.totalorder %s9, 3
    %p152 = pnand %p150, %p151
    %p153 = pneg %p152
    // Predicated region
    $region29: #{basic_conv_forward.1} parent=5 // pred_check
      _
    $region30: #{basic_conv_forward.1} parent=5 // pred_check_branch
      %155 = sbr.rel (%p152) target = $region32
    $region31: #{basic_conv_forward.1} parent=5 // pred_region
      %s156 = ssub.s32 %s9, 1
      %p157 = scmp.lt.s32.totalorder %s18, 1
      %s158 = scalar_select %p157, %s18, 1
      %s159 = smul.addr %s158, 54
      %s160 = smul.addr %s159, 4
      %s161 = scalar_lea.vmem %s0, %s160
      %p162 = pneg %p47
      %p163 = pneg %p44
      %p164 = pneg %p68
      %p165 = pneg %p65
      %p166 = pneg %p89
      %p167 = pneg %p86
      %p168 = pneg %p117
      %p169 = pneg %p114
      %s170 = smul.u32 2, %s19
      %p171 = scmp.lt.s32.totalorder %s18, 1
      %s172 = scalar_select %p171, %s18, 1
      %p173 = scmp.lt.s32.totalorder %s170, 1
      %s174 = scalar_select %p173, %s170, 1
      %s175 = smul.addr %s172, 2
      %s176 = sadd.s32 %s174, %s175
      %s177 = smul.addr %s176, 8
      %s178 = scalar_lea.vmem %s3, %s177
      %p179 = scmp.lt.s32.totalorder %s18, 1
      %s180 = scalar_select %p179, %s18, 1
      %s181 = smul.addr %s180, 54
      %s182 = smul.addr %s181, 4
      %s183 = scalar_lea.vmem %s0, %s182
      %s184 = smul.u32 2, %s19
      %p185 = scmp.lt.s32.totalorder %s18, 1
      %s186 = scalar_select %p185, %s18, 1
      %p187 = scmp.lt.s32.totalorder %s184, 1
      %s188 = scalar_select %p187, %s184, 1
      %s189 = smul.addr %s186, 2
      %s190 = sadd.s32 %s188, %s189
      %s191 = smul.addr %s190, 8
      %s192 = scalar_lea.vmem %s3, %s191
      %s193 = smul.u32 2, %s19
      %s195 = smul.u32 %s19, 16
      %s196 = smul.u32 %s195, 3
      %s197 = smul.addr %s196, 4
      %s198 = scalar_lea.vmem %s183, %s197
      %v199 = vld [vmem:[%s198] sm:$0xf]
      %v200 = vld [vmem:[%s198 + $0x4] sm:$0xf]
      %v201 = vld [vmem:[%s198 + $0xc] sm:$0xf]
      %v202 = vld [vmem:[%s198 + $0x10] sm:$0xf]
      %v203 = vld [vmem:[%s198 + $0x18] sm:$0xf]
      %v204 = vld [vmem:[%s198 + $0x1c] sm:$0xf]
      %v205 = vld [vmem:[%s198 + $0x24] sm:$0xf]
      %v206 = vld [vmem:[%s198 + $0x28] sm:$0xf]
      %v207 = vld [vmem:[%s198 + $0x30] sm:$0xf]
      %v208 = vld [vmem:[%s198 + $0x34] sm:$0xf]
      %v209 = vld [vmem:[%s198 + $0x3c] sm:$0xf]
      %v210 = vld [vmem:[%s198 + $0x40] sm:$0xf]
      %v211 = vld [vmem:[%s198 + $0x48] sm:$0xf]
      %v212 = vld [vmem:[%s198 + $0x4c] sm:$0xf]
      %v213 = vld [vmem:[%s198 + $0x54] sm:$0xf]
      %v214 = vld [vmem:[%s198 + $0x58] sm:$0xf]
      %v215 = vld [vmem:[%s198 + $0x60] sm:$0xf]
      %v216 = vld [vmem:[%s198 + $0x64] sm:$0xf]
      %v217 = vld [vmem:[%s198 + $0x6c] sm:$0xf]
      %v218 = vld [vmem:[%s198 + $0x70] sm:$0xf]
      %v219 = vld [vmem:[%s198 + $0x78] sm:$0xf]
      %v220 = vld [vmem:[%s198 + $0x7c] sm:$0xf]
      %v221 = vld [vmem:[%s198 + $0x84] sm:$0xf]
      %v222 = vld [vmem:[%s198 + $0x88] sm:$0xf]
      %v223 = vld [vmem:[%s198 + $0x90] sm:$0xf]
      %v224 = vld [vmem:[%s198 + $0x94] sm:$0xf]
      %v225 = vld [vmem:[%s198 + $0x9c] sm:$0xf]
      %v226 = vld [vmem:[%s198 + $0xa0] sm:$0xf]
      %v227 = vld [vmem:[%s198 + $0xa8] sm:$0xf]
      %v228 = vld [vmem:[%s198 + $0xac] sm:$0xf]
      %v229 = vld [vmem:[%s198 + $0xb4] sm:$0xf]
      %v230 = vld [vmem:[%s198 + $0xb8] sm:$0xf]
      %v231 = vld [vmem:[%s1] sm:$0x3]
      %v232 = vld [vmem:[%s198 + $0x8] sm:$0x1]
      %v233 = vld [vmem:[%s198 + $0x14] sm:$0x1]
      %v234 = vld [vmem:[%s198 + $0x20] sm:$0x1]
      %v235 = vld [vmem:[%s198 + $0x2c] sm:$0x1]
      %v236 = vld [vmem:[%s198 + $0x38] sm:$0x1]
      %v237 = vld [vmem:[%s198 + $0x44] sm:$0x1]
      %v238 = vld [vmem:[%s198 + $0x50] sm:$0x1]
      %v239 = vld [vmem:[%s198 + $0x5c] sm:$0x1]
      %v240 = vld [vmem:[%s198 + $0x68] sm:$0x1]
      %v241 = vld [vmem:[%s198 + $0x74] sm:$0x1]
      %v242 = vld [vmem:[%s198 + $0x80] sm:$0x1]
      %v243 = vld [vmem:[%s198 + $0x8c] sm:$0x1]
      %v244 = vld [vmem:[%s198 + $0x98] sm:$0x1]
      %v245 = vld [vmem:[%s198 + $0xa4] sm:$0x1]
      %v246 = vld [vmem:[%s198 + $0xb0] sm:$0x1]
      %v247 = vld [vmem:[%s198 + $0xbc] sm:$0x1]
      %vm248 = vsmask.f32 3328
      %vm249 = vsmask.f32 7440
      %vm250 = vmor %vm248, %vm249
      %v252 = vshrl.u32 %v199, 16
      %v254 = vrot.slane %v252, 4
      %v255 = vshll.u32 %v199, 16
      %v257 = vrot.slane %v255, 5
      %v258 = vor.u32 %v254, %v257
      %v259 = vrot.slane %v258, 4
      %v261 = vshll.u32 %v200, 16
      %v263 = vrot.slane %v261, 5
      %v264 = vsel %vm250, %v259, %v263
      %v265 = vshrl.u32 %v200, 16
      %v267 = vrot.slane %v265, 4
      %v268 = vor.u32 %v267, %v263
      %v269 = vrot.slane %v268, 4
      %v271 = vshll.u32 %v232, 16
      %v273 = vrot.slane %v271, 5
      %v274 = vsel %vm250, %v269, %v273
      %v276 = vshrl.u32 %v201, 16
      %v278 = vrot.slane %v276, 4
      %v279 = vshll.u32 %v201, 16
      %v281 = vrot.slane %v279, 5
      %v282 = vor.u32 %v278, %v281
      %v283 = vrot.slane %v282, 4
      %v285 = vshll.u32 %v202, 16
      %v287 = vrot.slane %v285, 5
      %v288 = vsel %vm250, %v283, %v287
      %v289 = vshrl.u32 %v202, 16
      %v291 = vrot.slane %v289, 4
      %v292 = vor.u32 %v291, %v287
      %v293 = vrot.slane %v292, 4
      %v295 = vshll.u32 %v233, 16
      %v297 = vrot.slane %v295, 5
      %v298 = vsel %vm250, %v293, %v297
      %v300 = vshrl.u32 %v203, 16
      %v302 = vrot.slane %v300, 4
      %v303 = vshll.u32 %v203, 16
      %v305 = vrot.slane %v303, 5
      %v306 = vor.u32 %v302, %v305
      %v307 = vrot.slane %v306, 4
      %v309 = vshll.u32 %v204, 16
      %v311 = vrot.slane %v309, 5
      %v312 = vsel %vm250, %v307, %v311
      %v313 = vshrl.u32 %v204, 16
      %v315 = vrot.slane %v313, 4
      %v316 = vor.u32 %v315, %v311
      %v317 = vrot.slane %v316, 4
      %v319 = vshll.u32 %v234, 16
      %v321 = vrot.slane %v319, 5
      %v322 = vsel %vm250, %v317, %v321
      %v324 = vshrl.u32 %v205, 16
      %v326 = vrot.slane %v324, 4
      %v327 = vshll.u32 %v205, 16
      %v329 = vrot.slane %v327, 5
      %v330 = vor.u32 %v326, %v329
      %v331 = vrot.slane %v330, 4
      %v333 = vshll.u32 %v206, 16
      %v335 = vrot.slane %v333, 5
      %v336 = vsel %vm250, %v331, %v335
      %v337 = vshrl.u32 %v206, 16
      %v339 = vrot.slane %v337, 4
      %v340 = vor.u32 %v339, %v335
      %v341 = vrot.slane %v340, 4
      %v343 = vshll.u32 %v235, 16
      %v345 = vrot.slane %v343, 5
      %v346 = vsel %vm250, %v341, %v345
      %v348 = vshrl.u32 %v207, 16
      %v350 = vrot.slane %v348, 4
      %v351 = vshll.u32 %v207, 16
      %v353 = vrot.slane %v351, 5
      %v354 = vor.u32 %v350, %v353
      %v355 = vrot.slane %v354, 4
      %v357 = vshll.u32 %v208, 16
      %v359 = vrot.slane %v357, 5
      %v360 = vsel %vm250, %v355, %v359
      %v361 = vshrl.u32 %v208, 16
      %v363 = vrot.slane %v361, 4
      %v364 = vor.u32 %v363, %v359
      %v365 = vrot.slane %v364, 4
      %v367 = vshll.u32 %v236, 16
      %v369 = vrot.slane %v367, 5
      %v370 = vsel %vm250, %v365, %v369
      %v372 = vshrl.u32 %v209, 16
      %v374 = vrot.slane %v372, 4
      %v375 = vshll.u32 %v209, 16
      %v377 = vrot.slane %v375, 5
      %v378 = vor.u32 %v374, %v377
      %v379 = vrot.slane %v378, 4
      %v381 = vshll.u32 %v210, 16
      %v383 = vrot.slane %v381, 5
      %v384 = vsel %vm250, %v379, %v383
      %v385 = vshrl.u32 %v210, 16
      %v387 = vrot.slane %v385, 4
      %v388 = vor.u32 %v387, %v383
      %v389 = vrot.slane %v388, 4
      %v391 = vshll.u32 %v237, 16
      %v393 = vrot.slane %v391, 5
      %v394 = vsel %vm250, %v389, %v393
      %v396 = vshrl.u32 %v211, 16
      %v398 = vrot.slane %v396, 4
      %v399 = vshll.u32 %v211, 16
      %v401 = vrot.slane %v399, 5
      %v402 = vor.u32 %v398, %v401
      %v403 = vrot.slane %v402, 4
      %v405 = vshll.u32 %v212, 16
      %v407 = vrot.slane %v405, 5
      %v408 = vsel %vm250, %v403, %v407
      %v409 = vshrl.u32 %v212, 16
      %v411 = vrot.slane %v409, 4
      %v412 = vor.u32 %v411, %v407
      %v413 = vrot.slane %v412, 4
      %v415 = vshll.u32 %v238, 16
      %v417 = vrot.slane %v415, 5
      %v418 = vsel %vm250, %v413, %v417
      %v420 = vshrl.u32 %v213, 16
      %v422 = vrot.slane %v420, 4
      %v423 = vshll.u32 %v213, 16
      %v425 = vrot.slane %v423, 5
      %v426 = vor.u32 %v422, %v425
      %v427 = vrot.slane %v426, 4
      %v429 = vshll.u32 %v214, 16
      %v431 = vrot.slane %v429, 5
      %v432 = vsel %vm250, %v427, %v431
      %v433 = vshrl.u32 %v214, 16
      %v435 = vrot.slane %v433, 4
      %v436 = vor.u32 %v435, %v431
      %v437 = vrot.slane %v436, 4
      %v439 = vshll.u32 %v239, 16
      %v441 = vrot.slane %v439, 5
      %v442 = vsel %vm250, %v437, %v441
      %v444 = vshrl.u32 %v215, 16
      %v446 = vrot.slane %v444, 4
      %v447 = vshll.u32 %v215, 16
      %v449 = vrot.slane %v447, 5
      %v450 = vor.u32 %v446, %v449
      %v451 = vrot.slane %v450, 4
      %v453 = vshll.u32 %v216, 16
      %v455 = vrot.slane %v453, 5
      %v456 = vsel %vm250, %v451, %v455
      %v457 = vshrl.u32 %v216, 16
      %v459 = vrot.slane %v457, 4
      %v460 = vor.u32 %v459, %v455
      %v461 = vrot.slane %v460, 4
      %v463 = vshll.u32 %v240, 16
      %v465 = vrot.slane %v463, 5
      %v466 = vsel %vm250, %v461, %v465
      %v468 = vshrl.u32 %v217, 16
      %v470 = vrot.slane %v468, 4
      %v471 = vshll.u32 %v217, 16
      %v473 = vrot.slane %v471, 5
      %v474 = vor.u32 %v470, %v473
      %v475 = vrot.slane %v474, 4
      %v477 = vshll.u32 %v218, 16
      %v479 = vrot.slane %v477, 5
      %v480 = vsel %vm250, %v475, %v479
      %v481 = vshrl.u32 %v218, 16
      %v483 = vrot.slane %v481, 4
      %v484 = vor.u32 %v483, %v479
      %v485 = vrot.slane %v484, 4
      %v487 = vshll.u32 %v241, 16
      %v489 = vrot.slane %v487, 5
      %v490 = vsel %vm250, %v485, %v489
      %v492 = vshrl.u32 %v219, 16
      %v494 = vrot.slane %v492, 4
      %v495 = vshll.u32 %v219, 16
      %v497 = vrot.slane %v495, 5
      %v498 = vor.u32 %v494, %v497
      %v499 = vrot.slane %v498, 4
      %v501 = vshll.u32 %v220, 16
      %v503 = vrot.slane %v501, 5
      %v504 = vsel %vm250, %v499, %v503
      %v505 = vshrl.u32 %v220, 16
      %v507 = vrot.slane %v505, 4
      %v508 = vor.u32 %v507, %v503
      %v509 = vrot.slane %v508, 4
      %v511 = vshll.u32 %v242, 16
      %v513 = vrot.slane %v511, 5
      %v514 = vsel %vm250, %v509, %v513
      %v516 = vshrl.u32 %v221, 16
      %v518 = vrot.slane %v516, 4
      %v519 = vshll.u32 %v221, 16
      %v521 = vrot.slane %v519, 5
      %v522 = vor.u32 %v518, %v521
      %v523 = vrot.slane %v522, 4
      %v525 = vshll.u32 %v222, 16
      %v527 = vrot.slane %v525, 5
      %v528 = vsel %vm250, %v523, %v527
      %v529 = vshrl.u32 %v222, 16
      %v531 = vrot.slane %v529, 4
      %v532 = vor.u32 %v531, %v527
      %v533 = vrot.slane %v532, 4
      %v535 = vshll.u32 %v243, 16
      %v537 = vrot.slane %v535, 5
      %v538 = vsel %vm250, %v533, %v537
      %v540 = vshrl.u32 %v223, 16
      %v542 = vrot.slane %v540, 4
      %v543 = vshll.u32 %v223, 16
      %v545 = vrot.slane %v543, 5
      %v546 = vor.u32 %v542, %v545
      %v547 = vrot.slane %v546, 4
      %v549 = vshll.u32 %v224, 16
      %v551 = vrot.slane %v549, 5
      %v552 = vsel %vm250, %v547, %v551
      %v553 = vshrl.u32 %v224, 16
      %v555 = vrot.slane %v553, 4
      %v556 = vor.u32 %v555, %v551
      %v557 = vrot.slane %v556, 4
      %v559 = vshll.u32 %v244, 16
      %v561 = vrot.slane %v559, 5
      %v562 = vsel %vm250, %v557, %v561
      %v564 = vshrl.u32 %v225, 16
      %v566 = vrot.slane %v564, 4
      %v567 = vshll.u32 %v225, 16
      %v569 = vrot.slane %v567, 5
      %v570 = vor.u32 %v566, %v569
      %v571 = vrot.slane %v570, 4
      %v573 = vshll.u32 %v226, 16
      %v575 = vrot.slane %v573, 5
      %v576 = vsel %vm250, %v571, %v575
      %v577 = vshrl.u32 %v226, 16
      %v579 = vrot.slane %v577, 4
      %v580 = vor.u32 %v579, %v575
      %v581 = vrot.slane %v580, 4
      %v583 = vshll.u32 %v245, 16
      %v585 = vrot.slane %v583, 5
      %v586 = vsel %vm250, %v581, %v585
      %v588 = vshrl.u32 %v227, 16
      %v590 = vrot.slane %v588, 4
      %v591 = vshll.u32 %v227, 16
      %v593 = vrot.slane %v591, 5
      %v594 = vor.u32 %v590, %v593
      %v595 = vrot.slane %v594, 4
      %v597 = vshll.u32 %v228, 16
      %v599 = vrot.slane %v597, 5
      %v600 = vsel %vm250, %v595, %v599
      %v601 = vshrl.u32 %v228, 16
      %v603 = vrot.slane %v601, 4
      %v604 = vor.u32 %v603, %v599
      %v605 = vrot.slane %v604, 4
      %v607 = vshll.u32 %v246, 16
      %v609 = vrot.slane %v607, 5
      %v610 = vsel %vm250, %v605, %v609
      %v612 = vshrl.u32 %v229, 16
      %v614 = vrot.slane %v612, 4
      %v615 = vshll.u32 %v229, 16
      %v617 = vrot.slane %v615, 5
      %v618 = vor.u32 %v614, %v617
      %v619 = vrot.slane %v618, 4
      %v621 = vshll.u32 %v230, 16
      %v623 = vrot.slane %v621, 5
      %v624 = vsel %vm250, %v619, %v623
      %v625 = vshrl.u32 %v230, 16
      %v627 = vrot.slane %v625, 4
      %v628 = vor.u32 %v627, %v623
      %v629 = vrot.slane %v628, 4
      %v631 = vshll.u32 %v247, 16
      %v633 = vrot.slane %v631, 5
      %v634 = vsel %vm250, %v629, %v633
      %s635 = scalar_lea.vmem %s1, 2
      %v636 = vld [vmem:[%s635] sm:$0x3]
      %v637 = vunpack.c.l.b16 %v264
      %v638 = vunpack.c.l.b16 %v274
      %v639 = vunpack.c.l.b16 %v288
      %v640 = vunpack.c.l.b16 %v298
      %v641 = vunpack.c.l.b16 %v312
      %v642 = vunpack.c.l.b16 %v322
      %v643 = vunpack.c.l.b16 %v336
      %v644 = vunpack.c.l.b16 %v346
      %v645 = vunpack.c.l.b16 %v360
      %v646 = vunpack.c.l.b16 %v370
      %v647 = vunpack.c.l.b16 %v384
      %v648 = vunpack.c.l.b16 %v394
      %v649 = vunpack.c.l.b16 %v408
      %v650 = vunpack.c.l.b16 %v418
      %v651 = vunpack.c.l.b16 %v432
      %v652 = vunpack.c.l.b16 %v442
      %v653 = vunpack.c.l.b16 %v456
      %v654 = vunpack.c.l.b16 %v466
      %v655 = vunpack.c.l.b16 %v480
      %v656 = vunpack.c.l.b16 %v490
      %v657 = vunpack.c.l.b16 %v504
      %v658 = vunpack.c.l.b16 %v514
      %v659 = vunpack.c.l.b16 %v528
      %v660 = vunpack.c.l.b16 %v538
      %v661 = vunpack.c.l.b16 %v552
      %v662 = vunpack.c.l.b16 %v562
      %v663 = vunpack.c.l.b16 %v576
      %v664 = vunpack.c.l.b16 %v586
      %v665 = vunpack.c.l.b16 %v600
      %v666 = vunpack.c.l.b16 %v610
      %v667 = vunpack.c.l.b16 %v624
      %v668 = vunpack.c.l.b16 %v634
      %v669 = vpack.c.b16 %v638, %v637
      %v670 = vpack.c.b16 %v640, %v639
      %v671 = vpack.c.b16 %v642, %v641
      %v672 = vpack.c.b16 %v644, %v643
      %v673 = vpack.c.b16 %v646, %v645
      %v674 = vpack.c.b16 %v648, %v647
      %v675 = vpack.c.b16 %v650, %v649
      %v676 = vpack.c.b16 %v652, %v651
      %v677 = vpack.c.b16 %v654, %v653
      %v678 = vpack.c.b16 %v656, %v655
      %v679 = vpack.c.b16 %v658, %v657
      %v680 = vpack.c.b16 %v660, %v659
      %v681 = vpack.c.b16 %v662, %v661
      %v682 = vpack.c.b16 %v664, %v663
      %v683 = vpack.c.b16 %v666, %v665
      %v684 = vpack.c.b16 %v668, %v667
      %vm685 = vcmask 31744
      %v687 = vsel %vm685, %v669, 0
      %v690 = vsel %vm685, %v670, 0
      %v693 = vsel %vm685, %v671, 0
      %v696 = vsel %vm685, %v672, 0
      %v699 = vsel %vm685, %v673, 0
      %v702 = vsel %vm685, %v674, 0
      %v705 = vsel %vm685, %v675, 0
      %v708 = vsel %vm685, %v676, 0
      %v711 = vsel %vm685, %v677, 0
      %v714 = vsel %vm685, %v678, 0
      %v717 = vsel %vm685, %v679, 0
      %v720 = vsel %vm685, %v680, 0
      %v723 = vsel %vm685, %v681, 0
      %v726 = vsel %vm685, %v682, 0
      %v729 = vsel %vm685, %v683, 0
      %v732 = vsel %vm685, %v684, 0
      %vm734 = vcmask 1041408
      %v736 = vsel %vm734, %v636, 0
      %738 = vmatpush.bf16.msra.mxu0 0
      %739 = vmatpush.bf16.msra.mxu0 0
      %740 = vmatpush.bf16.msra.mxu0 0
      %741 = vmatpush.bf16.msra.mxu0 0
      %742 = vmatpush.bf16.msra.mxu0 0
      %743 = vmatpush.bf16.msra.mxu0 0
      %744 = vmatpush.bf16.msra.mxu0 0
      %745 = vmatpush.bf16.msra.mxu0 %v736
      %746 = vmatmul.bf16.gmra.mxu0 %v687
      %v747 = vpop.f32.mrf.mxu0
      %v748 = vadd.f32 0.0, %v747
      %v749 = vpop.f32.mrf.mxu0
      %v750 = vadd.f32 0.0, %v749
      %751 = vmatmul.bf16.gmra.mxu0 %v690
      %v752 = vpop.f32.mrf.mxu0
      %v753 = vadd.f32 0.0, %v752
      %v754 = vpop.f32.mrf.mxu0
      %v755 = vadd.f32 0.0, %v754
      %756 = vmatmul.bf16.gmra.mxu0 %v693
      %v757 = vpop.f32.mrf.mxu0
      %v758 = vadd.f32 0.0, %v757
      %v759 = vpop.f32.mrf.mxu0
      %v760 = vadd.f32 0.0, %v759
      %761 = vmatmul.bf16.gmra.mxu0 %v696
      %v762 = vpop.f32.mrf.mxu0
      %v763 = vadd.f32 0.0, %v762
      %v764 = vpop.f32.mrf.mxu0
      %v765 = vadd.f32 0.0, %v764
      %766 = vmatmul.bf16.gmra.mxu0 %v699
      %v767 = vpop.f32.mrf.mxu0
      %v768 = vadd.f32 0.0, %v767
      %v769 = vpop.f32.mrf.mxu0
      %v770 = vadd.f32 0.0, %v769
      %771 = vmatmul.bf16.gmra.mxu0 %v702
      %v772 = vpop.f32.mrf.mxu0
      %v773 = vadd.f32 0.0, %v772
      %v774 = vpop.f32.mrf.mxu0
      %v775 = vadd.f32 0.0, %v774
      %776 = vmatmul.bf16.gmra.mxu0 %v705
      %v777 = vpop.f32.mrf.mxu0
      %v778 = vadd.f32 0.0, %v777
      %v779 = vpop.f32.mrf.mxu0
      %v780 = vadd.f32 0.0, %v779
      %781 = vmatmul.bf16.gmra.mxu0 %v708
      %v782 = vpop.f32.mrf.mxu0
      %v783 = vadd.f32 0.0, %v782
      %v784 = vpop.f32.mrf.mxu0
      %v785 = vadd.f32 0.0, %v784
      %786 = vmatmul.bf16.gmra.mxu0 %v711
      %v787 = vpop.f32.mrf.mxu0
      %v788 = vadd.f32 0.0, %v787
      %v789 = vpop.f32.mrf.mxu0
      %v790 = vadd.f32 0.0, %v789
      %791 = vmatmul.bf16.gmra.mxu0 %v714
      %v792 = vpop.f32.mrf.mxu0
      %v793 = vadd.f32 0.0, %v792
      %v794 = vpop.f32.mrf.mxu0
      %v795 = vadd.f32 0.0, %v794
      %796 = vmatmul.bf16.gmra.mxu0 %v717
      %v797 = vpop.f32.mrf.mxu0
      %v798 = vadd.f32 0.0, %v797
      %v799 = vpop.f32.mrf.mxu0
      %v800 = vadd.f32 0.0, %v799
      %801 = vmatmul.bf16.gmra.mxu0 %v720
      %v802 = vpop.f32.mrf.mxu0
      %v803 = vadd.f32 0.0, %v802
      %v804 = vpop.f32.mrf.mxu0
      %v805 = vadd.f32 0.0, %v804
      %806 = vmatmul.bf16.gmra.mxu0 %v723
      %v807 = vpop.f32.mrf.mxu0
      %v808 = vadd.f32 0.0, %v807
      %v809 = vpop.f32.mrf.mxu0
      %v810 = vadd.f32 0.0, %v809
      %811 = vmatmul.bf16.gmra.mxu0 %v726
      %v812 = vpop.f32.mrf.mxu0
      %v813 = vadd.f32 0.0, %v812
      %v814 = vpop.f32.mrf.mxu0
      %v815 = vadd.f32 0.0, %v814
      %816 = vmatmul.bf16.gmra.mxu0 %v729
      %v817 = vpop.f32.mrf.mxu0
      %v818 = vadd.f32 0.0, %v817
      %v819 = vpop.f32.mrf.mxu0
      %v820 = vadd.f32 0.0, %v819
      %821 = vmatmul.bf16.gmra.mxu0 %v732
      %v822 = vpop.f32.mrf.mxu0
      %v823 = vadd.f32 0.0, %v822
      %v824 = vpop.f32.mrf.mxu0
      %v825 = vadd.f32 0.0, %v824
      %826 = vdwg.mxu0
      %v859 = vunpack.c.l.b16 %v199
      %v860 = vunpack.c.l.b16 %v200
      %v861 = vunpack.c.l.b16 %v201
      %v862 = vunpack.c.l.b16 %v202
      %v863 = vunpack.c.l.b16 %v203
      %v864 = vunpack.c.l.b16 %v204
      %v865 = vunpack.c.l.b16 %v205
      %v866 = vunpack.c.l.b16 %v206
      %v867 = vunpack.c.l.b16 %v207
      %v868 = vunpack.c.l.b16 %v208
      %v869 = vunpack.c.l.b16 %v209
      %v870 = vunpack.c.l.b16 %v210
      %v871 = vunpack.c.l.b16 %v211
      %v872 = vunpack.c.l.b16 %v212
      %v873 = vunpack.c.l.b16 %v213
      %v874 = vunpack.c.l.b16 %v214
      %v875 = vunpack.c.l.b16 %v215
      %v876 = vunpack.c.l.b16 %v216
      %v877 = vunpack.c.l.b16 %v217
      %v878 = vunpack.c.l.b16 %v218
      %v879 = vunpack.c.l.b16 %v219
      %v880 = vunpack.c.l.b16 %v220
      %v881 = vunpack.c.l.b16 %v221
      %v882 = vunpack.c.l.b16 %v222
      %v883 = vunpack.c.l.b16 %v223
      %v884 = vunpack.c.l.b16 %v224
      %v885 = vunpack.c.l.b16 %v225
      %v886 = vunpack.c.l.b16 %v226
      %v887 = vunpack.c.l.b16 %v227
      %v888 = vunpack.c.l.b16 %v228
      %v889 = vunpack.c.l.b16 %v229
      %v890 = vunpack.c.l.b16 %v230
      %v891 = vpack.c.b16 %v860, %v859
      %v892 = vpack.c.b16 %v862, %v861
      %v893 = vpack.c.b16 %v864, %v863
      %v894 = vpack.c.b16 %v866, %v865
      %v895 = vpack.c.b16 %v868, %v867
      %v896 = vpack.c.b16 %v870, %v869
      %v897 = vpack.c.b16 %v872, %v871
      %v898 = vpack.c.b16 %v874, %v873
      %v899 = vpack.c.b16 %v876, %v875
      %v900 = vpack.c.b16 %v878, %v877
      %v901 = vpack.c.b16 %v880, %v879
      %v902 = vpack.c.b16 %v882, %v881
      %v903 = vpack.c.b16 %v884, %v883
      %v904 = vpack.c.b16 %v886, %v885
      %v905 = vpack.c.b16 %v888, %v887
      %v906 = vpack.c.b16 %v890, %v889
      %v908 = vsel %vm685, %v891, 0
      %v911 = vsel %vm685, %v892, 0
      %v914 = vsel %vm685, %v893, 0
      %v917 = vsel %vm685, %v894, 0
      %v920 = vsel %vm685, %v895, 0
      %v923 = vsel %vm685, %v896, 0
      %v926 = vsel %vm685, %v897, 0
      %v929 = vsel %vm685, %v898, 0
      %v932 = vsel %vm685, %v899, 0
      %v935 = vsel %vm685, %v900, 0
      %v938 = vsel %vm685, %v901, 0
      %v941 = vsel %vm685, %v902, 0
      %v944 = vsel %vm685, %v903, 0
      %v947 = vsel %vm685, %v904, 0
      %v950 = vsel %vm685, %v905, 0
      %v953 = vsel %vm685, %v906, 0
      %v956 = vsel %vm734, %v231, 0
      %958 = vmatpush.bf16.msra.mxu0 0
      %959 = vmatpush.bf16.msra.mxu0 0
      %960 = vmatpush.bf16.msra.mxu0 0
      %961 = vmatpush.bf16.msra.mxu0 0
      %962 = vmatpush.bf16.msra.mxu0 0
      %963 = vmatpush.bf16.msra.mxu0 0
      %964 = vmatpush.bf16.msra.mxu0 0
      %965 = vmatpush.bf16.msra.mxu0 %v956
      %966 = vmatmul.bf16.gmra.mxu0 %v908
      %v967 = vpop.f32.mrf.mxu0
      %v968 = vadd.f32 %v748, %v967
      %v969 = vpop.f32.mrf.mxu0
      %v970 = vadd.f32 %v750, %v969
      %971 = vmatmul.bf16.gmra.mxu0 %v911
      %v972 = vpop.f32.mrf.mxu0
      %v973 = vadd.f32 %v753, %v972
      %v974 = vpop.f32.mrf.mxu0
      %v975 = vadd.f32 %v755, %v974
      %976 = vmatmul.bf16.gmra.mxu0 %v914
      %v977 = vpop.f32.mrf.mxu0
      %v978 = vadd.f32 %v758, %v977
      %v979 = vpop.f32.mrf.mxu0
      %v980 = vadd.f32 %v760, %v979
      %981 = vmatmul.bf16.gmra.mxu0 %v917
      %v982 = vpop.f32.mrf.mxu0
      %v983 = vadd.f32 %v763, %v982
      %v984 = vpop.f32.mrf.mxu0
      %v985 = vadd.f32 %v765, %v984
      %986 = vmatmul.bf16.gmra.mxu0 %v920
      %v987 = vpop.f32.mrf.mxu0
      %v988 = vadd.f32 %v768, %v987
      %v989 = vpop.f32.mrf.mxu0
      %v990 = vadd.f32 %v770, %v989
      %991 = vmatmul.bf16.gmra.mxu0 %v923
      %v992 = vpop.f32.mrf.mxu0
      %v993 = vadd.f32 %v773, %v992
      %v994 = vpop.f32.mrf.mxu0
      %v995 = vadd.f32 %v775, %v994
      %996 = vmatmul.bf16.gmra.mxu0 %v926
      %v997 = vpop.f32.mrf.mxu0
      %v998 = vadd.f32 %v778, %v997
      %v999 = vpop.f32.mrf.mxu0
      %v1000 = vadd.f32 %v780, %v999
      %1001 = vmatmul.bf16.gmra.mxu0 %v929
      %v1002 = vpop.f32.mrf.mxu0
      %v1003 = vadd.f32 %v783, %v1002
      %v1004 = vpop.f32.mrf.mxu0
      %v1005 = vadd.f32 %v785, %v1004
      %1006 = vmatmul.bf16.gmra.mxu0 %v932
      %v1007 = vpop.f32.mrf.mxu0
      %v1008 = vadd.f32 %v788, %v1007
      %v1009 = vpop.f32.mrf.mxu0
      %v1010 = vadd.f32 %v790, %v1009
      %1011 = vmatmul.bf16.gmra.mxu0 %v935
      %v1012 = vpop.f32.mrf.mxu0
      %v1013 = vadd.f32 %v793, %v1012
      %v1014 = vpop.f32.mrf.mxu0
      %v1015 = vadd.f32 %v795, %v1014
      %1016 = vmatmul.bf16.gmra.mxu0 %v938
      %v1017 = vpop.f32.mrf.mxu0
      %v1018 = vadd.f32 %v798, %v1017
      %v1019 = vpop.f32.mrf.mxu0
      %v1020 = vadd.f32 %v800, %v1019
      %1021 = vmatmul.bf16.gmra.mxu0 %v941
      %v1022 = vpop.f32.mrf.mxu0
      %v1023 = vadd.f32 %v803, %v1022
      %v1024 = vpop.f32.mrf.mxu0
      %v1025 = vadd.f32 %v805, %v1024
      %1026 = vmatmul.bf16.gmra.mxu0 %v944
      %v1027 = vpop.f32.mrf.mxu0
      %v1028 = vadd.f32 %v808, %v1027
      %v1029 = vpop.f32.mrf.mxu0
      %v1030 = vadd.f32 %v810, %v1029
      %1031 = vmatmul.bf16.gmra.mxu0 %v947
      %v1032 = vpop.f32.mrf.mxu0
      %v1033 = vadd.f32 %v813, %v1032
      %v1034 = vpop.f32.mrf.mxu0
      %v1035 = vadd.f32 %v815, %v1034
      %1036 = vmatmul.bf16.gmra.mxu0 %v950
      %v1037 = vpop.f32.mrf.mxu0
      %v1038 = vadd.f32 %v818, %v1037
      %v1039 = vpop.f32.mrf.mxu0
      %v1040 = vadd.f32 %v820, %v1039
      %1041 = vmatmul.bf16.gmra.mxu0 %v953
      %v1042 = vpop.f32.mrf.mxu0
      %v1043 = vadd.f32 %v823, %v1042
      %v1044 = vpop.f32.mrf.mxu0
      %v1045 = vadd.f32 %v825, %v1044
      %1046 = vdwg.mxu0
      %v1047 = vld [vmem:[%s198] sm:$0xe]
      %v1048 = vld [vmem:[%s198 + $0xc] sm:$0xe]
      %v1049 = vld [vmem:[%s198 + $0x18] sm:$0xe]
      %v1050 = vld [vmem:[%s198 + $0x24] sm:$0xe]
      %v1051 = vld [vmem:[%s198 + $0x30] sm:$0xe]
      %v1052 = vld [vmem:[%s198 + $0x3c] sm:$0xe]
      %v1053 = vld [vmem:[%s198 + $0x48] sm:$0xe]
      %v1054 = vld [vmem:[%s198 + $0x54] sm:$0xe]
      %v1055 = vld [vmem:[%s198 + $0x60] sm:$0xe]
      %v1056 = vld [vmem:[%s198 + $0x6c] sm:$0xe]
      %v1057 = vld [vmem:[%s198 + $0x78] sm:$0xe]
      %v1058 = vld [vmem:[%s198 + $0x84] sm:$0xe]
      %v1059 = vld [vmem:[%s198 + $0x90] sm:$0xe]
      %v1060 = vld [vmem:[%s198 + $0x9c] sm:$0xe]
      %v1061 = vld [vmem:[%s198 + $0xa8] sm:$0xe]
      %v1062 = vld [vmem:[%s198 + $0xb4] sm:$0xe]
      %vm1095 = vcmask 1042432
      %vm1096 = vcmask 1046532
      %vm1097 = vmor %vm1095, %vm1096
      %v1098 = vrot.slane %v1047, 5
      %v1099 = vrot.slane %v1098, 4
      %v1100 = vrot.slane %v200, 5
      %v1101 = vsel %vm1097, %v1099, %v1100
      %v1102 = vrot.slane %v1100, 4
      %v1103 = vrot.slane %v232, 5
      %v1104 = vsel %vm1097, %v1102, %v1103
      %v1105 = vrot.slane %v1048, 5
      %v1106 = vrot.slane %v1105, 4
      %v1107 = vrot.slane %v202, 5
      %v1108 = vsel %vm1097, %v1106, %v1107
      %v1109 = vrot.slane %v1107, 4
      %v1110 = vrot.slane %v233, 5
      %v1111 = vsel %vm1097, %v1109, %v1110
      %v1112 = vrot.slane %v1049, 5
      %v1113 = vrot.slane %v1112, 4
      %v1114 = vrot.slane %v204, 5
      %v1115 = vsel %vm1097, %v1113, %v1114
      %v1116 = vrot.slane %v1114, 4
      %v1117 = vrot.slane %v234, 5
      %v1118 = vsel %vm1097, %v1116, %v1117
      %v1119 = vrot.slane %v1050, 5
      %v1120 = vrot.slane %v1119, 4
      %v1121 = vrot.slane %v206, 5
      %v1122 = vsel %vm1097, %v1120, %v1121
      %v1123 = vrot.slane %v1121, 4
      %v1124 = vrot.slane %v235, 5
      %v1125 = vsel %vm1097, %v1123, %v1124
      %v1126 = vrot.slane %v1051, 5
      %v1127 = vrot.slane %v1126, 4
      %v1128 = vrot.slane %v208, 5
      %v1129 = vsel %vm1097, %v1127, %v1128
      %v1130 = vrot.slane %v1128, 4
      %v1131 = vrot.slane %v236, 5
      %v1132 = vsel %vm1097, %v1130, %v1131
      %v1133 = vrot.slane %v1052, 5
      %v1134 = vrot.slane %v1133, 4
      %v1135 = vrot.slane %v210, 5
      %v1136 = vsel %vm1097, %v1134, %v1135
      %v1137 = vrot.slane %v1135, 4
      %v1138 = vrot.slane %v237, 5
      %v1139 = vsel %vm1097, %v1137, %v1138
      %v1140 = vrot.slane %v1053, 5
      %v1141 = vrot.slane %v1140, 4
      %v1142 = vrot.slane %v212, 5
      %v1143 = vsel %vm1097, %v1141, %v1142
      %v1144 = vrot.slane %v1142, 4
      %v1145 = vrot.slane %v238, 5
      %v1146 = vsel %vm1097, %v1144, %v1145
      %v1147 = vrot.slane %v1054, 5
      %v1148 = vrot.slane %v1147, 4
      %v1149 = vrot.slane %v214, 5
      %v1150 = vsel %vm1097, %v1148, %v1149
      %v1151 = vrot.slane %v1149, 4
      %v1152 = vrot.slane %v239, 5
      %v1153 = vsel %vm1097, %v1151, %v1152
      %v1154 = vrot.slane %v1055, 5
      %v1155 = vrot.slane %v1154, 4
      %v1156 = vrot.slane %v216, 5
      %v1157 = vsel %vm1097, %v1155, %v1156
      %v1158 = vrot.slane %v1156, 4
      %v1159 = vrot.slane %v240, 5
      %v1160 = vsel %vm1097, %v1158, %v1159
      %v1161 = vrot.slane %v1056, 5
      %v1162 = vrot.slane %v1161, 4
      %v1163 = vrot.slane %v218, 5
      %v1164 = vsel %vm1097, %v1162, %v1163
      %v1165 = vrot.slane %v1163, 4
      %v1166 = vrot.slane %v241, 5
      %v1167 = vsel %vm1097, %v1165, %v1166
      %v1168 = vrot.slane %v1057, 5
      %v1169 = vrot.slane %v1168, 4
      %v1170 = vrot.slane %v220, 5
      %v1171 = vsel %vm1097, %v1169, %v1170
      %v1172 = vrot.slane %v1170, 4
      %v1173 = vrot.slane %v242, 5
      %v1174 = vsel %vm1097, %v1172, %v1173
      %v1175 = vrot.slane %v1058, 5
      %v1176 = vrot.slane %v1175, 4
      %v1177 = vrot.slane %v222, 5
      %v1178 = vsel %vm1097, %v1176, %v1177
      %v1179 = vrot.slane %v1177, 4
      %v1180 = vrot.slane %v243, 5
      %v1181 = vsel %vm1097, %v1179, %v1180
      %v1182 = vrot.slane %v1059, 5
      %v1183 = vrot.slane %v1182, 4
      %v1184 = vrot.slane %v224, 5
      %v1185 = vsel %vm1097, %v1183, %v1184
      %v1186 = vrot.slane %v1184, 4
      %v1187 = vrot.slane %v244, 5
      %v1188 = vsel %vm1097, %v1186, %v1187
      %v1189 = vrot.slane %v1060, 5
      %v1190 = vrot.slane %v1189, 4
      %v1191 = vrot.slane %v226, 5
      %v1192 = vsel %vm1097, %v1190, %v1191
      %v1193 = vrot.slane %v1191, 4
      %v1194 = vrot.slane %v245, 5
      %v1195 = vsel %vm1097, %v1193, %v1194
      %v1196 = vrot.slane %v1061, 5
      %v1197 = vrot.slane %v1196, 4
      %v1198 = vrot.slane %v228, 5
      %v1199 = vsel %vm1097, %v1197, %v1198
      %v1200 = vrot.slane %v1198, 4
      %v1201 = vrot.slane %v246, 5
      %v1202 = vsel %vm1097, %v1200, %v1201
      %v1203 = vrot.slane %v1062, 5
      %v1204 = vrot.slane %v1203, 4
      %v1205 = vrot.slane %v230, 5
      %v1206 = vsel %vm1097, %v1204, %v1205
      %v1207 = vrot.slane %v1205, 4
      %v1208 = vrot.slane %v247, 5
      %v1209 = vsel %vm1097, %v1207, %v1208
      %s1210 = scalar_lea.vmem %s1, 4
      %v1211 = vld [vmem:[%s1210] sm:$0x3]
      %v1212 = vunpack.c.l.b16 %v1101
      %v1213 = vunpack.c.l.b16 %v1104
      %v1214 = vunpack.c.l.b16 %v1108
      %v1215 = vunpack.c.l.b16 %v1111
      %v1216 = vunpack.c.l.b16 %v1115
      %v1217 = vunpack.c.l.b16 %v1118
      %v1218 = vunpack.c.l.b16 %v1122
      %v1219 = vunpack.c.l.b16 %v1125
      %v1220 = vunpack.c.l.b16 %v1129
      %v1221 = vunpack.c.l.b16 %v1132
      %v1222 = vunpack.c.l.b16 %v1136
      %v1223 = vunpack.c.l.b16 %v1139
      %v1224 = vunpack.c.l.b16 %v1143
      %v1225 = vunpack.c.l.b16 %v1146
      %v1226 = vunpack.c.l.b16 %v1150
      %v1227 = vunpack.c.l.b16 %v1153
      %v1228 = vunpack.c.l.b16 %v1157
      %v1229 = vunpack.c.l.b16 %v1160
      %v1230 = vunpack.c.l.b16 %v1164
      %v1231 = vunpack.c.l.b16 %v1167
      %v1232 = vunpack.c.l.b16 %v1171
      %v1233 = vunpack.c.l.b16 %v1174
      %v1234 = vunpack.c.l.b16 %v1178
      %v1235 = vunpack.c.l.b16 %v1181
      %v1236 = vunpack.c.l.b16 %v1185
      %v1237 = vunpack.c.l.b16 %v1188
      %v1238 = vunpack.c.l.b16 %v1192
      %v1239 = vunpack.c.l.b16 %v1195
      %v1240 = vunpack.c.l.b16 %v1199
      %v1241 = vunpack.c.l.b16 %v1202
      %v1242 = vunpack.c.l.b16 %v1206
      %v1243 = vunpack.c.l.b16 %v1209
      %v1244 = vpack.c.b16 %v1213, %v1212
      %v1245 = vpack.c.b16 %v1215, %v1214
      %v1246 = vpack.c.b16 %v1217, %v1216
      %v1247 = vpack.c.b16 %v1219, %v1218
      %v1248 = vpack.c.b16 %v1221, %v1220
      %v1249 = vpack.c.b16 %v1223, %v1222
      %v1250 = vpack.c.b16 %v1225, %v1224
      %v1251 = vpack.c.b16 %v1227, %v1226
      %v1252 = vpack.c.b16 %v1229, %v1228
      %v1253 = vpack.c.b16 %v1231, %v1230
      %v1254 = vpack.c.b16 %v1233, %v1232
      %v1255 = vpack.c.b16 %v1235, %v1234
      %v1256 = vpack.c.b16 %v1237, %v1236
      %v1257 = vpack.c.b16 %v1239, %v1238
      %v1258 = vpack.c.b16 %v1241, %v1240
      %v1259 = vpack.c.b16 %v1243, %v1242
      %v1261 = vsel %vm685, %v1244, 0
      %v1264 = vsel %vm685, %v1245, 0
      %v1267 = vsel %vm685, %v1246, 0
      %v1270 = vsel %vm685, %v1247, 0
      %v1273 = vsel %vm685, %v1248, 0
      %v1276 = vsel %vm685, %v1249, 0
      %v1279 = vsel %vm685, %v1250, 0
      %v1282 = vsel %vm685, %v1251, 0
      %v1285 = vsel %vm685, %v1252, 0
      %v1288 = vsel %vm685, %v1253, 0
      %v1291 = vsel %vm685, %v1254, 0
      %v1294 = vsel %vm685, %v1255, 0
      %v1297 = vsel %vm685, %v1256, 0
      %v1300 = vsel %vm685, %v1257, 0
      %v1303 = vsel %vm685, %v1258, 0
      %v1306 = vsel %vm685, %v1259, 0
      %v1309 = vsel %vm734, %v1211, 0
      %1311 = vmatpush.bf16.msra.mxu0 0
      %1312 = vmatpush.bf16.msra.mxu0 0
      %1313 = vmatpush.bf16.msra.mxu0 0
      %1314 = vmatpush.bf16.msra.mxu0 0
      %1315 = vmatpush.bf16.msra.mxu0 0
      %1316 = vmatpush.bf16.msra.mxu0 0
      %1317 = vmatpush.bf16.msra.mxu0 0
      %1318 = vmatpush.bf16.msra.mxu0 %v1309
      %1319 = vmatmul.bf16.gmra.mxu0 %v1261
      %v1320 = vpop.f32.mrf.mxu0
      %v1321 = vadd.f32 0.0, %v1320
      %v1322 = vpop.f32.mrf.mxu0
      %v1323 = vadd.f32 0.0, %v1322
      %1324 = vmatmul.bf16.gmra.mxu0 %v1264
      %v1325 = vpop.f32.mrf.mxu0
      %v1326 = vadd.f32 0.0, %v1325
      %v1327 = vpop.f32.mrf.mxu0
      %v1328 = vadd.f32 0.0, %v1327
      %1329 = vmatmul.bf16.gmra.mxu0 %v1267
      %v1330 = vpop.f32.mrf.mxu0
      %v1331 = vadd.f32 0.0, %v1330
      %v1332 = vpop.f32.mrf.mxu0
      %v1333 = vadd.f32 0.0, %v1332
      %1334 = vmatmul.bf16.gmra.mxu0 %v1270
      %v1335 = vpop.f32.mrf.mxu0
      %v1336 = vadd.f32 0.0, %v1335
      %v1337 = vpop.f32.mrf.mxu0
      %v1338 = vadd.f32 0.0, %v1337
      %1339 = vmatmul.bf16.gmra.mxu0 %v1273
      %v1340 = vpop.f32.mrf.mxu0
      %v1341 = vadd.f32 0.0, %v1340
      %v1342 = vpop.f32.mrf.mxu0
      %v1343 = vadd.f32 0.0, %v1342
      %1344 = vmatmul.bf16.gmra.mxu0 %v1276
      %v1345 = vpop.f32.mrf.mxu0
      %v1346 = vadd.f32 0.0, %v1345
      %v1347 = vpop.f32.mrf.mxu0
      %v1348 = vadd.f32 0.0, %v1347
      %1349 = vmatmul.bf16.gmra.mxu0 %v1279
      %v1350 = vpop.f32.mrf.mxu0
      %v1351 = vadd.f32 0.0, %v1350
      %v1352 = vpop.f32.mrf.mxu0
      %v1353 = vadd.f32 0.0, %v1352
      %1354 = vmatmul.bf16.gmra.mxu0 %v1282
      %v1355 = vpop.f32.mrf.mxu0
      %v1356 = vadd.f32 0.0, %v1355
      %v1357 = vpop.f32.mrf.mxu0
      %v1358 = vadd.f32 0.0, %v1357
      %1359 = vmatmul.bf16.gmra.mxu0 %v1285
      %v1360 = vpop.f32.mrf.mxu0
      %v1361 = vadd.f32 0.0, %v1360
      %v1362 = vpop.f32.mrf.mxu0
      %v1363 = vadd.f32 0.0, %v1362
      %1364 = vmatmul.bf16.gmra.mxu0 %v1288
      %v1365 = vpop.f32.mrf.mxu0
      %v1366 = vadd.f32 0.0, %v1365
      %v1367 = vpop.f32.mrf.mxu0
      %v1368 = vadd.f32 0.0, %v1367
      %1369 = vmatmul.bf16.gmra.mxu0 %v1291
      %v1370 = vpop.f32.mrf.mxu0
      %v1371 = vadd.f32 0.0, %v1370
      %v1372 = vpop.f32.mrf.mxu0
      %v1373 = vadd.f32 0.0, %v1372
      %1374 = vmatmul.bf16.gmra.mxu0 %v1294
      %v1375 = vpop.f32.mrf.mxu0
      %v1376 = vadd.f32 0.0, %v1375
      %v1377 = vpop.f32.mrf.mxu0
      %v1378 = vadd.f32 0.0, %v1377
      %1379 = vmatmul.bf16.gmra.mxu0 %v1297
      %v1380 = vpop.f32.mrf.mxu0
      %v1381 = vadd.f32 0.0, %v1380
      %v1382 = vpop.f32.mrf.mxu0
      %v1383 = vadd.f32 0.0, %v1382
      %1384 = vmatmul.bf16.gmra.mxu0 %v1300
      %v1385 = vpop.f32.mrf.mxu0
      %v1386 = vadd.f32 0.0, %v1385
      %v1387 = vpop.f32.mrf.mxu0
      %v1388 = vadd.f32 0.0, %v1387
      %1389 = vmatmul.bf16.gmra.mxu0 %v1303
      %v1390 = vpop.f32.mrf.mxu0
      %v1391 = vadd.f32 0.0, %v1390
      %v1392 = vpop.f32.mrf.mxu0
      %v1393 = vadd.f32 0.0, %v1392
      %1394 = vmatmul.bf16.gmra.mxu0 %v1306
      %v1395 = vpop.f32.mrf.mxu0
      %v1396 = vadd.f32 0.0, %v1395
      %v1397 = vpop.f32.mrf.mxu0
      %v1398 = vadd.f32 0.0, %v1397
      %1399 = vdwg.mxu0
      %v1400 = vadd.f32 %v968, %v1321
      %v1401 = vadd.f32 %v970, %v1323
      %v1402 = vadd.f32 %v973, %v1326
      %v1403 = vadd.f32 %v975, %v1328
      %v1404 = vadd.f32 %v978, %v1331
      %v1405 = vadd.f32 %v980, %v1333
      %v1406 = vadd.f32 %v983, %v1336
      %v1407 = vadd.f32 %v985, %v1338
      %v1408 = vadd.f32 %v988, %v1341
      %v1409 = vadd.f32 %v990, %v1343
      %v1410 = vadd.f32 %v993, %v1346
      %v1411 = vadd.f32 %v995, %v1348
      %v1412 = vadd.f32 %v998, %v1351
      %v1413 = vadd.f32 %v1000, %v1353
      %v1414 = vadd.f32 %v1003, %v1356
      %v1415 = vadd.f32 %v1005, %v1358
      %v1416 = vadd.f32 %v1008, %v1361
      %v1417 = vadd.f32 %v1010, %v1363
      %v1418 = vadd.f32 %v1013, %v1366
      %v1419 = vadd.f32 %v1015, %v1368
      %v1420 = vadd.f32 %v1018, %v1371
      %v1421 = vadd.f32 %v1020, %v1373
      %v1422 = vadd.f32 %v1023, %v1376
      %v1423 = vadd.f32 %v1025, %v1378
      %v1424 = vadd.f32 %v1028, %v1381
      %v1425 = vadd.f32 %v1030, %v1383
      %v1426 = vadd.f32 %v1033, %v1386
      %v1427 = vadd.f32 %v1035, %v1388
      %v1428 = vadd.f32 %v1038, %v1391
      %v1429 = vadd.f32 %v1040, %v1393
      %v1430 = vadd.f32 %v1043, %v1396
      %v1431 = vadd.f32 %v1045, %v1398
      %s1432 = sadd.s32 %s195, 1
      %s1433 = smul.u32 %s1432, 3
      %s1434 = smul.addr %s1433, 4
      %s1435 = scalar_lea.vmem %s183, %s1434
      %v1436 = vld [vmem:[%s1435] sm:$0xf]
      %v1437 = vld [vmem:[%s1435 + $0x4] sm:$0xf]
      %v1438 = vld [vmem:[%s1435 + $0xc] sm:$0xf]
      %v1439 = vld [vmem:[%s1435 + $0x10] sm:$0xf]
      %v1440 = vld [vmem:[%s1435 + $0x18] sm:$0xf]
      %v1441 = vld [vmem:[%s1435 + $0x1c] sm:$0xf]
      %v1442 = vld [vmem:[%s1435 + $0x24] sm:$0xf]
      %v1443 = vld [vmem:[%s1435 + $0x28] sm:$0xf]
      %v1444 = vld [vmem:[%s1435 + $0x30] sm:$0xf]
      %v1445 = vld [vmem:[%s1435 + $0x34] sm:$0xf]
      %v1446 = vld [vmem:[%s1435 + $0x3c] sm:$0xf]
      %v1447 = vld [vmem:[%s1435 + $0x40] sm:$0xf]
      %v1448 = vld [vmem:[%s1435 + $0x48] sm:$0xf]
      %v1449 = vld [vmem:[%s1435 + $0x4c] sm:$0xf]
      %v1450 = vld [vmem:[%s1435 + $0x54] sm:$0xf]
      %v1451 = vld [vmem:[%s1435 + $0x58] sm:$0xf]
      %v1452 = vld [vmem:[%s1435 + $0x60] sm:$0xf]
      %v1453 = vld [vmem:[%s1435 + $0x64] sm:$0xf]
      %v1454 = vld [vmem:[%s1435 + $0x6c] sm:$0xf]
      %v1455 = vld [vmem:[%s1435 + $0x70] sm:$0xf]
      %v1456 = vld [vmem:[%s1435 + $0x78] sm:$0xf]
      %v1457 = vld [vmem:[%s1435 + $0x7c] sm:$0xf]
      %v1458 = vld [vmem:[%s1435 + $0x84] sm:$0xf]
      %v1459 = vld [vmem:[%s1435 + $0x88] sm:$0xf]
      %v1460 = vld [vmem:[%s1435 + $0x90] sm:$0xf]
      %v1461 = vld [vmem:[%s1435 + $0x94] sm:$0xf]
      %v1462 = vld [vmem:[%s1435 + $0x9c] sm:$0xf]
      %v1463 = vld [vmem:[%s1435 + $0xa0] sm:$0xf]
      %v1464 = vld [vmem:[%s1435 + $0xa8] sm:$0xf]
      %v1465 = vld [vmem:[%s1435 + $0xac] sm:$0xf]
      %v1466 = vld [vmem:[%s1435 + $0xb4] sm:$0xf]
      %v1467 = vld [vmem:[%s1435 + $0xb8] sm:$0xf]
      %s1468 = scalar_lea.vmem %s1, 6
      %v1469 = vld [vmem:[%s1468] sm:$0x3]
      %v1502 = vunpack.c.l.b16 %v1436
      %v1503 = vunpack.c.l.b16 %v1437
      %v1504 = vunpack.c.l.b16 %v1438
      %v1505 = vunpack.c.l.b16 %v1439
      %v1506 = vunpack.c.l.b16 %v1440
      %v1507 = vunpack.c.l.b16 %v1441
      %v1508 = vunpack.c.l.b16 %v1442
      %v1509 = vunpack.c.l.b16 %v1443
      %v1510 = vunpack.c.l.b16 %v1444
      %v1511 = vunpack.c.l.b16 %v1445
      %v1512 = vunpack.c.l.b16 %v1446
      %v1513 = vunpack.c.l.b16 %v1447
      %v1514 = vunpack.c.l.b16 %v1448
      %v1515 = vunpack.c.l.b16 %v1449
      %v1516 = vunpack.c.l.b16 %v1450
      %v1517 = vunpack.c.l.b16 %v1451
      %v1518 = vunpack.c.l.b16 %v1452
      %v1519 = vunpack.c.l.b16 %v1453
      %v1520 = vunpack.c.l.b16 %v1454
      %v1521 = vunpack.c.l.b16 %v1455
      %v1522 = vunpack.c.l.b16 %v1456
      %v1523 = vunpack.c.l.b16 %v1457
      %v1524 = vunpack.c.l.b16 %v1458
      %v1525 = vunpack.c.l.b16 %v1459
      %v1526 = vunpack.c.l.b16 %v1460
      %v1527 = vunpack.c.l.b16 %v1461
      %v1528 = vunpack.c.l.b16 %v1462
      %v1529 = vunpack.c.l.b16 %v1463
      %v1530 = vunpack.c.l.b16 %v1464
      %v1531 = vunpack.c.l.b16 %v1465
      %v1532 = vunpack.c.l.b16 %v1466
      %v1533 = vunpack.c.l.b16 %v1467
      %v1534 = vpack.c.b16 %v1503, %v1502
      %v1535 = vpack.c.b16 %v1505, %v1504
      %v1536 = vpack.c.b16 %v1507, %v1506
      %v1537 = vpack.c.b16 %v1509, %v1508
      %v1538 = vpack.c.b16 %v1511, %v1510
      %v1539 = vpack.c.b16 %v1513, %v1512
      %v1540 = vpack.c.b16 %v1515, %v1514
      %v1541 = vpack.c.b16 %v1517, %v1516
      %v1542 = vpack.c.b16 %v1519, %v1518
      %v1543 = vpack.c.b16 %v1521, %v1520
      %v1544 = vpack.c.b16 %v1523, %v1522
      %v1545 = vpack.c.b16 %v1525, %v1524
      %v1546 = vpack.c.b16 %v1527, %v1526
      %v1547 = vpack.c.b16 %v1529, %v1528
      %v1548 = vpack.c.b16 %v1531, %v1530
      %v1549 = vpack.c.b16 %v1533, %v1532
      %v1551 = vsel %vm685, %v1534, 0
      %v1554 = vsel %vm685, %v1535, 0
      %v1557 = vsel %vm685, %v1536, 0
      %v1560 = vsel %vm685, %v1537, 0
      %v1563 = vsel %vm685, %v1538, 0
      %v1566 = vsel %vm685, %v1539, 0
      %v1569 = vsel %vm685, %v1540, 0
      %v1572 = vsel %vm685, %v1541, 0
      %v1575 = vsel %vm685, %v1542, 0
      %v1578 = vsel %vm685, %v1543, 0
      %v1581 = vsel %vm685, %v1544, 0
      %v1584 = vsel %vm685, %v1545, 0
      %v1587 = vsel %vm685, %v1546, 0
      %v1590 = vsel %vm685, %v1547, 0
      %v1593 = vsel %vm685, %v1548, 0
      %v1596 = vsel %vm685, %v1549, 0
      %v1599 = vsel %vm734, %v1469, 0
      %1601 = vmatpush.bf16.msra.mxu0 0
      %1602 = vmatpush.bf16.msra.mxu0 0
      %1603 = vmatpush.bf16.msra.mxu0 0
      %1604 = vmatpush.bf16.msra.mxu0 0
      %1605 = vmatpush.bf16.msra.mxu0 0
      %1606 = vmatpush.bf16.msra.mxu0 0
      %1607 = vmatpush.bf16.msra.mxu0 0
      %1608 = vmatpush.bf16.msra.mxu0 %v1599
      %1609 = vmatmul.bf16.gmra.mxu0 %v1551
      %v1610 = vpop.f32.mrf.mxu0
      %v1611 = vadd.f32 0.0, %v1610
      %v1612 = vpop.f32.mrf.mxu0
      %v1613 = vadd.f32 0.0, %v1612
      %1614 = vmatmul.bf16.gmra.mxu0 %v1554
      %v1615 = vpop.f32.mrf.mxu0
      %v1616 = vadd.f32 0.0, %v1615
      %v1617 = vpop.f32.mrf.mxu0
      %v1618 = vadd.f32 0.0, %v1617
      %1619 = vmatmul.bf16.gmra.mxu0 %v1557
      %v1620 = vpop.f32.mrf.mxu0
      %v1621 = vadd.f32 0.0, %v1620
      %v1622 = vpop.f32.mrf.mxu0
      %v1623 = vadd.f32 0.0, %v1622
      %1624 = vmatmul.bf16.gmra.mxu0 %v1560
      %v1625 = vpop.f32.mrf.mxu0
      %v1626 = vadd.f32 0.0, %v1625
      %v1627 = vpop.f32.mrf.mxu0
      %v1628 = vadd.f32 0.0, %v1627
      %1629 = vmatmul.bf16.gmra.mxu0 %v1563
      %v1630 = vpop.f32.mrf.mxu0
      %v1631 = vadd.f32 0.0, %v1630
      %v1632 = vpop.f32.mrf.mxu0
      %v1633 = vadd.f32 0.0, %v1632
      %1634 = vmatmul.bf16.gmra.mxu0 %v1566
      %v1635 = vpop.f32.mrf.mxu0
      %v1636 = vadd.f32 0.0, %v1635
      %v1637 = vpop.f32.mrf.mxu0
      %v1638 = vadd.f32 0.0, %v1637
      %1639 = vmatmul.bf16.gmra.mxu0 %v1569
      %v1640 = vpop.f32.mrf.mxu0
      %v1641 = vadd.f32 0.0, %v1640
      %v1642 = vpop.f32.mrf.mxu0
      %v1643 = vadd.f32 0.0, %v1642
      %1644 = vmatmul.bf16.gmra.mxu0 %v1572
      %v1645 = vpop.f32.mrf.mxu0
      %v1646 = vadd.f32 0.0, %v1645
      %v1647 = vpop.f32.mrf.mxu0
      %v1648 = vadd.f32 0.0, %v1647
      %1649 = vmatmul.bf16.gmra.mxu0 %v1575
      %v1650 = vpop.f32.mrf.mxu0
      %v1651 = vadd.f32 0.0, %v1650
      %v1652 = vpop.f32.mrf.mxu0
      %v1653 = vadd.f32 0.0, %v1652
      %1654 = vmatmul.bf16.gmra.mxu0 %v1578
      %v1655 = vpop.f32.mrf.mxu0
      %v1656 = vadd.f32 0.0, %v1655
      %v1657 = vpop.f32.mrf.mxu0
      %v1658 = vadd.f32 0.0, %v1657
      %1659 = vmatmul.bf16.gmra.mxu0 %v1581
      %v1660 = vpop.f32.mrf.mxu0
      %v1661 = vadd.f32 0.0, %v1660
      %v1662 = vpop.f32.mrf.mxu0
      %v1663 = vadd.f32 0.0, %v1662
      %1664 = vmatmul.bf16.gmra.mxu0 %v1584
      %v1665 = vpop.f32.mrf.mxu0
      %v1666 = vadd.f32 0.0, %v1665
      %v1667 = vpop.f32.mrf.mxu0
      %v1668 = vadd.f32 0.0, %v1667
      %1669 = vmatmul.bf16.gmra.mxu0 %v1587
      %v1670 = vpop.f32.mrf.mxu0
      %v1671 = vadd.f32 0.0, %v1670
      %v1672 = vpop.f32.mrf.mxu0
      %v1673 = vadd.f32 0.0, %v1672
      %1674 = vmatmul.bf16.gmra.mxu0 %v1590
      %v1675 = vpop.f32.mrf.mxu0
      %v1676 = vadd.f32 0.0, %v1675
      %v1677 = vpop.f32.mrf.mxu0
      %v1678 = vadd.f32 0.0, %v1677
      %1679 = vmatmul.bf16.gmra.mxu0 %v1593
      %v1680 = vpop.f32.mrf.mxu0
      %v1681 = vadd.f32 0.0, %v1680
      %v1682 = vpop.f32.mrf.mxu0
      %v1683 = vadd.f32 0.0, %v1682
      %1684 = vmatmul.bf16.gmra.mxu0 %v1596
      %v1685 = vpop.f32.mrf.mxu0
      %v1686 = vadd.f32 0.0, %v1685
      %v1687 = vpop.f32.mrf.mxu0
      %v1688 = vadd.f32 0.0, %v1687
      %1689 = vdwg.mxu0
      %v1690 = vadd.f32 %v1400, %v1611
      %v1691 = vadd.f32 %v1401, %v1613
      %v1692 = vadd.f32 %v1402, %v1616
      %v1693 = vadd.f32 %v1403, %v1618
      %v1694 = vadd.f32 %v1404, %v1621
      %v1695 = vadd.f32 %v1405, %v1623
      %v1696 = vadd.f32 %v1406, %v1626
      %v1697 = vadd.f32 %v1407, %v1628
      %v1698 = vadd.f32 %v1408, %v1631
      %v1699 = vadd.f32 %v1409, %v1633
      %v1700 = vadd.f32 %v1410, %v1636
      %v1701 = vadd.f32 %v1411, %v1638
      %v1702 = vadd.f32 %v1412, %v1641
      %v1703 = vadd.f32 %v1413, %v1643
      %v1704 = vadd.f32 %v1414, %v1646
      %v1705 = vadd.f32 %v1415, %v1648
      %v1706 = vadd.f32 %v1416, %v1651
      %v1707 = vadd.f32 %v1417, %v1653
      %v1708 = vadd.f32 %v1418, %v1656
      %v1709 = vadd.f32 %v1419, %v1658
      %v1710 = vadd.f32 %v1420, %v1661
      %v1711 = vadd.f32 %v1421, %v1663
      %v1712 = vadd.f32 %v1422, %v1666
      %v1713 = vadd.f32 %v1423, %v1668
      %v1714 = vadd.f32 %v1424, %v1671
      %v1715 = vadd.f32 %v1425, %v1673
      %v1716 = vadd.f32 %v1426, %v1676
      %v1717 = vadd.f32 %v1427, %v1678
      %v1718 = vadd.f32 %v1428, %v1681
      %v1719 = vadd.f32 %v1429, %v1683
      %v1720 = vadd.f32 %v1430, %v1686
      %v1721 = vadd.f32 %v1431, %v1688
      %v1722 = vld [vmem:[%s1435] sm:$0xf]
      %v1723 = vld [vmem:[%s1435 + $0x4] sm:$0xf]
      %v1724 = vld [vmem:[%s1435 + $0x8] sm:$0x1]
      %v1725 = vld [vmem:[%s1435 + $0xc] sm:$0xf]
      %v1726 = vld [vmem:[%s1435 + $0x10] sm:$0xf]
      %v1727 = vld [vmem:[%s1435 + $0x14] sm:$0x1]
      %v1728 = vld [vmem:[%s1435 + $0x18] sm:$0xf]
      %v1729 = vld [vmem:[%s1435 + $0x1c] sm:$0xf]
      %v1730 = vld [vmem:[%s1435 + $0x20] sm:$0x1]
      %v1731 = vld [vmem:[%s1435 + $0x24] sm:$0xf]
      %v1732 = vld [vmem:[%s1435 + $0x28] sm:$0xf]
      %v1733 = vld [vmem:[%s1435 + $0x2c] sm:$0x1]
      %v1734 = vld [vmem:[%s1435 + $0x30] sm:$0xf]
      %v1735 = vld [vmem:[%s1435 + $0x34] sm:$0xf]
      %v1736 = vld [vmem:[%s1435 + $0x38] sm:$0x1]
      %v1737 = vld [vmem:[%s1435 + $0x3c] sm:$0xf]
      %v1738 = vld [vmem:[%s1435 + $0x40] sm:$0xf]
      %v1739 = vld [vmem:[%s1435 + $0x44] sm:$0x1]
      %v1740 = vld [vmem:[%s1435 + $0x48] sm:$0xf]
      %v1741 = vld [vmem:[%s1435 + $0x4c] sm:$0xf]
      %v1742 = vld [vmem:[%s1435 + $0x50] sm:$0x1]
      %v1743 = vld [vmem:[%s1435 + $0x54] sm:$0xf]
      %v1744 = vld [vmem:[%s1435 + $0x58] sm:$0xf]
      %v1745 = vld [vmem:[%s1435 + $0x5c] sm:$0x1]
      %v1746 = vld [vmem:[%s1435 + $0x60] sm:$0xf]
      %v1747 = vld [vmem:[%s1435 + $0x64] sm:$0xf]
      %v1748 = vld [vmem:[%s1435 + $0x68] sm:$0x1]
      %v1749 = vld [vmem:[%s1435 + $0x6c] sm:$0xf]
      %v1750 = vld [vmem:[%s1435 + $0x70] sm:$0xf]
      %v1751 = vld [vmem:[%s1435 + $0x74] sm:$0x1]
      %v1752 = vld [vmem:[%s1435 + $0x78] sm:$0xf]
      %v1753 = vld [vmem:[%s1435 + $0x7c] sm:$0xf]
      %v1754 = vld [vmem:[%s1435 + $0x80] sm:$0x1]
      %v1755 = vld [vmem:[%s1435 + $0x84] sm:$0xf]
      %v1756 = vld [vmem:[%s1435 + $0x88] sm:$0xf]
      %v1757 = vld [vmem:[%s1435 + $0x8c] sm:$0x1]
      %v1758 = vld [vmem:[%s1435 + $0x90] sm:$0xf]
      %v1759 = vld [vmem:[%s1435 + $0x94] sm:$0xf]
      %v1760 = vld [vmem:[%s1435 + $0x98] sm:$0x1]
      %v1761 = vld [vmem:[%s1435 + $0x9c] sm:$0xf]
      %v1762 = vld [vmem:[%s1435 + $0xa0] sm:$0xf]
      %v1763 = vld [vmem:[%s1435 + $0xa4] sm:$0x1]
      %v1764 = vld [vmem:[%s1435 + $0xa8] sm:$0xf]
      %v1765 = vld [vmem:[%s1435 + $0xac] sm:$0xf]
      %v1766 = vld [vmem:[%s1435 + $0xb0] sm:$0x1]
      %v1767 = vld [vmem:[%s1435 + $0xb4] sm:$0xf]
      %v1768 = vld [vmem:[%s1435 + $0xb8] sm:$0xf]
      %v1769 = vld [vmem:[%s1435 + $0xbc] sm:$0x1]
      %v1771 = vshrl.u32 %v1722, 16
      %v1773 = vrot.slane %v1771, 4
      %v1774 = vshll.u32 %v1722, 16
      %v1776 = vrot.slane %v1774, 5
      %v1777 = vor.u32 %v1773, %v1776
      %v1778 = vrot.slane %v1777, 4
      %v1780 = vshll.u32 %v1723, 16
      %v1782 = vrot.slane %v1780, 5
      %v1783 = vsel %vm250, %v1778, %v1782
      %v1784 = vshrl.u32 %v1723, 16
      %v1786 = vrot.slane %v1784, 4
      %v1787 = vor.u32 %v1786, %v1782
      %v1788 = vrot.slane %v1787, 4
      %v1790 = vshll.u32 %v1724, 16
      %v1792 = vrot.slane %v1790, 5
      %v1793 = vsel %vm250, %v1788, %v1792
      %v1795 = vshrl.u32 %v1725, 16
      %v1797 = vrot.slane %v1795, 4
      %v1798 = vshll.u32 %v1725, 16
      %v1800 = vrot.slane %v1798, 5
      %v1801 = vor.u32 %v1797, %v1800
      %v1802 = vrot.slane %v1801, 4
      %v1804 = vshll.u32 %v1726, 16
      %v1806 = vrot.slane %v1804, 5
      %v1807 = vsel %vm250, %v1802, %v1806
      %v1808 = vshrl.u32 %v1726, 16
      %v1810 = vrot.slane %v1808, 4
      %v1811 = vor.u32 %v1810, %v1806
      %v1812 = vrot.slane %v1811, 4
      %v1814 = vshll.u32 %v1727, 16
      %v1816 = vrot.slane %v1814, 5
      %v1817 = vsel %vm250, %v1812, %v1816
      %v1819 = vshrl.u32 %v1728, 16
      %v1821 = vrot.slane %v1819, 4
      %v1822 = vshll.u32 %v1728, 16
      %v1824 = vrot.slane %v1822, 5
      %v1825 = vor.u32 %v1821, %v1824
      %v1826 = vrot.slane %v1825, 4
      %v1828 = vshll.u32 %v1729, 16
      %v1830 = vrot.slane %v1828, 5
      %v1831 = vsel %vm250, %v1826, %v1830
      %v1832 = vshrl.u32 %v1729, 16
      %v1834 = vrot.slane %v1832, 4
      %v1835 = vor.u32 %v1834, %v1830
      %v1836 = vrot.slane %v1835, 4
      %v1838 = vshll.u32 %v1730, 16
      %v1840 = vrot.slane %v1838, 5
      %v1841 = vsel %vm250, %v1836, %v1840
      %v1843 = vshrl.u32 %v1731, 16
      %v1845 = vrot.slane %v1843, 4
      %v1846 = vshll.u32 %v1731, 16
      %v1848 = vrot.slane %v1846, 5
      %v1849 = vor.u32 %v1845, %v1848
      %v1850 = vrot.slane %v1849, 4
      %v1852 = vshll.u32 %v1732, 16
      %v1854 = vrot.slane %v1852, 5
      %v1855 = vsel %vm250, %v1850, %v1854
      %v1856 = vshrl.u32 %v1732, 16
      %v1858 = vrot.slane %v1856, 4
      %v1859 = vor.u32 %v1858, %v1854
      %v1860 = vrot.slane %v1859, 4
      %v1862 = vshll.u32 %v1733, 16
      %v1864 = vrot.slane %v1862, 5
      %v1865 = vsel %vm250, %v1860, %v1864
      %v1867 = vshrl.u32 %v1734, 16
      %v1869 = vrot.slane %v1867, 4
      %v1870 = vshll.u32 %v1734, 16
      %v1872 = vrot.slane %v1870, 5
      %v1873 = vor.u32 %v1869, %v1872
      %v1874 = vrot.slane %v1873, 4
      %v1876 = vshll.u32 %v1735, 16
      %v1878 = vrot.slane %v1876, 5
      %v1879 = vsel %vm250, %v1874, %v1878
      %v1880 = vshrl.u32 %v1735, 16
      %v1882 = vrot.slane %v1880, 4
      %v1883 = vor.u32 %v1882, %v1878
      %v1884 = vrot.slane %v1883, 4
      %v1886 = vshll.u32 %v1736, 16
      %v1888 = vrot.slane %v1886, 5
      %v1889 = vsel %vm250, %v1884, %v1888
      %v1891 = vshrl.u32 %v1737, 16
      %v1893 = vrot.slane %v1891, 4
      %v1894 = vshll.u32 %v1737, 16
      %v1896 = vrot.slane %v1894, 5
      %v1897 = vor.u32 %v1893, %v1896
      %v1898 = vrot.slane %v1897, 4
      %v1900 = vshll.u32 %v1738, 16
      %v1902 = vrot.slane %v1900, 5
      %v1903 = vsel %vm250, %v1898, %v1902
      %v1904 = vshrl.u32 %v1738, 16
      %v1906 = vrot.slane %v1904, 4
      %v1907 = vor.u32 %v1906, %v1902
      %v1908 = vrot.slane %v1907, 4
      %v1910 = vshll.u32 %v1739, 16
      %v1912 = vrot.slane %v1910, 5
      %v1913 = vsel %vm250, %v1908, %v1912
      %v1915 = vshrl.u32 %v1740, 16
      %v1917 = vrot.slane %v1915, 4
      %v1918 = vshll.u32 %v1740, 16
      %v1920 = vrot.slane %v1918, 5
      %v1921 = vor.u32 %v1917, %v1920
      %v1922 = vrot.slane %v1921, 4
      %v1924 = vshll.u32 %v1741, 16
      %v1926 = vrot.slane %v1924, 5
      %v1927 = vsel %vm250, %v1922, %v1926
      %v1928 = vshrl.u32 %v1741, 16
      %v1930 = vrot.slane %v1928, 4
      %v1931 = vor.u32 %v1930, %v1926
      %v1932 = vrot.slane %v1931, 4
      %v1934 = vshll.u32 %v1742, 16
      %v1936 = vrot.slane %v1934, 5
      %v1937 = vsel %vm250, %v1932, %v1936
      %v1939 = vshrl.u32 %v1743, 16
      %v1941 = vrot.slane %v1939, 4
      %v1942 = vshll.u32 %v1743, 16
      %v1944 = vrot.slane %v1942, 5
      %v1945 = vor.u32 %v1941, %v1944
      %v1946 = vrot.slane %v1945, 4
      %v1948 = vshll.u32 %v1744, 16
      %v1950 = vrot.slane %v1948, 5
      %v1951 = vsel %vm250, %v1946, %v1950
      %v1952 = vshrl.u32 %v1744, 16
      %v1954 = vrot.slane %v1952, 4
      %v1955 = vor.u32 %v1954, %v1950
      %v1956 = vrot.slane %v1955, 4
      %v1958 = vshll.u32 %v1745, 16
      %v1960 = vrot.slane %v1958, 5
      %v1961 = vsel %vm250, %v1956, %v1960
      %v1963 = vshrl.u32 %v1746, 16
      %v1965 = vrot.slane %v1963, 4
      %v1966 = vshll.u32 %v1746, 16
      %v1968 = vrot.slane %v1966, 5
      %v1969 = vor.u32 %v1965, %v1968
      %v1970 = vrot.slane %v1969, 4
      %v1972 = vshll.u32 %v1747, 16
      %v1974 = vrot.slane %v1972, 5
      %v1975 = vsel %vm250, %v1970, %v1974
      %v1976 = vshrl.u32 %v1747, 16
      %v1978 = vrot.slane %v1976, 4
      %v1979 = vor.u32 %v1978, %v1974
      %v1980 = vrot.slane %v1979, 4
      %v1982 = vshll.u32 %v1748, 16
      %v1984 = vrot.slane %v1982, 5
      %v1985 = vsel %vm250, %v1980, %v1984
      %v1987 = vshrl.u32 %v1749, 16
      %v1989 = vrot.slane %v1987, 4
      %v1990 = vshll.u32 %v1749, 16
      %v1992 = vrot.slane %v1990, 5
      %v1993 = vor.u32 %v1989, %v1992
      %v1994 = vrot.slane %v1993, 4
      %v1996 = vshll.u32 %v1750, 16
      %v1998 = vrot.slane %v1996, 5
      %v1999 = vsel %vm250, %v1994, %v1998
      %v2000 = vshrl.u32 %v1750, 16
      %v2002 = vrot.slane %v2000, 4
      %v2003 = vor.u32 %v2002, %v1998
      %v2004 = vrot.slane %v2003, 4
      %v2006 = vshll.u32 %v1751, 16
      %v2008 = vrot.slane %v2006, 5
      %v2009 = vsel %vm250, %v2004, %v2008
      %v2011 = vshrl.u32 %v1752, 16
      %v2013 = vrot.slane %v2011, 4
      %v2014 = vshll.u32 %v1752, 16
      %v2016 = vrot.slane %v2014, 5
      %v2017 = vor.u32 %v2013, %v2016
      %v2018 = vrot.slane %v2017, 4
      %v2020 = vshll.u32 %v1753, 16
      %v2022 = vrot.slane %v2020, 5
      %v2023 = vsel %vm250, %v2018, %v2022
      %v2024 = vshrl.u32 %v1753, 16
      %v2026 = vrot.slane %v2024, 4
      %v2027 = vor.u32 %v2026, %v2022
      %v2028 = vrot.slane %v2027, 4
      %v2030 = vshll.u32 %v1754, 16
      %v2032 = vrot.slane %v2030, 5
      %v2033 = vsel %vm250, %v2028, %v2032
      %v2035 = vshrl.u32 %v1755, 16
      %v2037 = vrot.slane %v2035, 4
      %v2038 = vshll.u32 %v1755, 16
      %v2040 = vrot.slane %v2038, 5
      %v2041 = vor.u32 %v2037, %v2040
      %v2042 = vrot.slane %v2041, 4
      %v2044 = vshll.u32 %v1756, 16
      %v2046 = vrot.slane %v2044, 5
      %v2047 = vsel %vm250, %v2042, %v2046
      %v2048 = vshrl.u32 %v1756, 16
      %v2050 = vrot.slane %v2048, 4
      %v2051 = vor.u32 %v2050, %v2046
      %v2052 = vrot.slane %v2051, 4
      %v2054 = vshll.u32 %v1757, 16
      %v2056 = vrot.slane %v2054, 5
      %v2057 = vsel %vm250, %v2052, %v2056
      %v2059 = vshrl.u32 %v1758, 16
      %v2061 = vrot.slane %v2059, 4
      %v2062 = vshll.u32 %v1758, 16
      %v2064 = vrot.slane %v2062, 5
      %v2065 = vor.u32 %v2061, %v2064
      %v2066 = vrot.slane %v2065, 4
      %v2068 = vshll.u32 %v1759, 16
      %v2070 = vrot.slane %v2068, 5
      %v2071 = vsel %vm250, %v2066, %v2070
      %v2072 = vshrl.u32 %v1759, 16
      %v2074 = vrot.slane %v2072, 4
      %v2075 = vor.u32 %v2074, %v2070
      %v2076 = vrot.slane %v2075, 4
      %v2078 = vshll.u32 %v1760, 16
      %v2080 = vrot.slane %v2078, 5
      %v2081 = vsel %vm250, %v2076, %v2080
      %v2083 = vshrl.u32 %v1761, 16
      %v2085 = vrot.slane %v2083, 4
      %v2086 = vshll.u32 %v1761, 16
      %v2088 = vrot.slane %v2086, 5
      %v2089 = vor.u32 %v2085, %v2088
      %v2090 = vrot.slane %v2089, 4
      %v2092 = vshll.u32 %v1762, 16
      %v2094 = vrot.slane %v2092, 5
      %v2095 = vsel %vm250, %v2090, %v2094
      %v2096 = vshrl.u32 %v1762, 16
      %v2098 = vrot.slane %v2096, 4
      %v2099 = vor.u32 %v2098, %v2094
      %v2100 = vrot.slane %v2099, 4
      %v2102 = vshll.u32 %v1763, 16
      %v2104 = vrot.slane %v2102, 5
      %v2105 = vsel %vm250, %v2100, %v2104
      %v2107 = vshrl.u32 %v1764, 16
      %v2109 = vrot.slane %v2107, 4
      %v2110 = vshll.u32 %v1764, 16
      %v2112 = vrot.slane %v2110, 5
      %v2113 = vor.u32 %v2109, %v2112
      %v2114 = vrot.slane %v2113, 4
      %v2116 = vshll.u32 %v1765, 16
      %v2118 = vrot.slane %v2116, 5
      %v2119 = vsel %vm250, %v2114, %v2118
      %v2120 = vshrl.u32 %v1765, 16
      %v2122 = vrot.slane %v2120, 4
      %v2123 = vor.u32 %v2122, %v2118
      %v2124 = vrot.slane %v2123, 4
      %v2126 = vshll.u32 %v1766, 16
      %v2128 = vrot.slane %v2126, 5
      %v2129 = vsel %vm250, %v2124, %v2128
      %v2131 = vshrl.u32 %v1767, 16
      %v2133 = vrot.slane %v2131, 4
      %v2134 = vshll.u32 %v1767, 16
      %v2136 = vrot.slane %v2134, 5
      %v2137 = vor.u32 %v2133, %v2136
      %v2138 = vrot.slane %v2137, 4
      %v2140 = vshll.u32 %v1768, 16
      %v2142 = vrot.slane %v2140, 5
      %v2143 = vsel %vm250, %v2138, %v2142
      %v2144 = vshrl.u32 %v1768, 16
      %v2146 = vrot.slane %v2144, 4
      %v2147 = vor.u32 %v2146, %v2142
      %v2148 = vrot.slane %v2147, 4
      %v2150 = vshll.u32 %v1769, 16
      %v2152 = vrot.slane %v2150, 5
      %v2153 = vsel %vm250, %v2148, %v2152
      %s2154 = scalar_lea.vmem %s1, 8
      %v2155 = vld [vmem:[%s2154] sm:$0x3]
      %v2156 = vunpack.c.l.b16 %v1783
      %v2157 = vunpack.c.l.b16 %v1793
      %v2158 = vunpack.c.l.b16 %v1807
      %v2159 = vunpack.c.l.b16 %v1817
      %v2160 = vunpack.c.l.b16 %v1831
      %v2161 = vunpack.c.l.b16 %v1841
      %v2162 = vunpack.c.l.b16 %v1855
      %v2163 = vunpack.c.l.b16 %v1865
      %v2164 = vunpack.c.l.b16 %v1879
      %v2165 = vunpack.c.l.b16 %v1889
      %v2166 = vunpack.c.l.b16 %v1903
      %v2167 = vunpack.c.l.b16 %v1913
      %v2168 = vunpack.c.l.b16 %v1927
      %v2169 = vunpack.c.l.b16 %v1937
      %v2170 = vunpack.c.l.b16 %v1951
      %v2171 = vunpack.c.l.b16 %v1961
      %v2172 = vunpack.c.l.b16 %v1975
      %v2173 = vunpack.c.l.b16 %v1985
      %v2174 = vunpack.c.l.b16 %v1999
      %v2175 = vunpack.c.l.b16 %v2009
      %v2176 = vunpack.c.l.b16 %v2023
      %v2177 = vunpack.c.l.b16 %v2033
      %v2178 = vunpack.c.l.b16 %v2047
      %v2179 = vunpack.c.l.b16 %v2057
      %v2180 = vunpack.c.l.b16 %v2071
      %v2181 = vunpack.c.l.b16 %v2081
      %v2182 = vunpack.c.l.b16 %v2095
      %v2183 = vunpack.c.l.b16 %v2105
      %v2184 = vunpack.c.l.b16 %v2119
      %v2185 = vunpack.c.l.b16 %v2129
      %v2186 = vunpack.c.l.b16 %v2143
      %v2187 = vunpack.c.l.b16 %v2153
      %v2188 = vpack.c.b16 %v2157, %v2156
      %v2189 = vpack.c.b16 %v2159, %v2158
      %v2190 = vpack.c.b16 %v2161, %v2160
      %v2191 = vpack.c.b16 %v2163, %v2162
      %v2192 = vpack.c.b16 %v2165, %v2164
      %v2193 = vpack.c.b16 %v2167, %v2166
      %v2194 = vpack.c.b16 %v2169, %v2168
      %v2195 = vpack.c.b16 %v2171, %v2170
      %v2196 = vpack.c.b16 %v2173, %v2172
      %v2197 = vpack.c.b16 %v2175, %v2174
      %v2198 = vpack.c.b16 %v2177, %v2176
      %v2199 = vpack.c.b16 %v2179, %v2178
      %v2200 = vpack.c.b16 %v2181, %v2180
      %v2201 = vpack.c.b16 %v2183, %v2182
      %v2202 = vpack.c.b16 %v2185, %v2184
      %v2203 = vpack.c.b16 %v2187, %v2186
      %v2205 = vsel %vm685, %v2188, 0
      %v2208 = vsel %vm685, %v2189, 0
      %v2211 = vsel %vm685, %v2190, 0
      %v2214 = vsel %vm685, %v2191, 0
      %v2217 = vsel %vm685, %v2192, 0
      %v2220 = vsel %vm685, %v2193, 0
      %v2223 = vsel %vm685, %v2194, 0
      %v2226 = vsel %vm685, %v2195, 0
      %v2229 = vsel %vm685, %v2196, 0
      %v2232 = vsel %vm685, %v2197, 0
      %v2235 = vsel %vm685, %v2198, 0
      %v2238 = vsel %vm685, %v2199, 0
      %v2241 = vsel %vm685, %v2200, 0
      %v2244 = vsel %vm685, %v2201, 0
      %v2247 = vsel %vm685, %v2202, 0
      %v2250 = vsel %vm685, %v2203, 0
      %v2253 = vsel %vm734, %v2155, 0
      %2255 = vmatpush.bf16.msra.mxu0 0
      %2256 = vmatpush.bf16.msra.mxu0 0
      %2257 = vmatpush.bf16.msra.mxu0 0
      %2258 = vmatpush.bf16.msra.mxu0 0
      %2259 = vmatpush.bf16.msra.mxu0 0
      %2260 = vmatpush.bf16.msra.mxu0 0
      %2261 = vmatpush.bf16.msra.mxu0 0
      %2262 = vmatpush.bf16.msra.mxu0 %v2253
      %2263 = vmatmul.bf16.gmra.mxu0 %v2205
      %v2264 = vpop.f32.mrf.mxu0
      %v2265 = vadd.f32 0.0, %v2264
      %v2266 = vpop.f32.mrf.mxu0
      %v2267 = vadd.f32 0.0, %v2266
      %2268 = vmatmul.bf16.gmra.mxu0 %v2208
      %v2269 = vpop.f32.mrf.mxu0
      %v2270 = vadd.f32 0.0, %v2269
      %v2271 = vpop.f32.mrf.mxu0
      %v2272 = vadd.f32 0.0, %v2271
      %2273 = vmatmul.bf16.gmra.mxu0 %v2211
      %v2274 = vpop.f32.mrf.mxu0
      %v2275 = vadd.f32 0.0, %v2274
      %v2276 = vpop.f32.mrf.mxu0
      %v2277 = vadd.f32 0.0, %v2276
      %2278 = vmatmul.bf16.gmra.mxu0 %v2214
      %v2279 = vpop.f32.mrf.mxu0
      %v2280 = vadd.f32 0.0, %v2279
      %v2281 = vpop.f32.mrf.mxu0
      %v2282 = vadd.f32 0.0, %v2281
      %2283 = vmatmul.bf16.gmra.mxu0 %v2217
      %v2284 = vpop.f32.mrf.mxu0
      %v2285 = vadd.f32 0.0, %v2284
      %v2286 = vpop.f32.mrf.mxu0
      %v2287 = vadd.f32 0.0, %v2286
      %2288 = vmatmul.bf16.gmra.mxu0 %v2220
      %v2289 = vpop.f32.mrf.mxu0
      %v2290 = vadd.f32 0.0, %v2289
      %v2291 = vpop.f32.mrf.mxu0
      %v2292 = vadd.f32 0.0, %v2291
      %2293 = vmatmul.bf16.gmra.mxu0 %v2223
      %v2294 = vpop.f32.mrf.mxu0
      %v2295 = vadd.f32 0.0, %v2294
      %v2296 = vpop.f32.mrf.mxu0
      %v2297 = vadd.f32 0.0, %v2296
      %2298 = vmatmul.bf16.gmra.mxu0 %v2226
      %v2299 = vpop.f32.mrf.mxu0
      %v2300 = vadd.f32 0.0, %v2299
      %v2301 = vpop.f32.mrf.mxu0
      %v2302 = vadd.f32 0.0, %v2301
      %2303 = vmatmul.bf16.gmra.mxu0 %v2229
      %v2304 = vpop.f32.mrf.mxu0
      %v2305 = vadd.f32 0.0, %v2304
      %v2306 = vpop.f32.mrf.mxu0
      %v2307 = vadd.f32 0.0, %v2306
      %2308 = vmatmul.bf16.gmra.mxu0 %v2232
      %v2309 = vpop.f32.mrf.mxu0
      %v2310 = vadd.f32 0.0, %v2309
      %v2311 = vpop.f32.mrf.mxu0
      %v2312 = vadd.f32 0.0, %v2311
      %2313 = vmatmul.bf16.gmra.mxu0 %v2235
      %v2314 = vpop.f32.mrf.mxu0
      %v2315 = vadd.f32 0.0, %v2314
      %v2316 = vpop.f32.mrf.mxu0
      %v2317 = vadd.f32 0.0, %v2316
      %2318 = vmatmul.bf16.gmra.mxu0 %v2238
      %v2319 = vpop.f32.mrf.mxu0
      %v2320 = vadd.f32 0.0, %v2319
      %v2321 = vpop.f32.mrf.mxu0
      %v2322 = vadd.f32 0.0, %v2321
      %2323 = vmatmul.bf16.gmra.mxu0 %v2241
      %v2324 = vpop.f32.mrf.mxu0
      %v2325 = vadd.f32 0.0, %v2324
      %v2326 = vpop.f32.mrf.mxu0
      %v2327 = vadd.f32 0.0, %v2326
      %2328 = vmatmul.bf16.gmra.mxu0 %v2244
      %v2329 = vpop.f32.mrf.mxu0
      %v2330 = vadd.f32 0.0, %v2329
      %v2331 = vpop.f32.mrf.mxu0
      %v2332 = vadd.f32 0.0, %v2331
      %2333 = vmatmul.bf16.gmra.mxu0 %v2247
      %v2334 = vpop.f32.mrf.mxu0
      %v2335 = vadd.f32 0.0, %v2334
      %v2336 = vpop.f32.mrf.mxu0
      %v2337 = vadd.f32 0.0, %v2336
      %2338 = vmatmul.bf16.gmra.mxu0 %v2250
      %v2339 = vpop.f32.mrf.mxu0
      %v2340 = vadd.f32 0.0, %v2339
      %v2341 = vpop.f32.mrf.mxu0
      %v2342 = vadd.f32 0.0, %v2341
      %2343 = vdwg.mxu0
      %v2344 = vadd.f32 %v1690, %v2265
      %v2345 = vadd.f32 %v1691, %v2267
      %v2346 = vadd.f32 %v1692, %v2270
      %v2347 = vadd.f32 %v1693, %v2272
      %v2348 = vadd.f32 %v1694, %v2275
      %v2349 = vadd.f32 %v1695, %v2277
      %v2350 = vadd.f32 %v1696, %v2280
      %v2351 = vadd.f32 %v1697, %v2282
      %v2352 = vadd.f32 %v1698, %v2285
      %v2353 = vadd.f32 %v1699, %v2287
      %v2354 = vadd.f32 %v1700, %v2290
      %v2355 = vadd.f32 %v1701, %v2292
      %v2356 = vadd.f32 %v1702, %v2295
      %v2357 = vadd.f32 %v1703, %v2297
      %v2358 = vadd.f32 %v1704, %v2300
      %v2359 = vadd.f32 %v1705, %v2302
      %v2360 = vadd.f32 %v1706, %v2305
      %v2361 = vadd.f32 %v1707, %v2307
      %v2362 = vadd.f32 %v1708, %v2310
      %v2363 = vadd.f32 %v1709, %v2312
      %v2364 = vadd.f32 %v1710, %v2315
      %v2365 = vadd.f32 %v1711, %v2317
      %v2366 = vadd.f32 %v1712, %v2320
      %v2367 = vadd.f32 %v1713, %v2322
      %v2368 = vadd.f32 %v1714, %v2325
      %v2369 = vadd.f32 %v1715, %v2327
      %v2370 = vadd.f32 %v1716, %v2330
      %v2371 = vadd.f32 %v1717, %v2332
      %v2372 = vadd.f32 %v1718, %v2335
      %v2373 = vadd.f32 %v1719, %v2337
      %v2374 = vadd.f32 %v1720, %v2340
      %v2375 = vadd.f32 %v1721, %v2342
      %v2376 = vld [vmem:[%s1435] sm:$0xe]
      %v2377 = vld [vmem:[%s1435 + $0xc] sm:$0xe]
      %v2378 = vld [vmem:[%s1435 + $0x18] sm:$0xe]
      %v2379 = vld [vmem:[%s1435 + $0x24] sm:$0xe]
      %v2380 = vld [vmem:[%s1435 + $0x30] sm:$0xe]
      %v2381 = vld [vmem:[%s1435 + $0x3c] sm:$0xe]
      %v2382 = vld [vmem:[%s1435 + $0x48] sm:$0xe]
      %v2383 = vld [vmem:[%s1435 + $0x54] sm:$0xe]
      %v2384 = vld [vmem:[%s1435 + $0x60] sm:$0xe]
      %v2385 = vld [vmem:[%s1435 + $0x6c] sm:$0xe]
      %v2386 = vld [vmem:[%s1435 + $0x78] sm:$0xe]
      %v2387 = vld [vmem:[%s1435 + $0x84] sm:$0xe]
      %v2388 = vld [vmem:[%s1435 + $0x90] sm:$0xe]
      %v2389 = vld [vmem:[%s1435 + $0x9c] sm:$0xe]
      %v2390 = vld [vmem:[%s1435 + $0xa8] sm:$0xe]
      %v2391 = vld [vmem:[%s1435 + $0xb4] sm:$0xe]
      %v2440 = vrot.slane %v2376, 5
      %v2441 = vrot.slane %v2440, 4
      %v2442 = vrot.slane %v1723, 5
      %v2443 = vsel %vm1097, %v2441, %v2442
      %v2444 = vrot.slane %v2442, 4
      %v2445 = vrot.slane %v1724, 5
      %v2446 = vsel %vm1097, %v2444, %v2445
      %v2447 = vrot.slane %v2377, 5
      %v2448 = vrot.slane %v2447, 4
      %v2449 = vrot.slane %v1726, 5
      %v2450 = vsel %vm1097, %v2448, %v2449
      %v2451 = vrot.slane %v2449, 4
      %v2452 = vrot.slane %v1727, 5
      %v2453 = vsel %vm1097, %v2451, %v2452
      %v2454 = vrot.slane %v2378, 5
      %v2455 = vrot.slane %v2454, 4
      %v2456 = vrot.slane %v1729, 5
      %v2457 = vsel %vm1097, %v2455, %v2456
      %v2458 = vrot.slane %v2456, 4
      %v2459 = vrot.slane %v1730, 5
      %v2460 = vsel %vm1097, %v2458, %v2459
      %v2461 = vrot.slane %v2379, 5
      %v2462 = vrot.slane %v2461, 4
      %v2463 = vrot.slane %v1732, 5
      %v2464 = vsel %vm1097, %v2462, %v2463
      %v2465 = vrot.slane %v2463, 4
      %v2466 = vrot.slane %v1733, 5
      %v2467 = vsel %vm1097, %v2465, %v2466
      %v2468 = vrot.slane %v2380, 5
      %v2469 = vrot.slane %v2468, 4
      %v2470 = vrot.slane %v1735, 5
      %v2471 = vsel %vm1097, %v2469, %v2470
      %v2472 = vrot.slane %v2470, 4
      %v2473 = vrot.slane %v1736, 5
      %v2474 = vsel %vm1097, %v2472, %v2473
      %v2475 = vrot.slane %v2381, 5
      %v2476 = vrot.slane %v2475, 4
      %v2477 = vrot.slane %v1738, 5
      %v2478 = vsel %vm1097, %v2476, %v2477
      %v2479 = vrot.slane %v2477, 4
      %v2480 = vrot.slane %v1739, 5
      %v2481 = vsel %vm1097, %v2479, %v2480
      %v2482 = vrot.slane %v2382, 5
      %v2483 = vrot.slane %v2482, 4
      %v2484 = vrot.slane %v1741, 5
      %v2485 = vsel %vm1097, %v2483, %v2484
      %v2486 = vrot.slane %v2484, 4
      %v2487 = vrot.slane %v1742, 5
      %v2488 = vsel %vm1097, %v2486, %v2487
      %v2489 = vrot.slane %v2383, 5
      %v2490 = vrot.slane %v2489, 4
      %v2491 = vrot.slane %v1744, 5
      %v2492 = vsel %vm1097, %v2490, %v2491
      %v2493 = vrot.slane %v2491, 4
      %v2494 = vrot.slane %v1745, 5
      %v2495 = vsel %vm1097, %v2493, %v2494
      %v2496 = vrot.slane %v2384, 5
      %v2497 = vrot.slane %v2496, 4
      %v2498 = vrot.slane %v1747, 5
      %v2499 = vsel %vm1097, %v2497, %v2498
      %v2500 = vrot.slane %v2498, 4
      %v2501 = vrot.slane %v1748, 5
      %v2502 = vsel %vm1097, %v2500, %v2501
      %v2503 = vrot.slane %v2385, 5
      %v2504 = vrot.slane %v2503, 4
      %v2505 = vrot.slane %v1750, 5
      %v2506 = vsel %vm1097, %v2504, %v2505
      %v2507 = vrot.slane %v2505, 4
      %v2508 = vrot.slane %v1751, 5
      %v2509 = vsel %vm1097, %v2507, %v2508
      %v2510 = vrot.slane %v2386, 5
      %v2511 = vrot.slane %v2510, 4
      %v2512 = vrot.slane %v1753, 5
      %v2513 = vsel %vm1097, %v2511, %v2512
      %v2514 = vrot.slane %v2512, 4
      %v2515 = vrot.slane %v1754, 5
      %v2516 = vsel %vm1097, %v2514, %v2515
      %v2517 = vrot.slane %v2387, 5
      %v2518 = vrot.slane %v2517, 4
      %v2519 = vrot.slane %v1756, 5
      %v2520 = vsel %vm1097, %v2518, %v2519
      %v2521 = vrot.slane %v2519, 4
      %v2522 = vrot.slane %v1757, 5
      %v2523 = vsel %vm1097, %v2521, %v2522
      %v2524 = vrot.slane %v2388, 5
      %v2525 = vrot.slane %v2524, 4
      %v2526 = vrot.slane %v1759, 5
      %v2527 = vsel %vm1097, %v2525, %v2526
      %v2528 = vrot.slane %v2526, 4
      %v2529 = vrot.slane %v1760, 5
      %v2530 = vsel %vm1097, %v2528, %v2529
      %v2531 = vrot.slane %v2389, 5
      %v2532 = vrot.slane %v2531, 4
      %v2533 = vrot.slane %v1762, 5
      %v2534 = vsel %vm1097, %v2532, %v2533
      %v2535 = vrot.slane %v2533, 4
      %v2536 = vrot.slane %v1763, 5
      %v2537 = vsel %vm1097, %v2535, %v2536
      %v2538 = vrot.slane %v2390, 5
      %v2539 = vrot.slane %v2538, 4
      %v2540 = vrot.slane %v1765, 5
      %v2541 = vsel %vm1097, %v2539, %v2540
      %v2542 = vrot.slane %v2540, 4
      %v2543 = vrot.slane %v1766, 5
      %v2544 = vsel %vm1097, %v2542, %v2543
      %v2545 = vrot.slane %v2391, 5
      %v2546 = vrot.slane %v2545, 4
      %v2547 = vrot.slane %v1768, 5
      %v2548 = vsel %vm1097, %v2546, %v2547
      %v2549 = vrot.slane %v2547, 4
      %v2550 = vrot.slane %v1769, 5
      %v2551 = vsel %vm1097, %v2549, %v2550
      %s2552 = scalar_lea.vmem %s1, 10
      %v2553 = vld [vmem:[%s2552] sm:$0x3]
      %v2554 = vunpack.c.l.b16 %v2443
      %v2555 = vunpack.c.l.b16 %v2446
      %v2556 = vunpack.c.l.b16 %v2450
      %v2557 = vunpack.c.l.b16 %v2453
      %v2558 = vunpack.c.l.b16 %v2457
      %v2559 = vunpack.c.l.b16 %v2460
      %v2560 = vunpack.c.l.b16 %v2464
      %v2561 = vunpack.c.l.b16 %v2467
      %v2562 = vunpack.c.l.b16 %v2471
      %v2563 = vunpack.c.l.b16 %v2474
      %v2564 = vunpack.c.l.b16 %v2478
      %v2565 = vunpack.c.l.b16 %v2481
      %v2566 = vunpack.c.l.b16 %v2485
      %v2567 = vunpack.c.l.b16 %v2488
      %v2568 = vunpack.c.l.b16 %v2492
      %v2569 = vunpack.c.l.b16 %v2495
      %v2570 = vunpack.c.l.b16 %v2499
      %v2571 = vunpack.c.l.b16 %v2502
      %v2572 = vunpack.c.l.b16 %v2506
      %v2573 = vunpack.c.l.b16 %v2509
      %v2574 = vunpack.c.l.b16 %v2513
      %v2575 = vunpack.c.l.b16 %v2516
      %v2576 = vunpack.c.l.b16 %v2520
      %v2577 = vunpack.c.l.b16 %v2523
      %v2578 = vunpack.c.l.b16 %v2527
      %v2579 = vunpack.c.l.b16 %v2530
      %v2580 = vunpack.c.l.b16 %v2534
      %v2581 = vunpack.c.l.b16 %v2537
      %v2582 = vunpack.c.l.b16 %v2541
      %v2583 = vunpack.c.l.b16 %v2544
      %v2584 = vunpack.c.l.b16 %v2548
      %v2585 = vunpack.c.l.b16 %v2551
      %v2586 = vpack.c.b16 %v2555, %v2554
      %v2587 = vpack.c.b16 %v2557, %v2556
      %v2588 = vpack.c.b16 %v2559, %v2558
      %v2589 = vpack.c.b16 %v2561, %v2560
      %v2590 = vpack.c.b16 %v2563, %v2562
      %v2591 = vpack.c.b16 %v2565, %v2564
      %v2592 = vpack.c.b16 %v2567, %v2566
      %v2593 = vpack.c.b16 %v2569, %v2568
      %v2594 = vpack.c.b16 %v2571, %v2570
      %v2595 = vpack.c.b16 %v2573, %v2572
      %v2596 = vpack.c.b16 %v2575, %v2574
      %v2597 = vpack.c.b16 %v2577, %v2576
      %v2598 = vpack.c.b16 %v2579, %v2578
      %v2599 = vpack.c.b16 %v2581, %v2580
      %v2600 = vpack.c.b16 %v2583, %v2582
      %v2601 = vpack.c.b16 %v2585, %v2584
      %v2603 = vsel %vm685, %v2586, 0
      %v2606 = vsel %vm685, %v2587, 0
      %v2609 = vsel %vm685, %v2588, 0
      %v2612 = vsel %vm685, %v2589, 0
      %v2615 = vsel %vm685, %v2590, 0
      %v2618 = vsel %vm685, %v2591, 0
      %v2621 = vsel %vm685, %v2592, 0
      %v2624 = vsel %vm685, %v2593, 0
      %v2627 = vsel %vm685, %v2594, 0
      %v2630 = vsel %vm685, %v2595, 0
      %v2633 = vsel %vm685, %v2596, 0
      %v2636 = vsel %vm685, %v2597, 0
      %v2639 = vsel %vm685, %v2598, 0
      %v2642 = vsel %vm685, %v2599, 0
      %v2645 = vsel %vm685, %v2600, 0
      %v2648 = vsel %vm685, %v2601, 0
      %v2651 = vsel %vm734, %v2553, 0
      %2653 = vmatpush.bf16.msra.mxu0 0
      %2654 = vmatpush.bf16.msra.mxu0 0
      %2655 = vmatpush.bf16.msra.mxu0 0
      %2656 = vmatpush.bf16.msra.mxu0 0
      %2657 = vmatpush.bf16.msra.mxu0 0
      %2658 = vmatpush.bf16.msra.mxu0 0
      %2659 = vmatpush.bf16.msra.mxu0 0
      %2660 = vmatpush.bf16.msra.mxu0 %v2651
      %2661 = vmatmul.bf16.gmra.mxu0 %v2603
      %v2662 = vpop.f32.mrf.mxu0
      %v2663 = vadd.f32 0.0, %v2662
      %v2664 = vpop.f32.mrf.mxu0
      %v2665 = vadd.f32 0.0, %v2664
      %2666 = vmatmul.bf16.gmra.mxu0 %v2606
      %v2667 = vpop.f32.mrf.mxu0
      %v2668 = vadd.f32 0.0, %v2667
      %v2669 = vpop.f32.mrf.mxu0
      %v2670 = vadd.f32 0.0, %v2669
      %2671 = vmatmul.bf16.gmra.mxu0 %v2609
      %v2672 = vpop.f32.mrf.mxu0
      %v2673 = vadd.f32 0.0, %v2672
      %v2674 = vpop.f32.mrf.mxu0
      %v2675 = vadd.f32 0.0, %v2674
      %2676 = vmatmul.bf16.gmra.mxu0 %v2612
      %v2677 = vpop.f32.mrf.mxu0
      %v2678 = vadd.f32 0.0, %v2677
      %v2679 = vpop.f32.mrf.mxu0
      %v2680 = vadd.f32 0.0, %v2679
      %2681 = vmatmul.bf16.gmra.mxu0 %v2615
      %v2682 = vpop.f32.mrf.mxu0
      %v2683 = vadd.f32 0.0, %v2682
      %v2684 = vpop.f32.mrf.mxu0
      %v2685 = vadd.f32 0.0, %v2684
      %2686 = vmatmul.bf16.gmra.mxu0 %v2618
      %v2687 = vpop.f32.mrf.mxu0
      %v2688 = vadd.f32 0.0, %v2687
      %v2689 = vpop.f32.mrf.mxu0
      %v2690 = vadd.f32 0.0, %v2689
      %2691 = vmatmul.bf16.gmra.mxu0 %v2621
      %v2692 = vpop.f32.mrf.mxu0
      %v2693 = vadd.f32 0.0, %v2692
      %v2694 = vpop.f32.mrf.mxu0
      %v2695 = vadd.f32 0.0, %v2694
      %2696 = vmatmul.bf16.gmra.mxu0 %v2624
      %v2697 = vpop.f32.mrf.mxu0
      %v2698 = vadd.f32 0.0, %v2697
      %v2699 = vpop.f32.mrf.mxu0
      %v2700 = vadd.f32 0.0, %v2699
      %2701 = vmatmul.bf16.gmra.mxu0 %v2627
      %v2702 = vpop.f32.mrf.mxu0
      %v2703 = vadd.f32 0.0, %v2702
      %v2704 = vpop.f32.mrf.mxu0
      %v2705 = vadd.f32 0.0, %v2704
      %2706 = vmatmul.bf16.gmra.mxu0 %v2630
      %v2707 = vpop.f32.mrf.mxu0
      %v2708 = vadd.f32 0.0, %v2707
      %v2709 = vpop.f32.mrf.mxu0
      %v2710 = vadd.f32 0.0, %v2709
      %2711 = vmatmul.bf16.gmra.mxu0 %v2633
      %v2712 = vpop.f32.mrf.mxu0
      %v2713 = vadd.f32 0.0, %v2712
      %v2714 = vpop.f32.mrf.mxu0
      %v2715 = vadd.f32 0.0, %v2714
      %2716 = vmatmul.bf16.gmra.mxu0 %v2636
      %v2717 = vpop.f32.mrf.mxu0
      %v2718 = vadd.f32 0.0, %v2717
      %v2719 = vpop.f32.mrf.mxu0
      %v2720 = vadd.f32 0.0, %v2719
      %2721 = vmatmul.bf16.gmra.mxu0 %v2639
      %v2722 = vpop.f32.mrf.mxu0
      %v2723 = vadd.f32 0.0, %v2722
      %v2724 = vpop.f32.mrf.mxu0
      %v2725 = vadd.f32 0.0, %v2724
      %2726 = vmatmul.bf16.gmra.mxu0 %v2642
      %v2727 = vpop.f32.mrf.mxu0
      %v2728 = vadd.f32 0.0, %v2727
      %v2729 = vpop.f32.mrf.mxu0
      %v2730 = vadd.f32 0.0, %v2729
      %2731 = vmatmul.bf16.gmra.mxu0 %v2645
      %v2732 = vpop.f32.mrf.mxu0
      %v2733 = vadd.f32 0.0, %v2732
      %v2734 = vpop.f32.mrf.mxu0
      %v2735 = vadd.f32 0.0, %v2734
      %2736 = vmatmul.bf16.gmra.mxu0 %v2648
      %v2737 = vpop.f32.mrf.mxu0
      %v2738 = vadd.f32 0.0, %v2737
      %v2739 = vpop.f32.mrf.mxu0
      %v2740 = vadd.f32 0.0, %v2739
      %2741 = vdwg.mxu0
      %v2742 = vadd.f32 %v2344, %v2663
      %v2743 = vadd.f32 %v2345, %v2665
      %v2744 = vadd.f32 %v2346, %v2668
      %v2745 = vadd.f32 %v2347, %v2670
      %v2746 = vadd.f32 %v2348, %v2673
      %v2747 = vadd.f32 %v2349, %v2675
      %v2748 = vadd.f32 %v2350, %v2678
      %v2749 = vadd.f32 %v2351, %v2680
      %v2750 = vadd.f32 %v2352, %v2683
      %v2751 = vadd.f32 %v2353, %v2685
      %v2752 = vadd.f32 %v2354, %v2688
      %v2753 = vadd.f32 %v2355, %v2690
      %v2754 = vadd.f32 %v2356, %v2693
      %v2755 = vadd.f32 %v2357, %v2695
      %v2756 = vadd.f32 %v2358, %v2698
      %v2757 = vadd.f32 %v2359, %v2700
      %v2758 = vadd.f32 %v2360, %v2703
      %v2759 = vadd.f32 %v2361, %v2705
      %v2760 = vadd.f32 %v2362, %v2708
      %v2761 = vadd.f32 %v2363, %v2710
      %v2762 = vadd.f32 %v2364, %v2713
      %v2763 = vadd.f32 %v2365, %v2715
      %v2764 = vadd.f32 %v2366, %v2718
      %v2765 = vadd.f32 %v2367, %v2720
      %v2766 = vadd.f32 %v2368, %v2723
      %v2767 = vadd.f32 %v2369, %v2725
      %v2768 = vadd.f32 %v2370, %v2728
      %v2769 = vadd.f32 %v2371, %v2730
      %v2770 = vadd.f32 %v2372, %v2733
      %v2771 = vadd.f32 %v2373, %v2735
      %v2772 = vadd.f32 %v2374, %v2738
      %v2773 = vadd.f32 %v2375, %v2740
      %s2774 = sadd.s32 %s195, 2
      %s2775 = smul.u32 %s2774, 3
      %s2776 = smul.addr %s2775, 4
      %s2777 = scalar_lea.vmem %s183, %s2776
      %v2778 = vld [vmem:[%s2777] sm:$0xf]
      %v2779 = vld [vmem:[%s2777 + $0x4] sm:$0xf]
      %v2780 = vld [vmem:[%s2777 + $0xc] sm:$0xf]
      %v2781 = vld [vmem:[%s2777 + $0x10] sm:$0xf]
      %v2782 = vld [vmem:[%s2777 + $0x18] sm:$0xf]
      %v2783 = vld [vmem:[%s2777 + $0x1c] sm:$0xf]
      %v2784 = vld [vmem:[%s2777 + $0x24] sm:$0xf]
      %v2785 = vld [vmem:[%s2777 + $0x28] sm:$0xf]
      %v2786 = vld [vmem:[%s2777 + $0x30] sm:$0xf]
      %v2787 = vld [vmem:[%s2777 + $0x34] sm:$0xf]
      %v2788 = vld [vmem:[%s2777 + $0x3c] sm:$0xf]
      %v2789 = vld [vmem:[%s2777 + $0x40] sm:$0xf]
      %v2790 = vld [vmem:[%s2777 + $0x48] sm:$0xf]
      %v2791 = vld [vmem:[%s2777 + $0x4c] sm:$0xf]
      %v2792 = vld [vmem:[%s2777 + $0x54] sm:$0xf]
      %v2793 = vld [vmem:[%s2777 + $0x58] sm:$0xf]
      %v2794 = vld [vmem:[%s2777 + $0x60] sm:$0xf]
      %v2795 = vld [vmem:[%s2777 + $0x64] sm:$0xf]
      %v2796 = vld [vmem:[%s2777 + $0x6c] sm:$0xf]
      %v2797 = vld [vmem:[%s2777 + $0x70] sm:$0xf]
      %v2798 = vld [vmem:[%s2777 + $0x78] sm:$0xf]
      %v2799 = vld [vmem:[%s2777 + $0x7c] sm:$0xf]
      %v2800 = vld [vmem:[%s2777 + $0x84] sm:$0xf]
      %v2801 = vld [vmem:[%s2777 + $0x88] sm:$0xf]
      %v2802 = vld [vmem:[%s2777 + $0x90] sm:$0xf]
      %v2803 = vld [vmem:[%s2777 + $0x94] sm:$0xf]
      %v2804 = vld [vmem:[%s2777 + $0x9c] sm:$0xf]
      %v2805 = vld [vmem:[%s2777 + $0xa0] sm:$0xf]
      %v2806 = vld [vmem:[%s2777 + $0xa8] sm:$0xf]
      %v2807 = vld [vmem:[%s2777 + $0xac] sm:$0xf]
      %v2808 = vld [vmem:[%s2777 + $0xb4] sm:$0xf]
      %v2809 = vld [vmem:[%s2777 + $0xb8] sm:$0xf]
      %s2810 = scalar_lea.vmem %s1, 12
      %v2811 = vld [vmem:[%s2810] sm:$0x3]
      %v2844 = vunpack.c.l.b16 %v2778
      %v2845 = vunpack.c.l.b16 %v2779
      %v2846 = vunpack.c.l.b16 %v2780
      %v2847 = vunpack.c.l.b16 %v2781
      %v2848 = vunpack.c.l.b16 %v2782
      %v2849 = vunpack.c.l.b16 %v2783
      %v2850 = vunpack.c.l.b16 %v2784
      %v2851 = vunpack.c.l.b16 %v2785
      %v2852 = vunpack.c.l.b16 %v2786
      %v2853 = vunpack.c.l.b16 %v2787
      %v2854 = vunpack.c.l.b16 %v2788
      %v2855 = vunpack.c.l.b16 %v2789
      %v2856 = vunpack.c.l.b16 %v2790
      %v2857 = vunpack.c.l.b16 %v2791
      %v2858 = vunpack.c.l.b16 %v2792
      %v2859 = vunpack.c.l.b16 %v2793
      %v2860 = vunpack.c.l.b16 %v2794
      %v2861 = vunpack.c.l.b16 %v2795
      %v2862 = vunpack.c.l.b16 %v2796
      %v2863 = vunpack.c.l.b16 %v2797
      %v2864 = vunpack.c.l.b16 %v2798
      %v2865 = vunpack.c.l.b16 %v2799
      %v2866 = vunpack.c.l.b16 %v2800
      %v2867 = vunpack.c.l.b16 %v2801
      %v2868 = vunpack.c.l.b16 %v2802
      %v2869 = vunpack.c.l.b16 %v2803
      %v2870 = vunpack.c.l.b16 %v2804
      %v2871 = vunpack.c.l.b16 %v2805
      %v2872 = vunpack.c.l.b16 %v2806
      %v2873 = vunpack.c.l.b16 %v2807
      %v2874 = vunpack.c.l.b16 %v2808
      %v2875 = vunpack.c.l.b16 %v2809
      %v2876 = vpack.c.b16 %v2845, %v2844
      %v2877 = vpack.c.b16 %v2847, %v2846
      %v2878 = vpack.c.b16 %v2849, %v2848
      %v2879 = vpack.c.b16 %v2851, %v2850
      %v2880 = vpack.c.b16 %v2853, %v2852
      %v2881 = vpack.c.b16 %v2855, %v2854
      %v2882 = vpack.c.b16 %v2857, %v2856
      %v2883 = vpack.c.b16 %v2859, %v2858
      %v2884 = vpack.c.b16 %v2861, %v2860
      %v2885 = vpack.c.b16 %v2863, %v2862
      %v2886 = vpack.c.b16 %v2865, %v2864
      %v2887 = vpack.c.b16 %v2867, %v2866
      %v2888 = vpack.c.b16 %v2869, %v2868
      %v2889 = vpack.c.b16 %v2871, %v2870
      %v2890 = vpack.c.b16 %v2873, %v2872
      %v2891 = vpack.c.b16 %v2875, %v2874
      %v2893 = vsel %vm685, %v2876, 0
      %v2896 = vsel %vm685, %v2877, 0
      %v2899 = vsel %vm685, %v2878, 0
      %v2902 = vsel %vm685, %v2879, 0
      %v2905 = vsel %vm685, %v2880, 0
      %v2908 = vsel %vm685, %v2881, 0
      %v2911 = vsel %vm685, %v2882, 0
      %v2914 = vsel %vm685, %v2883, 0
      %v2917 = vsel %vm685, %v2884, 0
      %v2920 = vsel %vm685, %v2885, 0
      %v2923 = vsel %vm685, %v2886, 0
      %v2926 = vsel %vm685, %v2887, 0
      %v2929 = vsel %vm685, %v2888, 0
      %v2932 = vsel %vm685, %v2889, 0
      %v2935 = vsel %vm685, %v2890, 0
      %v2938 = vsel %vm685, %v2891, 0
      %v2941 = vsel %vm734, %v2811, 0
      %2943 = vmatpush.bf16.msra.mxu0 0
      %2944 = vmatpush.bf16.msra.mxu0 0
      %2945 = vmatpush.bf16.msra.mxu0 0
      %2946 = vmatpush.bf16.msra.mxu0 0
      %2947 = vmatpush.bf16.msra.mxu0 0
      %2948 = vmatpush.bf16.msra.mxu0 0
      %2949 = vmatpush.bf16.msra.mxu0 0
      %2950 = vmatpush.bf16.msra.mxu0 %v2941
      %2951 = vmatmul.bf16.gmra.mxu0 %v2893
      %v2952 = vpop.f32.mrf.mxu0
      %v2953 = vadd.f32 0.0, %v2952
      %v2954 = vpop.f32.mrf.mxu0
      %v2955 = vadd.f32 0.0, %v2954
      %2956 = vmatmul.bf16.gmra.mxu0 %v2896
      %v2957 = vpop.f32.mrf.mxu0
      %v2958 = vadd.f32 0.0, %v2957
      %v2959 = vpop.f32.mrf.mxu0
      %v2960 = vadd.f32 0.0, %v2959
      %2961 = vmatmul.bf16.gmra.mxu0 %v2899
      %v2962 = vpop.f32.mrf.mxu0
      %v2963 = vadd.f32 0.0, %v2962
      %v2964 = vpop.f32.mrf.mxu0
      %v2965 = vadd.f32 0.0, %v2964
      %2966 = vmatmul.bf16.gmra.mxu0 %v2902
      %v2967 = vpop.f32.mrf.mxu0
      %v2968 = vadd.f32 0.0, %v2967
      %v2969 = vpop.f32.mrf.mxu0
      %v2970 = vadd.f32 0.0, %v2969
      %2971 = vmatmul.bf16.gmra.mxu0 %v2905
      %v2972 = vpop.f32.mrf.mxu0
      %v2973 = vadd.f32 0.0, %v2972
      %v2974 = vpop.f32.mrf.mxu0
      %v2975 = vadd.f32 0.0, %v2974
      %2976 = vmatmul.bf16.gmra.mxu0 %v2908
      %v2977 = vpop.f32.mrf.mxu0
      %v2978 = vadd.f32 0.0, %v2977
      %v2979 = vpop.f32.mrf.mxu0
      %v2980 = vadd.f32 0.0, %v2979
      %2981 = vmatmul.bf16.gmra.mxu0 %v2911
      %v2982 = vpop.f32.mrf.mxu0
      %v2983 = vadd.f32 0.0, %v2982
      %v2984 = vpop.f32.mrf.mxu0
      %v2985 = vadd.f32 0.0, %v2984
      %2986 = vmatmul.bf16.gmra.mxu0 %v2914
      %v2987 = vpop.f32.mrf.mxu0
      %v2988 = vadd.f32 0.0, %v2987
      %v2989 = vpop.f32.mrf.mxu0
      %v2990 = vadd.f32 0.0, %v2989
      %2991 = vmatmul.bf16.gmra.mxu0 %v2917
      %v2992 = vpop.f32.mrf.mxu0
      %v2993 = vadd.f32 0.0, %v2992
      %v2994 = vpop.f32.mrf.mxu0
      %v2995 = vadd.f32 0.0, %v2994
      %2996 = vmatmul.bf16.gmra.mxu0 %v2920
      %v2997 = vpop.f32.mrf.mxu0
      %v2998 = vadd.f32 0.0, %v2997
      %v2999 = vpop.f32.mrf.mxu0
      %v3000 = vadd.f32 0.0, %v2999
      %3001 = vmatmul.bf16.gmra.mxu0 %v2923
      %v3002 = vpop.f32.mrf.mxu0
      %v3003 = vadd.f32 0.0, %v3002
      %v3004 = vpop.f32.mrf.mxu0
      %v3005 = vadd.f32 0.0, %v3004
      %3006 = vmatmul.bf16.gmra.mxu0 %v2926
      %v3007 = vpop.f32.mrf.mxu0
      %v3008 = vadd.f32 0.0, %v3007
      %v3009 = vpop.f32.mrf.mxu0
      %v3010 = vadd.f32 0.0, %v3009
      %3011 = vmatmul.bf16.gmra.mxu0 %v2929
      %v3012 = vpop.f32.mrf.mxu0
      %v3013 = vadd.f32 0.0, %v3012
      %v3014 = vpop.f32.mrf.mxu0
      %v3015 = vadd.f32 0.0, %v3014
      %3016 = vmatmul.bf16.gmra.mxu0 %v2932
      %v3017 = vpop.f32.mrf.mxu0
      %v3018 = vadd.f32 0.0, %v3017
      %v3019 = vpop.f32.mrf.mxu0
      %v3020 = vadd.f32 0.0, %v3019
      %3021 = vmatmul.bf16.gmra.mxu0 %v2935
      %v3022 = vpop.f32.mrf.mxu0
      %v3023 = vadd.f32 0.0, %v3022
      %v3024 = vpop.f32.mrf.mxu0
      %v3025 = vadd.f32 0.0, %v3024
      %3026 = vmatmul.bf16.gmra.mxu0 %v2938
      %v3027 = vpop.f32.mrf.mxu0
      %v3028 = vadd.f32 0.0, %v3027
      %v3029 = vpop.f32.mrf.mxu0
      %v3030 = vadd.f32 0.0, %v3029
      %3031 = vdwg.mxu0
      %v3032 = vadd.f32 %v2742, %v2953
      %v3033 = vadd.f32 %v2743, %v2955
      %v3034 = vadd.f32 %v2744, %v2958
      %v3035 = vadd.f32 %v2745, %v2960
      %v3036 = vadd.f32 %v2746, %v2963
      %v3037 = vadd.f32 %v2747, %v2965
      %v3038 = vadd.f32 %v2748, %v2968
      %v3039 = vadd.f32 %v2749, %v2970
      %v3040 = vadd.f32 %v2750, %v2973
      %v3041 = vadd.f32 %v2751, %v2975
      %v3042 = vadd.f32 %v2752, %v2978
      %v3043 = vadd.f32 %v2753, %v2980
      %v3044 = vadd.f32 %v2754, %v2983
      %v3045 = vadd.f32 %v2755, %v2985
      %v3046 = vadd.f32 %v2756, %v2988
      %v3047 = vadd.f32 %v2757, %v2990
      %v3048 = vadd.f32 %v2758, %v2993
      %v3049 = vadd.f32 %v2759, %v2995
      %v3050 = vadd.f32 %v2760, %v2998
      %v3051 = vadd.f32 %v2761, %v3000
      %v3052 = vadd.f32 %v2762, %v3003
      %v3053 = vadd.f32 %v2763, %v3005
      %v3054 = vadd.f32 %v2764, %v3008
      %v3055 = vadd.f32 %v2765, %v3010
      %v3056 = vadd.f32 %v2766, %v3013
      %v3057 = vadd.f32 %v2767, %v3015
      %v3058 = vadd.f32 %v2768, %v3018
      %v3059 = vadd.f32 %v2769, %v3020
      %v3060 = vadd.f32 %v2770, %v3023
      %v3061 = vadd.f32 %v2771, %v3025
      %v3062 = vadd.f32 %v2772, %v3028
      %v3063 = vadd.f32 %v2773, %v3030
      %v3064 = vld [vmem:[%s2777] sm:$0xf]
      %v3065 = vld [vmem:[%s2777 + $0x4] sm:$0xf]
      %v3066 = vld [vmem:[%s2777 + $0x8] sm:$0x1]
      %v3067 = vld [vmem:[%s2777 + $0xc] sm:$0xf]
      %v3068 = vld [vmem:[%s2777 + $0x10] sm:$0xf]
      %v3069 = vld [vmem:[%s2777 + $0x14] sm:$0x1]
      %v3070 = vld [vmem:[%s2777 + $0x18] sm:$0xf]
      %v3071 = vld [vmem:[%s2777 + $0x1c] sm:$0xf]
      %v3072 = vld [vmem:[%s2777 + $0x20] sm:$0x1]
      %v3073 = vld [vmem:[%s2777 + $0x24] sm:$0xf]
      %v3074 = vld [vmem:[%s2777 + $0x28] sm:$0xf]
      %v3075 = vld [vmem:[%s2777 + $0x2c] sm:$0x1]
      %v3076 = vld [vmem:[%s2777 + $0x30] sm:$0xf]
      %v3077 = vld [vmem:[%s2777 + $0x34] sm:$0xf]
      %v3078 = vld [vmem:[%s2777 + $0x38] sm:$0x1]
      %v3079 = vld [vmem:[%s2777 + $0x3c] sm:$0xf]
      %v3080 = vld [vmem:[%s2777 + $0x40] sm:$0xf]
      %v3081 = vld [vmem:[%s2777 + $0x44] sm:$0x1]
      %v3082 = vld [vmem:[%s2777 + $0x48] sm:$0xf]
      %v3083 = vld [vmem:[%s2777 + $0x4c] sm:$0xf]
      %v3084 = vld [vmem:[%s2777 + $0x50] sm:$0x1]
      %v3085 = vld [vmem:[%s2777 + $0x54] sm:$0xf]
      %v3086 = vld [vmem:[%s2777 + $0x58] sm:$0xf]
      %v3087 = vld [vmem:[%s2777 + $0x5c] sm:$0x1]
      %v3088 = vld [vmem:[%s2777 + $0x60] sm:$0xf]
      %v3089 = vld [vmem:[%s2777 + $0x64] sm:$0xf]
      %v3090 = vld [vmem:[%s2777 + $0x68] sm:$0x1]
      %v3091 = vld [vmem:[%s2777 + $0x6c] sm:$0xf]
      %v3092 = vld [vmem:[%s2777 + $0x70] sm:$0xf]
      %v3093 = vld [vmem:[%s2777 + $0x74] sm:$0x1]
      %v3094 = vld [vmem:[%s2777 + $0x78] sm:$0xf]
      %v3095 = vld [vmem:[%s2777 + $0x7c] sm:$0xf]
      %v3096 = vld [vmem:[%s2777 + $0x80] sm:$0x1]
      %v3097 = vld [vmem:[%s2777 + $0x84] sm:$0xf]
      %v3098 = vld [vmem:[%s2777 + $0x88] sm:$0xf]
      %v3099 = vld [vmem:[%s2777 + $0x8c] sm:$0x1]
      %v3100 = vld [vmem:[%s2777 + $0x90] sm:$0xf]
      %v3101 = vld [vmem:[%s2777 + $0x94] sm:$0xf]
      %v3102 = vld [vmem:[%s2777 + $0x98] sm:$0x1]
      %v3103 = vld [vmem:[%s2777 + $0x9c] sm:$0xf]
      %v3104 = vld [vmem:[%s2777 + $0xa0] sm:$0xf]
      %v3105 = vld [vmem:[%s2777 + $0xa4] sm:$0x1]
      %v3106 = vld [vmem:[%s2777 + $0xa8] sm:$0xf]
      %v3107 = vld [vmem:[%s2777 + $0xac] sm:$0xf]
      %v3108 = vld [vmem:[%s2777 + $0xb0] sm:$0x1]
      %v3109 = vld [vmem:[%s2777 + $0xb4] sm:$0xf]
      %v3110 = vld [vmem:[%s2777 + $0xb8] sm:$0xf]
      %v3111 = vld [vmem:[%s2777 + $0xbc] sm:$0x1]
      %v3113 = vshrl.u32 %v3064, 16
      %v3115 = vrot.slane %v3113, 4
      %v3116 = vshll.u32 %v3064, 16
      %v3118 = vrot.slane %v3116, 5
      %v3119 = vor.u32 %v3115, %v3118
      %v3120 = vrot.slane %v3119, 4
      %v3122 = vshll.u32 %v3065, 16
      %v3124 = vrot.slane %v3122, 5
      %v3125 = vsel %vm250, %v3120, %v3124
      %v3126 = vshrl.u32 %v3065, 16
      %v3128 = vrot.slane %v3126, 4
      %v3129 = vor.u32 %v3128, %v3124
      %v3130 = vrot.slane %v3129, 4
      %v3132 = vshll.u32 %v3066, 16
      %v3134 = vrot.slane %v3132, 5
      %v3135 = vsel %vm250, %v3130, %v3134
      %v3137 = vshrl.u32 %v3067, 16
      %v3139 = vrot.slane %v3137, 4
      %v3140 = vshll.u32 %v3067, 16
      %v3142 = vrot.slane %v3140, 5
      %v3143 = vor.u32 %v3139, %v3142
      %v3144 = vrot.slane %v3143, 4
      %v3146 = vshll.u32 %v3068, 16
      %v3148 = vrot.slane %v3146, 5
      %v3149 = vsel %vm250, %v3144, %v3148
      %v3150 = vshrl.u32 %v3068, 16
      %v3152 = vrot.slane %v3150, 4
      %v3153 = vor.u32 %v3152, %v3148
      %v3154 = vrot.slane %v3153, 4
      %v3156 = vshll.u32 %v3069, 16
      %v3158 = vrot.slane %v3156, 5
      %v3159 = vsel %vm250, %v3154, %v3158
      %v3161 = vshrl.u32 %v3070, 16
      %v3163 = vrot.slane %v3161, 4
      %v3164 = vshll.u32 %v3070, 16
      %v3166 = vrot.slane %v3164, 5
      %v3167 = vor.u32 %v3163, %v3166
      %v3168 = vrot.slane %v3167, 4
      %v3170 = vshll.u32 %v3071, 16
      %v3172 = vrot.slane %v3170, 5
      %v3173 = vsel %vm250, %v3168, %v3172
      %v3174 = vshrl.u32 %v3071, 16
      %v3176 = vrot.slane %v3174, 4
      %v3177 = vor.u32 %v3176, %v3172
      %v3178 = vrot.slane %v3177, 4
      %v3180 = vshll.u32 %v3072, 16
      %v3182 = vrot.slane %v3180, 5
      %v3183 = vsel %vm250, %v3178, %v3182
      %v3185 = vshrl.u32 %v3073, 16
      %v3187 = vrot.slane %v3185, 4
      %v3188 = vshll.u32 %v3073, 16
      %v3190 = vrot.slane %v3188, 5
      %v3191 = vor.u32 %v3187, %v3190
      %v3192 = vrot.slane %v3191, 4
      %v3194 = vshll.u32 %v3074, 16
      %v3196 = vrot.slane %v3194, 5
      %v3197 = vsel %vm250, %v3192, %v3196
      %v3198 = vshrl.u32 %v3074, 16
      %v3200 = vrot.slane %v3198, 4
      %v3201 = vor.u32 %v3200, %v3196
      %v3202 = vrot.slane %v3201, 4
      %v3204 = vshll.u32 %v3075, 16
      %v3206 = vrot.slane %v3204, 5
      %v3207 = vsel %vm250, %v3202, %v3206
      %v3209 = vshrl.u32 %v3076, 16
      %v3211 = vrot.slane %v3209, 4
      %v3212 = vshll.u32 %v3076, 16
      %v3214 = vrot.slane %v3212, 5
      %v3215 = vor.u32 %v3211, %v3214
      %v3216 = vrot.slane %v3215, 4
      %v3218 = vshll.u32 %v3077, 16
      %v3220 = vrot.slane %v3218, 5
      %v3221 = vsel %vm250, %v3216, %v3220
      %v3222 = vshrl.u32 %v3077, 16
      %v3224 = vrot.slane %v3222, 4
      %v3225 = vor.u32 %v3224, %v3220
      %v3226 = vrot.slane %v3225, 4
      %v3228 = vshll.u32 %v3078, 16
      %v3230 = vrot.slane %v3228, 5
      %v3231 = vsel %vm250, %v3226, %v3230
      %v3233 = vshrl.u32 %v3079, 16
      %v3235 = vrot.slane %v3233, 4
      %v3236 = vshll.u32 %v3079, 16
      %v3238 = vrot.slane %v3236, 5
      %v3239 = vor.u32 %v3235, %v3238
      %v3240 = vrot.slane %v3239, 4
      %v3242 = vshll.u32 %v3080, 16
      %v3244 = vrot.slane %v3242, 5
      %v3245 = vsel %vm250, %v3240, %v3244
      %v3246 = vshrl.u32 %v3080, 16
      %v3248 = vrot.slane %v3246, 4
      %v3249 = vor.u32 %v3248, %v3244
      %v3250 = vrot.slane %v3249, 4
      %v3252 = vshll.u32 %v3081, 16
      %v3254 = vrot.slane %v3252, 5
      %v3255 = vsel %vm250, %v3250, %v3254
      %v3257 = vshrl.u32 %v3082, 16
      %v3259 = vrot.slane %v3257, 4
      %v3260 = vshll.u32 %v3082, 16
      %v3262 = vrot.slane %v3260, 5
      %v3263 = vor.u32 %v3259, %v3262
      %v3264 = vrot.slane %v3263, 4
      %v3266 = vshll.u32 %v3083, 16
      %v3268 = vrot.slane %v3266, 5
      %v3269 = vsel %vm250, %v3264, %v3268
      %v3270 = vshrl.u32 %v3083, 16
      %v3272 = vrot.slane %v3270, 4
      %v3273 = vor.u32 %v3272, %v3268
      %v3274 = vrot.slane %v3273, 4
      %v3276 = vshll.u32 %v3084, 16
      %v3278 = vrot.slane %v3276, 5
      %v3279 = vsel %vm250, %v3274, %v3278
      %v3281 = vshrl.u32 %v3085, 16
      %v3283 = vrot.slane %v3281, 4
      %v3284 = vshll.u32 %v3085, 16
      %v3286 = vrot.slane %v3284, 5
      %v3287 = vor.u32 %v3283, %v3286
      %v3288 = vrot.slane %v3287, 4
      %v3290 = vshll.u32 %v3086, 16
      %v3292 = vrot.slane %v3290, 5
      %v3293 = vsel %vm250, %v3288, %v3292
      %v3294 = vshrl.u32 %v3086, 16
      %v3296 = vrot.slane %v3294, 4
      %v3297 = vor.u32 %v3296, %v3292
      %v3298 = vrot.slane %v3297, 4
      %v3300 = vshll.u32 %v3087, 16
      %v3302 = vrot.slane %v3300, 5
      %v3303 = vsel %vm250, %v3298, %v3302
      %v3305 = vshrl.u32 %v3088, 16
      %v3307 = vrot.slane %v3305, 4
      %v3308 = vshll.u32 %v3088, 16
      %v3310 = vrot.slane %v3308, 5
      %v3311 = vor.u32 %v3307, %v3310
      %v3312 = vrot.slane %v3311, 4
      %v3314 = vshll.u32 %v3089, 16
      %v3316 = vrot.slane %v3314, 5
      %v3317 = vsel %vm250, %v3312, %v3316
      %v3318 = vshrl.u32 %v3089, 16
      %v3320 = vrot.slane %v3318, 4
      %v3321 = vor.u32 %v3320, %v3316
      %v3322 = vrot.slane %v3321, 4
      %v3324 = vshll.u32 %v3090, 16
      %v3326 = vrot.slane %v3324, 5
      %v3327 = vsel %vm250, %v3322, %v3326
      %v3329 = vshrl.u32 %v3091, 16
      %v3331 = vrot.slane %v3329, 4
      %v3332 = vshll.u32 %v3091, 16
      %v3334 = vrot.slane %v3332, 5
      %v3335 = vor.u32 %v3331, %v3334
      %v3336 = vrot.slane %v3335, 4
      %v3338 = vshll.u32 %v3092, 16
      %v3340 = vrot.slane %v3338, 5
      %v3341 = vsel %vm250, %v3336, %v3340
      %v3342 = vshrl.u32 %v3092, 16
      %v3344 = vrot.slane %v3342, 4
      %v3345 = vor.u32 %v3344, %v3340
      %v3346 = vrot.slane %v3345, 4
      %v3348 = vshll.u32 %v3093, 16
      %v3350 = vrot.slane %v3348, 5
      %v3351 = vsel %vm250, %v3346, %v3350
      %v3353 = vshrl.u32 %v3094, 16
      %v3355 = vrot.slane %v3353, 4
      %v3356 = vshll.u32 %v3094, 16
      %v3358 = vrot.slane %v3356, 5
      %v3359 = vor.u32 %v3355, %v3358
      %v3360 = vrot.slane %v3359, 4
      %v3362 = vshll.u32 %v3095, 16
      %v3364 = vrot.slane %v3362, 5
      %v3365 = vsel %vm250, %v3360, %v3364
      %v3366 = vshrl.u32 %v3095, 16
      %v3368 = vrot.slane %v3366, 4
      %v3369 = vor.u32 %v3368, %v3364
      %v3370 = vrot.slane %v3369, 4
      %v3372 = vshll.u32 %v3096, 16
      %v3374 = vrot.slane %v3372, 5
      %v3375 = vsel %vm250, %v3370, %v3374
      %v3377 = vshrl.u32 %v3097, 16
      %v3379 = vrot.slane %v3377, 4
      %v3380 = vshll.u32 %v3097, 16
      %v3382 = vrot.slane %v3380, 5
      %v3383 = vor.u32 %v3379, %v3382
      %v3384 = vrot.slane %v3383, 4
      %v3386 = vshll.u32 %v3098, 16
      %v3388 = vrot.slane %v3386, 5
      %v3389 = vsel %vm250, %v3384, %v3388
      %v3390 = vshrl.u32 %v3098, 16
      %v3392 = vrot.slane %v3390, 4
      %v3393 = vor.u32 %v3392, %v3388
      %v3394 = vrot.slane %v3393, 4
      %v3396 = vshll.u32 %v3099, 16
      %v3398 = vrot.slane %v3396, 5
      %v3399 = vsel %vm250, %v3394, %v3398
      %v3401 = vshrl.u32 %v3100, 16
      %v3403 = vrot.slane %v3401, 4
      %v3404 = vshll.u32 %v3100, 16
      %v3406 = vrot.slane %v3404, 5
      %v3407 = vor.u32 %v3403, %v3406
      %v3408 = vrot.slane %v3407, 4
      %v3410 = vshll.u32 %v3101, 16
      %v3412 = vrot.slane %v3410, 5
      %v3413 = vsel %vm250, %v3408, %v3412
      %v3414 = vshrl.u32 %v3101, 16
      %v3416 = vrot.slane %v3414, 4
      %v3417 = vor.u32 %v3416, %v3412
      %v3418 = vrot.slane %v3417, 4
      %v3420 = vshll.u32 %v3102, 16
      %v3422 = vrot.slane %v3420, 5
      %v3423 = vsel %vm250, %v3418, %v3422
      %v3425 = vshrl.u32 %v3103, 16
      %v3427 = vrot.slane %v3425, 4
      %v3428 = vshll.u32 %v3103, 16
      %v3430 = vrot.slane %v3428, 5
      %v3431 = vor.u32 %v3427, %v3430
      %v3432 = vrot.slane %v3431, 4
      %v3434 = vshll.u32 %v3104, 16
      %v3436 = vrot.slane %v3434, 5
      %v3437 = vsel %vm250, %v3432, %v3436
      %v3438 = vshrl.u32 %v3104, 16
      %v3440 = vrot.slane %v3438, 4
      %v3441 = vor.u32 %v3440, %v3436
      %v3442 = vrot.slane %v3441, 4
      %v3444 = vshll.u32 %v3105, 16
      %v3446 = vrot.slane %v3444, 5
      %v3447 = vsel %vm250, %v3442, %v3446
      %v3449 = vshrl.u32 %v3106, 16
      %v3451 = vrot.slane %v3449, 4
      %v3452 = vshll.u32 %v3106, 16
      %v3454 = vrot.slane %v3452, 5
      %v3455 = vor.u32 %v3451, %v3454
      %v3456 = vrot.slane %v3455, 4
      %v3458 = vshll.u32 %v3107, 16
      %v3460 = vrot.slane %v3458, 5
      %v3461 = vsel %vm250, %v3456, %v3460
      %v3462 = vshrl.u32 %v3107, 16
      %v3464 = vrot.slane %v3462, 4
      %v3465 = vor.u32 %v3464, %v3460
      %v3466 = vrot.slane %v3465, 4
      %v3468 = vshll.u32 %v3108, 16
      %v3470 = vrot.slane %v3468, 5
      %v3471 = vsel %vm250, %v3466, %v3470
      %v3473 = vshrl.u32 %v3109, 16
      %v3475 = vrot.slane %v3473, 4
      %v3476 = vshll.u32 %v3109, 16
      %v3478 = vrot.slane %v3476, 5
      %v3479 = vor.u32 %v3475, %v3478
      %v3480 = vrot.slane %v3479, 4
      %v3482 = vshll.u32 %v3110, 16
      %v3484 = vrot.slane %v3482, 5
      %v3485 = vsel %vm250, %v3480, %v3484
      %v3486 = vshrl.u32 %v3110, 16
      %v3488 = vrot.slane %v3486, 4
      %v3489 = vor.u32 %v3488, %v3484
      %v3490 = vrot.slane %v3489, 4
      %v3492 = vshll.u32 %v3111, 16
      %v3494 = vrot.slane %v3492, 5
      %v3495 = vsel %vm250, %v3490, %v3494
      %s3496 = scalar_lea.vmem %s1, 14
      %v3497 = vld [vmem:[%s3496] sm:$0x3]
      %v3498 = vunpack.c.l.b16 %v3125
      %v3499 = vunpack.c.l.b16 %v3135
      %v3500 = vunpack.c.l.b16 %v3149
      %v3501 = vunpack.c.l.b16 %v3159
      %v3502 = vunpack.c.l.b16 %v3173
      %v3503 = vunpack.c.l.b16 %v3183
      %v3504 = vunpack.c.l.b16 %v3197
      %v3505 = vunpack.c.l.b16 %v3207
      %v3506 = vunpack.c.l.b16 %v3221
      %v3507 = vunpack.c.l.b16 %v3231
      %v3508 = vunpack.c.l.b16 %v3245
      %v3509 = vunpack.c.l.b16 %v3255
      %v3510 = vunpack.c.l.b16 %v3269
      %v3511 = vunpack.c.l.b16 %v3279
      %v3512 = vunpack.c.l.b16 %v3293
      %v3513 = vunpack.c.l.b16 %v3303
      %v3514 = vunpack.c.l.b16 %v3317
      %v3515 = vunpack.c.l.b16 %v3327
      %v3516 = vunpack.c.l.b16 %v3341
      %v3517 = vunpack.c.l.b16 %v3351
      %v3518 = vunpack.c.l.b16 %v3365
      %v3519 = vunpack.c.l.b16 %v3375
      %v3520 = vunpack.c.l.b16 %v3389
      %v3521 = vunpack.c.l.b16 %v3399
      %v3522 = vunpack.c.l.b16 %v3413
      %v3523 = vunpack.c.l.b16 %v3423
      %v3524 = vunpack.c.l.b16 %v3437
      %v3525 = vunpack.c.l.b16 %v3447
      %v3526 = vunpack.c.l.b16 %v3461
      %v3527 = vunpack.c.l.b16 %v3471
      %v3528 = vunpack.c.l.b16 %v3485
      %v3529 = vunpack.c.l.b16 %v3495
      %v3530 = vpack.c.b16 %v3499, %v3498
      %v3531 = vpack.c.b16 %v3501, %v3500
      %v3532 = vpack.c.b16 %v3503, %v3502
      %v3533 = vpack.c.b16 %v3505, %v3504
      %v3534 = vpack.c.b16 %v3507, %v3506
      %v3535 = vpack.c.b16 %v3509, %v3508
      %v3536 = vpack.c.b16 %v3511, %v3510
      %v3537 = vpack.c.b16 %v3513, %v3512
      %v3538 = vpack.c.b16 %v3515, %v3514
      %v3539 = vpack.c.b16 %v3517, %v3516
      %v3540 = vpack.c.b16 %v3519, %v3518
      %v3541 = vpack.c.b16 %v3521, %v3520
      %v3542 = vpack.c.b16 %v3523, %v3522
      %v3543 = vpack.c.b16 %v3525, %v3524
      %v3544 = vpack.c.b16 %v3527, %v3526
      %v3545 = vpack.c.b16 %v3529, %v3528
      %v3547 = vsel %vm685, %v3530, 0
      %v3550 = vsel %vm685, %v3531, 0
      %v3553 = vsel %vm685, %v3532, 0
      %v3556 = vsel %vm685, %v3533, 0
      %v3559 = vsel %vm685, %v3534, 0
      %v3562 = vsel %vm685, %v3535, 0
      %v3565 = vsel %vm685, %v3536, 0
      %v3568 = vsel %vm685, %v3537, 0
      %v3571 = vsel %vm685, %v3538, 0
      %v3574 = vsel %vm685, %v3539, 0
      %v3577 = vsel %vm685, %v3540, 0
      %v3580 = vsel %vm685, %v3541, 0
      %v3583 = vsel %vm685, %v3542, 0
      %v3586 = vsel %vm685, %v3543, 0
      %v3589 = vsel %vm685, %v3544, 0
      %v3592 = vsel %vm685, %v3545, 0
      %v3595 = vsel %vm734, %v3497, 0
      %3597 = vmatpush.bf16.msra.mxu0 0
      %3598 = vmatpush.bf16.msra.mxu0 0
      %3599 = vmatpush.bf16.msra.mxu0 0
      %3600 = vmatpush.bf16.msra.mxu0 0
      %3601 = vmatpush.bf16.msra.mxu0 0
      %3602 = vmatpush.bf16.msra.mxu0 0
      %3603 = vmatpush.bf16.msra.mxu0 0
      %3604 = vmatpush.bf16.msra.mxu0 %v3595
      %3605 = vmatmul.bf16.gmra.mxu0 %v3547
      %v3606 = vpop.f32.mrf.mxu0
      %v3607 = vadd.f32 0.0, %v3606
      %v3608 = vpop.f32.mrf.mxu0
      %v3609 = vadd.f32 0.0, %v3608
      %3610 = vmatmul.bf16.gmra.mxu0 %v3550
      %v3611 = vpop.f32.mrf.mxu0
      %v3612 = vadd.f32 0.0, %v3611
      %v3613 = vpop.f32.mrf.mxu0
      %v3614 = vadd.f32 0.0, %v3613
      %3615 = vmatmul.bf16.gmra.mxu0 %v3553
      %v3616 = vpop.f32.mrf.mxu0
      %v3617 = vadd.f32 0.0, %v3616
      %v3618 = vpop.f32.mrf.mxu0
      %v3619 = vadd.f32 0.0, %v3618
      %3620 = vmatmul.bf16.gmra.mxu0 %v3556
      %v3621 = vpop.f32.mrf.mxu0
      %v3622 = vadd.f32 0.0, %v3621
      %v3623 = vpop.f32.mrf.mxu0
      %v3624 = vadd.f32 0.0, %v3623
      %3625 = vmatmul.bf16.gmra.mxu0 %v3559
      %v3626 = vpop.f32.mrf.mxu0
      %v3627 = vadd.f32 0.0, %v3626
      %v3628 = vpop.f32.mrf.mxu0
      %v3629 = vadd.f32 0.0, %v3628
      %3630 = vmatmul.bf16.gmra.mxu0 %v3562
      %v3631 = vpop.f32.mrf.mxu0
      %v3632 = vadd.f32 0.0, %v3631
      %v3633 = vpop.f32.mrf.mxu0
      %v3634 = vadd.f32 0.0, %v3633
      %3635 = vmatmul.bf16.gmra.mxu0 %v3565
      %v3636 = vpop.f32.mrf.mxu0
      %v3637 = vadd.f32 0.0, %v3636
      %v3638 = vpop.f32.mrf.mxu0
      %v3639 = vadd.f32 0.0, %v3638
      %3640 = vmatmul.bf16.gmra.mxu0 %v3568
      %v3641 = vpop.f32.mrf.mxu0
      %v3642 = vadd.f32 0.0, %v3641
      %v3643 = vpop.f32.mrf.mxu0
      %v3644 = vadd.f32 0.0, %v3643
      %3645 = vmatmul.bf16.gmra.mxu0 %v3571
      %v3646 = vpop.f32.mrf.mxu0
      %v3647 = vadd.f32 0.0, %v3646
      %v3648 = vpop.f32.mrf.mxu0
      %v3649 = vadd.f32 0.0, %v3648
      %3650 = vmatmul.bf16.gmra.mxu0 %v3574
      %v3651 = vpop.f32.mrf.mxu0
      %v3652 = vadd.f32 0.0, %v3651
      %v3653 = vpop.f32.mrf.mxu0
      %v3654 = vadd.f32 0.0, %v3653
      %3655 = vmatmul.bf16.gmra.mxu0 %v3577
      %v3656 = vpop.f32.mrf.mxu0
      %v3657 = vadd.f32 0.0, %v3656
      %v3658 = vpop.f32.mrf.mxu0
      %v3659 = vadd.f32 0.0, %v3658
      %3660 = vmatmul.bf16.gmra.mxu0 %v3580
      %v3661 = vpop.f32.mrf.mxu0
      %v3662 = vadd.f32 0.0, %v3661
      %v3663 = vpop.f32.mrf.mxu0
      %v3664 = vadd.f32 0.0, %v3663
      %3665 = vmatmul.bf16.gmra.mxu0 %v3583
      %v3666 = vpop.f32.mrf.mxu0
      %v3667 = vadd.f32 0.0, %v3666
      %v3668 = vpop.f32.mrf.mxu0
      %v3669 = vadd.f32 0.0, %v3668
      %3670 = vmatmul.bf16.gmra.mxu0 %v3586
      %v3671 = vpop.f32.mrf.mxu0
      %v3672 = vadd.f32 0.0, %v3671
      %v3673 = vpop.f32.mrf.mxu0
      %v3674 = vadd.f32 0.0, %v3673
      %3675 = vmatmul.bf16.gmra.mxu0 %v3589
      %v3676 = vpop.f32.mrf.mxu0
      %v3677 = vadd.f32 0.0, %v3676
      %v3678 = vpop.f32.mrf.mxu0
      %v3679 = vadd.f32 0.0, %v3678
      %3680 = vmatmul.bf16.gmra.mxu0 %v3592
      %v3681 = vpop.f32.mrf.mxu0
      %v3682 = vadd.f32 0.0, %v3681
      %v3683 = vpop.f32.mrf.mxu0
      %v3684 = vadd.f32 0.0, %v3683
      %3685 = vdwg.mxu0
      %v3686 = vadd.f32 %v3032, %v3607
      %v3687 = vadd.f32 %v3033, %v3609
      %v3688 = vadd.f32 %v3034, %v3612
      %v3689 = vadd.f32 %v3035, %v3614
      %v3690 = vadd.f32 %v3036, %v3617
      %v3691 = vadd.f32 %v3037, %v3619
      %v3692 = vadd.f32 %v3038, %v3622
      %v3693 = vadd.f32 %v3039, %v3624
      %v3694 = vadd.f32 %v3040, %v3627
      %v3695 = vadd.f32 %v3041, %v3629
      %v3696 = vadd.f32 %v3042, %v3632
      %v3697 = vadd.f32 %v3043, %v3634
      %v3698 = vadd.f32 %v3044, %v3637
      %v3699 = vadd.f32 %v3045, %v3639
      %v3700 = vadd.f32 %v3046, %v3642
      %v3701 = vadd.f32 %v3047, %v3644
      %v3702 = vadd.f32 %v3048, %v3647
      %v3703 = vadd.f32 %v3049, %v3649
      %v3704 = vadd.f32 %v3050, %v3652
      %v3705 = vadd.f32 %v3051, %v3654
      %v3706 = vadd.f32 %v3052, %v3657
      %v3707 = vadd.f32 %v3053, %v3659
      %v3708 = vadd.f32 %v3054, %v3662
      %v3709 = vadd.f32 %v3055, %v3664
      %v3710 = vadd.f32 %v3056, %v3667
      %v3711 = vadd.f32 %v3057, %v3669
      %v3712 = vadd.f32 %v3058, %v3672
      %v3713 = vadd.f32 %v3059, %v3674
      %v3714 = vadd.f32 %v3060, %v3677
      %v3715 = vadd.f32 %v3061, %v3679
      %v3716 = vadd.f32 %v3062, %v3682
      %v3717 = vadd.f32 %v3063, %v3684
      %v3718 = vld [vmem:[%s2777] sm:$0xe]
      %v3719 = vld [vmem:[%s2777 + $0xc] sm:$0xe]
      %v3720 = vld [vmem:[%s2777 + $0x18] sm:$0xe]
      %v3721 = vld [vmem:[%s2777 + $0x24] sm:$0xe]
      %v3722 = vld [vmem:[%s2777 + $0x30] sm:$0xe]
      %v3723 = vld [vmem:[%s2777 + $0x3c] sm:$0xe]
      %v3724 = vld [vmem:[%s2777 + $0x48] sm:$0xe]
      %v3725 = vld [vmem:[%s2777 + $0x54] sm:$0xe]
      %v3726 = vld [vmem:[%s2777 + $0x60] sm:$0xe]
      %v3727 = vld [vmem:[%s2777 + $0x6c] sm:$0xe]
      %v3728 = vld [vmem:[%s2777 + $0x78] sm:$0xe]
      %v3729 = vld [vmem:[%s2777 + $0x84] sm:$0xe]
      %v3730 = vld [vmem:[%s2777 + $0x90] sm:$0xe]
      %v3731 = vld [vmem:[%s2777 + $0x9c] sm:$0xe]
      %v3732 = vld [vmem:[%s2777 + $0xa8] sm:$0xe]
      %v3733 = vld [vmem:[%s2777 + $0xb4] sm:$0xe]
      %v3782 = vrot.slane %v3718, 5
      %v3783 = vrot.slane %v3782, 4
      %v3784 = vrot.slane %v3065, 5
      %v3785 = vsel %vm1097, %v3783, %v3784
      %v3786 = vrot.slane %v3784, 4
      %v3787 = vrot.slane %v3066, 5
      %v3788 = vsel %vm1097, %v3786, %v3787
      %v3789 = vrot.slane %v3719, 5
      %v3790 = vrot.slane %v3789, 4
      %v3791 = vrot.slane %v3068, 5
      %v3792 = vsel %vm1097, %v3790, %v3791
      %v3793 = vrot.slane %v3791, 4
      %v3794 = vrot.slane %v3069, 5
      %v3795 = vsel %vm1097, %v3793, %v3794
      %v3796 = vrot.slane %v3720, 5
      %v3797 = vrot.slane %v3796, 4
      %v3798 = vrot.slane %v3071, 5
      %v3799 = vsel %vm1097, %v3797, %v3798
      %v3800 = vrot.slane %v3798, 4
      %v3801 = vrot.slane %v3072, 5
      %v3802 = vsel %vm1097, %v3800, %v3801
      %v3803 = vrot.slane %v3721, 5
      %v3804 = vrot.slane %v3803, 4
      %v3805 = vrot.slane %v3074, 5
      %v3806 = vsel %vm1097, %v3804, %v3805
      %v3807 = vrot.slane %v3805, 4
      %v3808 = vrot.slane %v3075, 5
      %v3809 = vsel %vm1097, %v3807, %v3808
      %v3810 = vrot.slane %v3722, 5
      %v3811 = vrot.slane %v3810, 4
      %v3812 = vrot.slane %v3077, 5
      %v3813 = vsel %vm1097, %v3811, %v3812
      %v3814 = vrot.slane %v3812, 4
      %v3815 = vrot.slane %v3078, 5
      %v3816 = vsel %vm1097, %v3814, %v3815
      %v3817 = vrot.slane %v3723, 5
      %v3818 = vrot.slane %v3817, 4
      %v3819 = vrot.slane %v3080, 5
      %v3820 = vsel %vm1097, %v3818, %v3819
      %v3821 = vrot.slane %v3819, 4
      %v3822 = vrot.slane %v3081, 5
      %v3823 = vsel %vm1097, %v3821, %v3822
      %v3824 = vrot.slane %v3724, 5
      %v3825 = vrot.slane %v3824, 4
      %v3826 = vrot.slane %v3083, 5
      %v3827 = vsel %vm1097, %v3825, %v3826
      %v3828 = vrot.slane %v3826, 4
      %v3829 = vrot.slane %v3084, 5
      %v3830 = vsel %vm1097, %v3828, %v3829
      %v3831 = vrot.slane %v3725, 5
      %v3832 = vrot.slane %v3831, 4
      %v3833 = vrot.slane %v3086, 5
      %v3834 = vsel %vm1097, %v3832, %v3833
      %v3835 = vrot.slane %v3833, 4
      %v3836 = vrot.slane %v3087, 5
      %v3837 = vsel %vm1097, %v3835, %v3836
      %v3838 = vrot.slane %v3726, 5
      %v3839 = vrot.slane %v3838, 4
      %v3840 = vrot.slane %v3089, 5
      %v3841 = vsel %vm1097, %v3839, %v3840
      %v3842 = vrot.slane %v3840, 4
      %v3843 = vrot.slane %v3090, 5
      %v3844 = vsel %vm1097, %v3842, %v3843
      %v3845 = vrot.slane %v3727, 5
      %v3846 = vrot.slane %v3845, 4
      %v3847 = vrot.slane %v3092, 5
      %v3848 = vsel %vm1097, %v3846, %v3847
      %v3849 = vrot.slane %v3847, 4
      %v3850 = vrot.slane %v3093, 5
      %v3851 = vsel %vm1097, %v3849, %v3850
      %v3852 = vrot.slane %v3728, 5
      %v3853 = vrot.slane %v3852, 4
      %v3854 = vrot.slane %v3095, 5
      %v3855 = vsel %vm1097, %v3853, %v3854
      %v3856 = vrot.slane %v3854, 4
      %v3857 = vrot.slane %v3096, 5
      %v3858 = vsel %vm1097, %v3856, %v3857
      %v3859 = vrot.slane %v3729, 5
      %v3860 = vrot.slane %v3859, 4
      %v3861 = vrot.slane %v3098, 5
      %v3862 = vsel %vm1097, %v3860, %v3861
      %v3863 = vrot.slane %v3861, 4
      %v3864 = vrot.slane %v3099, 5
      %v3865 = vsel %vm1097, %v3863, %v3864
      %v3866 = vrot.slane %v3730, 5
      %v3867 = vrot.slane %v3866, 4
      %v3868 = vrot.slane %v3101, 5
      %v3869 = vsel %vm1097, %v3867, %v3868
      %v3870 = vrot.slane %v3868, 4
      %v3871 = vrot.slane %v3102, 5
      %v3872 = vsel %vm1097, %v3870, %v3871
      %v3873 = vrot.slane %v3731, 5
      %v3874 = vrot.slane %v3873, 4
      %v3875 = vrot.slane %v3104, 5
      %v3876 = vsel %vm1097, %v3874, %v3875
      %v3877 = vrot.slane %v3875, 4
      %v3878 = vrot.slane %v3105, 5
      %v3879 = vsel %vm1097, %v3877, %v3878
      %v3880 = vrot.slane %v3732, 5
      %v3881 = vrot.slane %v3880, 4
      %v3882 = vrot.slane %v3107, 5
      %v3883 = vsel %vm1097, %v3881, %v3882
      %v3884 = vrot.slane %v3882, 4
      %v3885 = vrot.slane %v3108, 5
      %v3886 = vsel %vm1097, %v3884, %v3885
      %v3887 = vrot.slane %v3733, 5
      %v3888 = vrot.slane %v3887, 4
      %v3889 = vrot.slane %v3110, 5
      %v3890 = vsel %vm1097, %v3888, %v3889
      %v3891 = vrot.slane %v3889, 4
      %v3892 = vrot.slane %v3111, 5
      %v3893 = vsel %vm1097, %v3891, %v3892
      %s3894 = scalar_lea.vmem %s1, 16
      %v3895 = vld [vmem:[%s3894] sm:$0x3]
      %v3896 = vunpack.c.l.b16 %v3785
      %v3897 = vunpack.c.l.b16 %v3788
      %v3898 = vunpack.c.l.b16 %v3792
      %v3899 = vunpack.c.l.b16 %v3795
      %v3900 = vunpack.c.l.b16 %v3799
      %v3901 = vunpack.c.l.b16 %v3802
      %v3902 = vunpack.c.l.b16 %v3806
      %v3903 = vunpack.c.l.b16 %v3809
      %v3904 = vunpack.c.l.b16 %v3813
      %v3905 = vunpack.c.l.b16 %v3816
      %v3906 = vunpack.c.l.b16 %v3820
      %v3907 = vunpack.c.l.b16 %v3823
      %v3908 = vunpack.c.l.b16 %v3827
      %v3909 = vunpack.c.l.b16 %v3830
      %v3910 = vunpack.c.l.b16 %v3834
      %v3911 = vunpack.c.l.b16 %v3837
      %v3912 = vunpack.c.l.b16 %v3841
      %v3913 = vunpack.c.l.b16 %v3844
      %v3914 = vunpack.c.l.b16 %v3848
      %v3915 = vunpack.c.l.b16 %v3851
      %v3916 = vunpack.c.l.b16 %v3855
      %v3917 = vunpack.c.l.b16 %v3858
      %v3918 = vunpack.c.l.b16 %v3862
      %v3919 = vunpack.c.l.b16 %v3865
      %v3920 = vunpack.c.l.b16 %v3869
      %v3921 = vunpack.c.l.b16 %v3872
      %v3922 = vunpack.c.l.b16 %v3876
      %v3923 = vunpack.c.l.b16 %v3879
      %v3924 = vunpack.c.l.b16 %v3883
      %v3925 = vunpack.c.l.b16 %v3886
      %v3926 = vunpack.c.l.b16 %v3890
      %v3927 = vunpack.c.l.b16 %v3893
      %v3928 = vpack.c.b16 %v3897, %v3896
      %v3929 = vpack.c.b16 %v3899, %v3898
      %v3930 = vpack.c.b16 %v3901, %v3900
      %v3931 = vpack.c.b16 %v3903, %v3902
      %v3932 = vpack.c.b16 %v3905, %v3904
      %v3933 = vpack.c.b16 %v3907, %v3906
      %v3934 = vpack.c.b16 %v3909, %v3908
      %v3935 = vpack.c.b16 %v3911, %v3910
      %v3936 = vpack.c.b16 %v3913, %v3912
      %v3937 = vpack.c.b16 %v3915, %v3914
      %v3938 = vpack.c.b16 %v3917, %v3916
      %v3939 = vpack.c.b16 %v3919, %v3918
      %v3940 = vpack.c.b16 %v3921, %v3920
      %v3941 = vpack.c.b16 %v3923, %v3922
      %v3942 = vpack.c.b16 %v3925, %v3924
      %v3943 = vpack.c.b16 %v3927, %v3926
      %v3945 = vsel %vm685, %v3928, 0
      %v3948 = vsel %vm685, %v3929, 0
      %v3951 = vsel %vm685, %v3930, 0
      %v3954 = vsel %vm685, %v3931, 0
      %v3957 = vsel %vm685, %v3932, 0
      %v3960 = vsel %vm685, %v3933, 0
      %v3963 = vsel %vm685, %v3934, 0
      %v3966 = vsel %vm685, %v3935, 0
      %v3969 = vsel %vm685, %v3936, 0
      %v3972 = vsel %vm685, %v3937, 0
      %v3975 = vsel %vm685, %v3938, 0
      %v3978 = vsel %vm685, %v3939, 0
      %v3981 = vsel %vm685, %v3940, 0
      %v3984 = vsel %vm685, %v3941, 0
      %v3987 = vsel %vm685, %v3942, 0
      %v3990 = vsel %vm685, %v3943, 0
      %v3993 = vsel %vm734, %v3895, 0
      %3995 = vmatpush.bf16.msra.mxu0 0
      %3996 = vmatpush.bf16.msra.mxu0 0
      %3997 = vmatpush.bf16.msra.mxu0 0
      %3998 = vmatpush.bf16.msra.mxu0 0
      %3999 = vmatpush.bf16.msra.mxu0 0
      %4000 = vmatpush.bf16.msra.mxu0 0
      %4001 = vmatpush.bf16.msra.mxu0 0
      %4002 = vmatpush.bf16.msra.mxu0 %v3993
      %4003 = vmatmul.bf16.gmra.mxu0 %v3945
      %v4004 = vpop.f32.mrf.mxu0
      %v4005 = vadd.f32 0.0, %v4004
      %v4006 = vpop.f32.mrf.mxu0
      %v4007 = vadd.f32 0.0, %v4006
      %4008 = vmatmul.bf16.gmra.mxu0 %v3948
      %v4009 = vpop.f32.mrf.mxu0
      %v4010 = vadd.f32 0.0, %v4009
      %v4011 = vpop.f32.mrf.mxu0
      %v4012 = vadd.f32 0.0, %v4011
      %4013 = vmatmul.bf16.gmra.mxu0 %v3951
      %v4014 = vpop.f32.mrf.mxu0
      %v4015 = vadd.f32 0.0, %v4014
      %v4016 = vpop.f32.mrf.mxu0
      %v4017 = vadd.f32 0.0, %v4016
      %4018 = vmatmul.bf16.gmra.mxu0 %v3954
      %v4019 = vpop.f32.mrf.mxu0
      %v4020 = vadd.f32 0.0, %v4019
      %v4021 = vpop.f32.mrf.mxu0
      %v4022 = vadd.f32 0.0, %v4021
      %4023 = vmatmul.bf16.gmra.mxu0 %v3957
      %v4024 = vpop.f32.mrf.mxu0
      %v4025 = vadd.f32 0.0, %v4024
      %v4026 = vpop.f32.mrf.mxu0
      %v4027 = vadd.f32 0.0, %v4026
      %4028 = vmatmul.bf16.gmra.mxu0 %v3960
      %v4029 = vpop.f32.mrf.mxu0
      %v4030 = vadd.f32 0.0, %v4029
      %v4031 = vpop.f32.mrf.mxu0
      %v4032 = vadd.f32 0.0, %v4031
      %4033 = vmatmul.bf16.gmra.mxu0 %v3963
      %v4034 = vpop.f32.mrf.mxu0
      %v4035 = vadd.f32 0.0, %v4034
      %v4036 = vpop.f32.mrf.mxu0
      %v4037 = vadd.f32 0.0, %v4036
      %4038 = vmatmul.bf16.gmra.mxu0 %v3966
      %v4039 = vpop.f32.mrf.mxu0
      %v4040 = vadd.f32 0.0, %v4039
      %v4041 = vpop.f32.mrf.mxu0
      %v4042 = vadd.f32 0.0, %v4041
      %4043 = vmatmul.bf16.gmra.mxu0 %v3969
      %v4044 = vpop.f32.mrf.mxu0
      %v4045 = vadd.f32 0.0, %v4044
      %v4046 = vpop.f32.mrf.mxu0
      %v4047 = vadd.f32 0.0, %v4046
      %4048 = vmatmul.bf16.gmra.mxu0 %v3972
      %v4049 = vpop.f32.mrf.mxu0
      %v4050 = vadd.f32 0.0, %v4049
      %v4051 = vpop.f32.mrf.mxu0
      %v4052 = vadd.f32 0.0, %v4051
      %4053 = vmatmul.bf16.gmra.mxu0 %v3975
      %v4054 = vpop.f32.mrf.mxu0
      %v4055 = vadd.f32 0.0, %v4054
      %v4056 = vpop.f32.mrf.mxu0
      %v4057 = vadd.f32 0.0, %v4056
      %4058 = vmatmul.bf16.gmra.mxu0 %v3978
      %v4059 = vpop.f32.mrf.mxu0
      %v4060 = vadd.f32 0.0, %v4059
      %v4061 = vpop.f32.mrf.mxu0
      %v4062 = vadd.f32 0.0, %v4061
      %4063 = vmatmul.bf16.gmra.mxu0 %v3981
      %v4064 = vpop.f32.mrf.mxu0
      %v4065 = vadd.f32 0.0, %v4064
      %v4066 = vpop.f32.mrf.mxu0
      %v4067 = vadd.f32 0.0, %v4066
      %4068 = vmatmul.bf16.gmra.mxu0 %v3984
      %v4069 = vpop.f32.mrf.mxu0
      %v4070 = vadd.f32 0.0, %v4069
      %v4071 = vpop.f32.mrf.mxu0
      %v4072 = vadd.f32 0.0, %v4071
      %4073 = vmatmul.bf16.gmra.mxu0 %v3987
      %v4074 = vpop.f32.mrf.mxu0
      %v4075 = vadd.f32 0.0, %v4074
      %v4076 = vpop.f32.mrf.mxu0
      %v4077 = vadd.f32 0.0, %v4076
      %4078 = vmatmul.bf16.gmra.mxu0 %v3990
      %v4079 = vpop.f32.mrf.mxu0
      %v4080 = vadd.f32 0.0, %v4079
      %v4081 = vpop.f32.mrf.mxu0
      %v4082 = vadd.f32 0.0, %v4081
      %4083 = vdwg.mxu0
      %v4084 = vadd.f32 %v3686, %v4005
      %v4085 = vadd.f32 %v3687, %v4007
      %v4086 = vadd.f32 %v3688, %v4010
      %v4087 = vadd.f32 %v3689, %v4012
      %v4088 = vadd.f32 %v3690, %v4015
      %v4089 = vadd.f32 %v3691, %v4017
      %v4090 = vadd.f32 %v3692, %v4020
      %v4091 = vadd.f32 %v3693, %v4022
      %v4092 = vadd.f32 %v3694, %v4025
      %v4093 = vadd.f32 %v3695, %v4027
      %v4094 = vadd.f32 %v3696, %v4030
      %v4095 = vadd.f32 %v3697, %v4032
      %v4096 = vadd.f32 %v3698, %v4035
      %v4097 = vadd.f32 %v3699, %v4037
      %v4098 = vadd.f32 %v3700, %v4040
      %v4099 = vadd.f32 %v3701, %v4042
      %v4100 = vadd.f32 %v3702, %v4045
      %v4101 = vadd.f32 %v3703, %v4047
      %v4102 = vadd.f32 %v3704, %v4050
      %v4103 = vadd.f32 %v3705, %v4052
      %v4104 = vadd.f32 %v3706, %v4055
      %v4105 = vadd.f32 %v3707, %v4057
      %v4106 = vadd.f32 %v3708, %v4060
      %v4107 = vadd.f32 %v3709, %v4062
      %v4108 = vadd.f32 %v3710, %v4065
      %v4109 = vadd.f32 %v3711, %v4067
      %v4110 = vadd.f32 %v3712, %v4070
      %v4111 = vadd.f32 %v3713, %v4072
      %v4112 = vadd.f32 %v3714, %v4075
      %v4113 = vadd.f32 %v3715, %v4077
      %v4114 = vadd.f32 %v3716, %v4080
      %v4115 = vadd.f32 %v3717, %v4082
      %4116 = vxpose.xlu0.b32.start [1/16] %v4084, 128
      %4117 = vxpose.xlu0.b32.cont [2/16] %v4085, 128
      %4118 = vxpose.xlu0.b32.cont [3/16] %v4086, 128
      %4119 = vxpose.xlu0.b32.cont [4/16] %v4087, 128
      %4120 = vxpose.xlu0.b32.cont [5/16] %v4088, 128
      %4121 = vxpose.xlu0.b32.cont [6/16] %v4089, 128
      %4122 = vxpose.xlu0.b32.cont [7/16] %v4090, 128
      %4123 = vxpose.xlu0.b32.cont [8/16] %v4091, 128
      %4124 = vxpose.xlu0.b32.cont [9/16] %v4092, 128
      %4125 = vxpose.xlu0.b32.cont [10/16] %v4093, 128
      %4126 = vxpose.xlu0.b32.cont [11/16] %v4094, 128
      %4127 = vxpose.xlu0.b32.cont [12/16] %v4095, 128
      %4128 = vxpose.xlu0.b32.cont [13/16] %v4096, 128
      %4129 = vxpose.xlu0.b32.cont [14/16] %v4097, 128
      %4130 = vxpose.xlu0.b32.cont [15/16] %v4098, 128
      %4131 = vxpose.xlu0.b32.end [16/16] %v4099, 128
      %v4132 = vpop.trf.xlu0
      %v4133 = vpop.trf.xlu0
      %v4134 = vpop.trf.xlu0
      %v4135 = vpop.trf.xlu0
      %v4136 = vpop.trf.xlu0
      %v4137 = vpop.trf.xlu0
      %v4138 = vpop.trf.xlu0
      %v4139 = vpop.trf.xlu0
      %v4140 = vpop.trf.xlu0
      %v4141 = vpop.trf.xlu0
      %v4142 = vpop.trf.xlu0
      %v4143 = vpop.trf.xlu0
      %v4144 = vpop.trf.xlu0
      %v4145 = vpop.trf.xlu0
      %v4146 = vpop.trf.xlu0
      %v4147 = vpop.trf.xlu0
      %4148 = vxpose.xlu0.b32.start [1/16] %v4100, 128
      %4149 = vxpose.xlu0.b32.cont [2/16] %v4101, 128
      %4150 = vxpose.xlu0.b32.cont [3/16] %v4102, 128
      %4151 = vxpose.xlu0.b32.cont [4/16] %v4103, 128
      %4152 = vxpose.xlu0.b32.cont [5/16] %v4104, 128
      %4153 = vxpose.xlu0.b32.cont [6/16] %v4105, 128
      %4154 = vxpose.xlu0.b32.cont [7/16] %v4106, 128
      %4155 = vxpose.xlu0.b32.cont [8/16] %v4107, 128
      %4156 = vxpose.xlu0.b32.cont [9/16] %v4108, 128
      %4157 = vxpose.xlu0.b32.cont [10/16] %v4109, 128
      %4158 = vxpose.xlu0.b32.cont [11/16] %v4110, 128
      %4159 = vxpose.xlu0.b32.cont [12/16] %v4111, 128
      %4160 = vxpose.xlu0.b32.cont [13/16] %v4112, 128
      %4161 = vxpose.xlu0.b32.cont [14/16] %v4113, 128
      %4162 = vxpose.xlu0.b32.cont [15/16] %v4114, 128
      %4163 = vxpose.xlu0.b32.end [16/16] %v4115, 128
      %v4164 = vpop.trf.xlu0
      %v4165 = vpop.trf.xlu0
      %v4166 = vpop.trf.xlu0
      %v4167 = vpop.trf.xlu0
      %v4168 = vpop.trf.xlu0
      %v4169 = vpop.trf.xlu0
      %v4170 = vpop.trf.xlu0
      %v4171 = vpop.trf.xlu0
      %v4172 = vpop.trf.xlu0
      %v4173 = vpop.trf.xlu0
      %v4174 = vpop.trf.xlu0
      %v4175 = vpop.trf.xlu0
      %v4176 = vpop.trf.xlu0
      %v4177 = vpop.trf.xlu0
      %v4178 = vpop.trf.xlu0
      %v4179 = vpop.trf.xlu0
      %v4180 = vld [vmem:[%s2] sm:$0xff]
      %4182 = vset.pattern.permute.xlu0 0
      %4183 = vperm.xlu0 %4182, %v4180
      %v4184 = vpop.permute.xlu0 %4183
      %v4186 = vadd.f32 %v4132, %v4184
      %v4187 = vadd.f32 %v4164, %v4184
      %v4188 = vmax.f32 %v4186, 0.0
      %v4189 = vmax.f32 %v4187, 0.0
      %4190 = vst [vmem:[%s192] sm:$0xff] %v4188
      %4191 = vst [vmem:[%s192 + $0x8] sm:$0xff] %v4189
      %s4192 = smul.u32 2, %s19
      %p4193 = scmp.lt.s32.totalorder %s18, 1
      %s4194 = scalar_select %p4193, %s18, 1
      %p4195 = scmp.lt.s32.totalorder %s4192, 1
      %s4196 = scalar_select %p4195, %s4192, 1
      %s4197 = smul.addr %s4194, 2
      %s4198 = sadd.s32 %s4196, %s4197
      %s4199 = smul.addr %s4198, 8
      %s4200 = scalar_lea.vmem %s3, %s4199
      // Predicated region
      $region33: #{basic_conv_forward.1} parent=31 // pred_check
        %p4201 = pneg %p114
      $region34: #{basic_conv_forward.1} parent=31 // pred_check_branch
        %4203 = sbr.rel (%p4201) target = $region36
      $region35: #{basic_conv_forward.1} parent=31 // pred_region
        %s4204 = smul.u32 2, %s19
      $region36: #{basic_conv_forward.1} parent=31 // pred_fallthru
        _
    $region32: #{basic_conv_forward.1} parent=5 // pred_fallthru
      _
    %p4205 = scmp.le.s32.totalorder 2, %s9
    // Predicated region
    $region37: #{basic_conv_forward.1} parent=5 // pred_check
      %p4206 = pneg %p4205
    $region38: #{basic_conv_forward.1} parent=5 // pred_check_branch
      %4208 = sbr.rel (%p4206) target = $region40
    $region39: #{basic_conv_forward.1} parent=5 // pred_region
      %s4209 = ssub.s32 %s9, 2
      // Predicated region
      $region41: #{basic_conv_forward.1} parent=39 // pred_check
        %p4210 = pneg %p120
      $region42: #{basic_conv_forward.1} parent=39 // pred_check_branch
        %4212 = sbr.rel (%p4210) target = $region44
      $region43: #{basic_conv_forward.1} parent=39 // pred_region
        %s4213 = smul.u32 2, %s21
        %p4214 = scmp.lt.s32.totalorder %s20, 1
        %s4215 = scalar_select %p4214, %s20, 1
        %p4216 = scmp.lt.s32.totalorder %s4213, 1
        %s4217 = scalar_select %p4216, %s4213, 1
        %s4218 = smul.addr %s4215, 2
        %s4219 = sadd.s32 %s4217, %s4218
        %s4220 = smul.addr %s4219, 8
        %s4221 = scalar_lea.vmem %s3, %s4220
      $region44: #{basic_conv_forward.1} parent=39 // pred_fallthru
        _
    $region40: #{basic_conv_forward.1} parent=5 // pred_fallthru
      _
  $region6: #{basic_conv_forward.1} parent=0 // loop_footer
    %s13 = sadd.s32 1, %s9
  $region7: #{basic_conv_forward.1} parent=0 // loop_footer_branch
    %8 = sbr.rel target = $region3
  $region8: #{basic_conv_forward.1} parent=0 // loop_exit
    _

</llo_original>
